<compile_context>
chip_gen: v6e
topology: v6e:2x2x1
jax: 0.10.0
libtpu: 0.0.40
codegen_flags: <defaults>
</compile_context>

<pallas_src>
import functools

import jax
import jax.numpy as jnp
from jax.experimental import pallas as pl
from jax.experimental.pallas import tpu as pltpu

NUM_GROUPS = 32   # nn.GroupNorm(32, channels)
EPS = 1e-5        # PyTorch GroupNorm default eps


def _pick_token_tile(n, target):
    """Largest multiple of 128 that divides n and is <= max(target, 128)."""
    if n % 128 != 0:
        # TODO(synk): pad + mask KV tokens to tile N that is not a multiple of
        # 128; for now fall back to a single full-length tile (always correct).
        return n
    best = 128
    cand = 128
    limit = min(n, max(target, 128))
    while cand <= limit:
        if n % cand == 0:
            best = cand
        cand += 128
    return best


def _qkv_project_kernel(x_ref, mean_ref, rstd_ref, w_ref, b_ref,
                        q_ref, k_ref, v_ref, *, channels):
    """Per (batch, token-tile): GroupNorm normalize + fused qkv 1x1x1 conv.

    Channel-major layout: x_ref (1, C, TT) f32; q/k/v outputs (1, C, TT) bf16.
    gamma/beta and the softmax scale are already folded into w_ref / b_ref.
    """
    c = channels
    x = x_ref[0]                                                   # (C, TT) f32
    hn = ((x - mean_ref[0]) * rstd_ref[0]).astype(jnp.bfloat16)    # (C, TT)
    qkv = jnp.dot(w_ref[...], hn, preferred_element_type=jnp.float32)
    qkv = (qkv + b_ref[...]).astype(jnp.bfloat16)                  # (3C, TT)
    q_ref[0] = qkv[:c]
    k_ref[0] = qkv[c:2 * c]
    v_ref[0] = qkv[2 * c:]


def _flash_attn_kernel(q_ref, kt_ref, v_ref, x_ref, wp_ref, bp_ref, out_ref,
                       m_sc, l_sc, acc_sc):
    """Flash attention + output projection + residual, channel-major.

    Grid: (batch, q-tile, kv-tile) with the kv axis innermost ("arbitrary").
      q_ref   (1, C, TQ)  bf16  queries (softmax scale folded in)
      kt_ref  (1, TKV, C) bf16  keys, token-major
      v_ref   (1, C, TKV) bf16  values
      x_ref   (1, C, TQ)  f32   residual input
      out_ref (1, C, TQ)  f32
      m/l (1, TQ) f32, acc (C, TQ) f32: online-softmax scratch.
    """
    ki = pl.program_id(2)

    @pl.when(ki == 0)
    def _():
        m_sc[...] = jnp.full_like(m_sc, -jnp.inf)
        l_sc[...] = jnp.zeros_like(l_sc)
        acc_sc[...] = jnp.zeros_like(acc_sc)

    # s[j, i] = sum_c k[c, j] * q[c, i]  (== attn^T; scale pre-folded into q).
    s = jnp.dot(kt_ref[0], q_ref[0],
                preferred_element_type=jnp.float32)                # (TKV, TQ)

    m_prev = m_sc[...]                                             # (1, TQ)
    m_new = jnp.maximum(m_prev, jnp.max(s, axis=0, keepdims=True))
    alpha = jnp.exp(m_prev - m_new)                                # (1, TQ)
    p = jnp.exp(s - m_new)                                         # (TKV, TQ)
    l_sc[...] = alpha * l_sc[...] + jnp.sum(p, axis=0, keepdims=True)
    acc_sc[...] = alpha * acc_sc[...] + jnp.dot(
        v_ref[0], p.astype(jnp.bfloat16),
        preferred_element_type=jnp.float32)                        # (C, TQ)
    m_sc[...] = m_new

    @pl.when(ki == pl.num_programs(2) - 1)
    def _():
        # Deferred softmax normalization: a single 1/l rescale on (C, TQ).
        h_att = (acc_sc[...] * pl.reciprocal(l_sc[...], approx=True)
                 ).astype(jnp.bfloat16)
        h_out = jnp.dot(wp_ref[...], h_att,
                        preferred_element_type=jnp.float32) + bp_ref[...]
        out_ref[0] = (x_ref[0] + h_out).astype(out_ref.dtype)


@jax.jit
def attention_block_3d(x, params):
    """x: (B, C, D, H, W) float32, NCDHW exactly as in the PyTorch module."""
    B, C, D, H, W = x.shape
    N = D * H * W
    assert C % NUM_GROUPS == 0
    gs = C // NUM_GROUPS

    # Native channel-major view; no (B, N, C) transpose of x or out anymore.
    x_bcn = x.reshape(B, C, N).astype(jnp.float32)

    # ---------------- GroupNorm statistics (cheap two-pass XLA reduction) ----
    xg = x_bcn.reshape(B, NUM_GROUPS, gs * N)
    mean_g = jnp.mean(xg, axis=-1)                                  # (B, 32)
    var_g = jnp.mean(jnp.square(xg - mean_g[..., None]), axis=-1)   # two-pass
    rstd_g = jax.lax.rsqrt(var_g + EPS)
    mean_c = jnp.repeat(mean_g, gs, axis=1).reshape(B, C, 1)
    rstd_c = jnp.repeat(rstd_g, gs, axis=1).reshape(B, C, 1)

    # ---------------- fold GroupNorm affine + softmax scale into qkv ---------
    gamma = params["gn_gamma"].astype(jnp.float32)
    beta = params["gn_beta"].astype(jnp.float32)
    w_qkv = params["qkv_w"].reshape(3 * C, C).astype(jnp.float32)   # (out, in)
    b_qkv = params["qkv_b"].astype(jnp.float32) + w_qkv @ beta      # (3C,)
    w_qkv = w_qkv * gamma[None, :]
    scale = C ** (-0.5)
    w_qkv = w_qkv.at[:C].multiply(scale)    # fold softmax scale into q rows
    b_qkv = b_qkv.at[:C].multiply(scale)
    w_qkv_bf16 = w_qkv.astype(jnp.bfloat16)
    b_qkv = b_qkv.reshape(3 * C, 1)

    w_proj = params["proj_w"].reshape(C, C).astype(jnp.bfloat16)    # (out, in)
    b_proj = params["proj_b"].astype(jnp.float32).reshape(C, 1)

    # ---------------- kernel 1: normalize + fused qkv projection -------------
    TT = _pick_token_tile(N, 512)
    qkv_shape = jax.ShapeDtypeStruct((B, C, N), jnp.bfloat16)
    vmem1 = (2 * (C * TT * 4 + 2 * C * 4 + 3 * C * C * 2 + 3 * C * 4
                  + 3 * C * TT * 2) + 4 * 3 * C * TT * 4)
    q_cm, k_cm, v_cm = pl.pallas_call(
        functools.partial(_qkv_project_kernel, channels=C),
        out_shape=(qkv_shape, qkv_shape, qkv_shape),
        grid_spec=pltpu.PrefetchScalarGridSpec(
            num_scalar_prefetch=0,
            grid=(B, N // TT),
            in_specs=[
                pl.BlockSpec((1, C, TT), lambda b, t: (b, 0, t)),   # x
                pl.BlockSpec((1, C, 1), lambda b, t: (b, 0, 0)),    # mean
                pl.BlockSpec((1, C, 1), lambda b, t: (b, 0, 0)),    # rstd
                pl.BlockSpec((3 * C, C), lambda b, t: (0, 0)),      # w_qkv'
                pl.BlockSpec((3 * C, 1), lambda b, t: (0, 0)),      # b_qkv'
            ],
            out_specs=[
                pl.BlockSpec((1, C, TT), lambda b, t: (b, 0, t)),   # q
                pl.BlockSpec((1, C, TT), lambda b, t: (b, 0, t)),   # k
                pl.BlockSpec((1, C, TT), lambda b, t: (b, 0, t)),   # v
            ],
        ),
        compiler_params=pltpu.CompilerParams(
            dimension_semantics=("parallel", "parallel"),
            vmem_limit_bytes=int(min(64 * 2**20, max(16 * 2**20, 2 * vmem1)))),
    )(x_bcn, mean_c, rstd_c, w_qkv_bf16, b_qkv)

    # One cheap bf16 transpose so the score matmul is a plain (TKV,C)@(C,TQ)
    # MXU op (no transposed-operand matmuls in-kernel).  The expensive f32
    # x/out transposes of the previous version are eliminated.
    k_tm = jnp.swapaxes(k_cm, 1, 2)                                 # (B, N, C)

    # ---------------- kernel 2: flash attention + proj_out + residual --------
    TQ = _pick_token_tile(N, 256)
    TKV = _pick_token_tile(N, 512)
    vmem2 = (2 * (C * TQ * 2 + TKV * C * 2 + C * TKV * 2 + C * TQ * 4
                  + C * TQ * 4 + C * C * 2 + C * 4)
             + C * TQ * 4 + 2 * TQ * 4 + 6 * TKV * TQ * 4)
    out_bcn = pl.pallas_call(
        _flash_attn_kernel,
        out_shape=jax.ShapeDtypeStruct((B, C, N), jnp.float32),
        grid_spec=pltpu.PrefetchScalarGridSpec(
            num_scalar_prefetch=0,
            grid=(B, N // TQ, N // TKV),
            in_specs=[
                pl.BlockSpec((1, C, TQ), lambda b, qi, ki: (b, 0, qi)),   # q
                pl.BlockSpec((1, TKV, C), lambda b, qi, ki: (b, ki, 0)),  # k^T
                pl.BlockSpec((1, C, TKV), lambda b, qi, ki: (b, 0, ki)),  # v
                pl.BlockSpec((1, C, TQ), lambda b, qi, ki: (b, 0, qi)),   # x
                pl.BlockSpec((C, C), lambda b, qi, ki: (0, 0)),           # w_proj
                pl.BlockSpec((C, 1), lambda b, qi, ki: (0, 0)),           # b_proj
            ],
            out_specs=pl.BlockSpec((1, C, TQ), lambda b, qi, ki: (b, 0, qi)),
            scratch_shapes=[
                pltpu.VMEM((1, TQ), jnp.float32),   # m (running max)
                pltpu.VMEM((1, TQ), jnp.float32),   # l (running sum)
                pltpu.VMEM((C, TQ), jnp.float32),   # acc (unnormalized P·V)
            ],
        ),
        compiler_params=pltpu.CompilerParams(
            dimension_semantics=("parallel", "parallel", "arbitrary"),
            vmem_limit_bytes=int(min(64 * 2**20, max(16 * 2**20, 2 * vmem2)))),
    )(q_cm, k_tm, v_cm, x_bcn, w_proj, b_proj)

    return out_bcn.reshape(B, C, D, H, W)


def reference_attention_block_3d(x, params):
    """Pure-JAX replica of the PyTorch forward pass (for validation)."""
    B, C, D, H, W = x.shape
    gs = C // NUM_GROUPS
    N = D * H * W
    gamma = params["gn_gamma"]
    beta = params["gn_beta"]

    xg = x.reshape(B, NUM_GROUPS, gs, D, H, W)
    mean = xg.mean(axis=(2, 3, 4, 5), keepdims=True)
    var = xg.var(axis=(2, 3, 4, 5), keepdims=True)
    hn = (xg - mean) / jnp.sqrt(var + EPS)
    hn = hn.reshape(B, C, D, H, W) * gamma.reshape(1, C, 1, 1, 1) + beta.reshape(1, C, 1, 1, 1)

    w_qkv = params["qkv_w"].reshape(3 * C, C)
    b_qkv = params["qkv_b"]
    h2 = hn.reshape(B, C, N)
    qkv = jnp.einsum("oc,bcn->bon", w_qkv, h2,
                     precision=jax.lax.Precision.HIGHEST) + b_qkv.reshape(1, 3 * C, 1)
    q, k, v = qkv[:, :C], qkv[:, C:2 * C], qkv[:, 2 * C:]
    q = jnp.transpose(q, (0, 2, 1))
    v = jnp.transpose(v, (0, 2, 1))
    attn = jnp.einsum("bnc,bcm->bnm", q, k,
                      precision=jax.lax.Precision.HIGHEST) * C ** (-0.5)
    attn = jax.nn.softmax(attn, axis=2)
    hh = jnp.einsum("bnm,bmc->bnc", attn, v,
                    precision=jax.lax.Precision.HIGHEST)
    hh = jnp.transpose(hh, (0, 2, 1)).reshape(B, C, D, H, W)
    w_proj = params["proj_w"].reshape(C, C)
    b_proj = params["proj_b"]
    out = jnp.einsum("oc,bcdhw->bodhw", w_proj, hh,
                     precision=jax.lax.Precision.HIGHEST) + b_proj.reshape(1, C, 1, 1, 1)
    return x + out


def init_params(key, channels):
    """Deterministic synthetic parameters (shapes match the nn.Module)."""
    C = channels
    k = jax.random.split(key, 6)
    return {
        "gn_gamma": 1.0 + 0.05 * jax.random.normal(k[0], (C,), jnp.float32),
        "gn_beta": 0.05 * jax.random.normal(k[1], (C,), jnp.float32),
        # Conv3d(channels, 3*channels, kernel_size=1): weight (3C, C, 1, 1, 1)
        "qkv_w": 0.1 * jax.random.normal(k[2], (3 * C, C, 1, 1, 1), jnp.float32),
        "qkv_b": 0.05 * jax.random.normal(k[3], (3 * C,), jnp.float32),
        # Conv3d(channels, channels, kernel_size=1): weight (C, C, 1, 1, 1)
        "proj_w": 0.1 * jax.random.normal(k[4], (C, C, 1, 1, 1), jnp.float32),
        "proj_b": 0.05 * jax.random.normal(k[5], (C,), jnp.float32),
    }


if __name__ == "__main__":
    key = jax.random.PRNGKey(0)
    kx, kp = jax.random.split(key)

    # C must be divisible by 32 (GroupNorm(32, C)); N = D*H*W = 1024 tokens so
    # the flash grid exercises multiple q tiles and multiple kv tiles.
    B, C, D, H, W = 2, 64, 4, 16, 16
    x = jax.random.normal(kx, (B, C, D, H, W), jnp.float32)
    params = init_params(kp, C)

    out = jax.block_until_ready(attention_block_3d(x, params))
    ref = reference_attention_block_3d(x, params)

    assert out.shape == (B, C, D, H, W)
    err = jnp.max(jnp.abs(out - ref))
    # bf16 MXU operands (with f32 accumulation) give ~1e-3 absolute error on
    # unit-scale data; GroupNorm stats and softmax state stay f32.
    assert jnp.allclose(out, ref, rtol=2e-2, atol=2e-2), f"max abs err {err}"

    print("KERNEL_OK")
</pallas_src>

<mosaic_0001>
module attributes {stable_mosaic.version = 11 : i64} {
  func.func @_qkv_project_kernel(%arg0: i32, %arg1: i32, %arg2: memref<1x64x512xf32, #tpu.memory_space<vmem>>, %arg3: memref<1x64x1xf32, #tpu.memory_space<vmem>>, %arg4: memref<1x64x1xf32, #tpu.memory_space<vmem>>, %arg5: memref<192x64xbf16, #tpu.memory_space<vmem>>, %arg6: memref<192x1xf32, #tpu.memory_space<vmem>>, %arg7: memref<1x64x512xbf16, #tpu.memory_space<vmem>>, %arg8: memref<1x64x512xbf16, #tpu.memory_space<vmem>>, %arg9: memref<1x64x512xbf16, #tpu.memory_space<vmem>>) attributes {dimension_semantics = [#tpu.dimension_semantics<parallel>, #tpu.dimension_semantics<parallel>], iteration_bounds = array<i64: 2, 2>, scalar_prefetch = 0 : i64, scratch_operands = 0 : i64, tpu.core_type = #tpu.core_type<tc>, window_params = [{transform_indices = @transform_0, window_bounds = array<i64: 1, 64, 512>}, {transform_indices = @transform_1, window_bounds = array<i64: 1, 64, 1>}, {transform_indices = @transform_2, window_bounds = array<i64: 1, 64, 1>}, {pipeline_mode = #tpu.pipeline_mode<synchronous>, transform_indices = @transform_3, window_bounds = array<i64: 192, 64>}, {pipeline_mode = #tpu.pipeline_mode<synchronous>, transform_indices = @transform_4, window_bounds = array<i64: 192, 1>}, {transform_indices = @transform_5, window_bounds = array<i64: 1, 64, 512>}, {transform_indices = @transform_6, window_bounds = array<i64: 1, 64, 512>}, {transform_indices = @transform_7, window_bounds = array<i64: 1, 64, 512>}]} {
    %c0 = arith.constant 0 : index
    %c0_0 = arith.constant 0 : index
    %c0_1 = arith.constant 0 : index
    %0 = vector.load %arg2[%c0, %c0_0, %c0_1] : memref<1x64x512xf32, #tpu.memory_space<vmem>>, vector<1x64x512xf32>
    %1 = vector.shape_cast %0 : vector<1x64x512xf32> to vector<64x512xf32>
    %c0_2 = arith.constant 0 : index
    %c0_3 = arith.constant 0 : index
    %c0_4 = arith.constant 0 : index
    %2 = vector.load %arg3[%c0_2, %c0_3, %c0_4] : memref<1x64x1xf32, #tpu.memory_space<vmem>>, vector<1x64x1xf32>
    %3 = vector.shape_cast %2 : vector<1x64x1xf32> to vector<64x1xf32>
    %4 = vector.broadcast %3 : vector<64x1xf32> to vector<64x512xf32>
    %5 = arith.subf %1, %4 : vector<64x512xf32>
    %c0_5 = arith.constant 0 : index
    %c0_6 = arith.constant 0 : index
    %c0_7 = arith.constant 0 : index
    %6 = vector.load %arg4[%c0_5, %c0_6, %c0_7] : memref<1x64x1xf32, #tpu.memory_space<vmem>>, vector<1x64x1xf32>
    %7 = vector.shape_cast %6 : vector<1x64x1xf32> to vector<64x1xf32>
    %8 = vector.broadcast %7 : vector<64x1xf32> to vector<64x512xf32>
    %9 = arith.mulf %5, %8 : vector<64x512xf32>
    %10 = arith.truncf %9 : vector<64x512xf32> to vector<64x512xbf16>
    %c0_8 = arith.constant 0 : index
    %c0_9 = arith.constant 0 : index
    %11 = vector.load %arg5[%c0_8, %c0_9] : memref<192x64xbf16, #tpu.memory_space<vmem>>, vector<192x64xbf16>
    %cst = arith.constant dense<0.000000e+00> : vector<192x512xf32>
    %12 = tpu.matmul %11, %10, %cst {dimension_numbers = #tpu.dot_dimension_numbers<[1], [0], [0], [1], [0, 0, 1, 1], [], []>} : vector<192x64xbf16>, vector<64x512xbf16>, vector<192x512xf32> -> vector<192x512xf32>
    %c0_10 = arith.constant 0 : index
    %c0_11 = arith.constant 0 : index
    %13 = vector.load %arg6[%c0_10, %c0_11] : memref<192x1xf32, #tpu.memory_space<vmem>>, vector<192x1xf32>
    %14 = vector.broadcast %13 : vector<192x1xf32> to vector<192x512xf32>
    %15 = arith.addf %12, %14 : vector<192x512xf32>
    %16 = arith.truncf %15 : vector<192x512xf32> to vector<192x512xbf16>
    %17 = vector.extract_strided_slice %16 {offsets = [0, 0], sizes = [64, 512], strides = [1, 1]} : vector<192x512xbf16> to vector<64x512xbf16>
    %c0_12 = arith.constant 0 : index
    %c0_13 = arith.constant 0 : index
    %c0_14 = arith.constant 0 : index
    %18 = vector.load %arg7[%c0_12, %c0_13, %c0_14] : memref<1x64x512xbf16, #tpu.memory_space<vmem>>, vector<1x64x512xbf16>
    %19 = vector.shape_cast %18 : vector<1x64x512xbf16> to vector<64x512xbf16>
    %20 = vector.shape_cast %17 : vector<64x512xbf16> to vector<1x64x512xbf16>
    tpu.vector_store %arg7[%c0_12, %c0_13, %c0_14], %20 {strides = array<i32>} : memref<1x64x512xbf16, #tpu.memory_space<vmem>>, vector<1x64x512xbf16>,
    %21 = vector.extract_strided_slice %16 {offsets = [64, 0], sizes = [64, 512], strides = [1, 1]} : vector<192x512xbf16> to vector<64x512xbf16>
    %c0_15 = arith.constant 0 : index
    %c0_16 = arith.constant 0 : index
    %c0_17 = arith.constant 0 : index
    %22 = vector.load %arg8[%c0_15, %c0_16, %c0_17] : memref<1x64x512xbf16, #tpu.memory_space<vmem>>, vector<1x64x512xbf16>
    %23 = vector.shape_cast %22 : vector<1x64x512xbf16> to vector<64x512xbf16>
    %24 = vector.shape_cast %21 : vector<64x512xbf16> to vector<1x64x512xbf16>
    tpu.vector_store %arg8[%c0_15, %c0_16, %c0_17], %24 {strides = array<i32>} : memref<1x64x512xbf16, #tpu.memory_space<vmem>>, vector<1x64x512xbf16>,
    %25 = vector.extract_strided_slice %16 {offsets = [128, 0], sizes = [64, 512], strides = [1, 1]} : vector<192x512xbf16> to vector<64x512xbf16>
    %c0_18 = arith.constant 0 : index
    %c0_19 = arith.constant 0 : index
    %c0_20 = arith.constant 0 : index
    %26 = vector.load %arg9[%c0_18, %c0_19, %c0_20] : memref<1x64x512xbf16, #tpu.memory_space<vmem>>, vector<1x64x512xbf16>
    %27 = vector.shape_cast %26 : vector<1x64x512xbf16> to vector<64x512xbf16>
    %28 = vector.shape_cast %25 : vector<64x512xbf16> to vector<1x64x512xbf16>
    tpu.vector_store %arg9[%c0_18, %c0_19, %c0_20], %28 {strides = array<i32>} : memref<1x64x512xbf16, #tpu.memory_space<vmem>>, vector<1x64x512xbf16>,
    return
  }
  func.func @transform_0(%arg0: i32, %arg1: i32) -> (i32, i32, i32) {
    %c0_i32 = arith.constant 0 : i32
    %c0_i32_0 = arith.constant 0 : i32
    return %arg0, %c0_i32, %arg1 : i32, i32, i32
  }
  func.func @transform_1(%arg0: i32, %arg1: i32) -> (i32, i32, i32) {
    %c0_i32 = arith.constant 0 : i32
    %c0_i32_0 = arith.constant 0 : i32
    %c0_i32_1 = arith.constant 0 : i32
    return %arg0, %c0_i32, %c0_i32_0 : i32, i32, i32
  }
  func.func @transform_2(%arg0: i32, %arg1: i32) -> (i32, i32, i32) {
    %c0_i32 = arith.constant 0 : i32
    %c0_i32_0 = arith.constant 0 : i32
    %c0_i32_1 = arith.constant 0 : i32
    return %arg0, %c0_i32, %c0_i32_0 : i32, i32, i32
  }
  func.func @transform_3(%arg0: i32, %arg1: i32) -> (i32, i32) {
    %c0_i32 = arith.constant 0 : i32
    %c0_i32_0 = arith.constant 0 : i32
    %c0_i32_1 = arith.constant 0 : i32
    return %c0_i32, %c0_i32_0 : i32, i32
  }
  func.func @transform_4(%arg0: i32, %arg1: i32) -> (i32, i32) {
    %c0_i32 = arith.constant 0 : i32
    %c0_i32_0 = arith.constant 0 : i32
    %c0_i32_1 = arith.constant 0 : i32
    return %c0_i32, %c0_i32_0 : i32, i32
  }
  func.func @transform_5(%arg0: i32, %arg1: i32) -> (i32, i32, i32) {
    %c0_i32 = arith.constant 0 : i32
    %c0_i32_0 = arith.constant 0 : i32
    return %arg0, %c0_i32, %arg1 : i32, i32, i32
  }
  func.func @transform_6(%arg0: i32, %arg1: i32) -> (i32, i32, i32) {
    %c0_i32 = arith.constant 0 : i32
    %c0_i32_0 = arith.constant 0 : i32
    return %arg0, %c0_i32, %arg1 : i32, i32, i32
  }
  func.func @transform_7(%arg0: i32, %arg1: i32) -> (i32, i32, i32) {
    %c0_i32 = arith.constant 0 : i32
    %c0_i32_0 = arith.constant 0 : i32
    return %arg0, %c0_i32, %arg1 : i32, i32, i32
  }
}

module attributes {stable_mosaic.version = 11 : i64} {
  func.func @_flash_attn_kernel(%arg0: i32, %arg1: i32, %arg2: i32, %arg3: memref<1x64x256xbf16, #tpu.memory_space<vmem>>, %arg4: memref<1x512x64xbf16, #tpu.memory_space<vmem>>, %arg5: memref<1x64x512xbf16, #tpu.memory_space<vmem>>, %arg6: memref<1x64x256xf32, #tpu.memory_space<vmem>>, %arg7: memref<64x64xbf16, #tpu.memory_space<vmem>>, %arg8: memref<64x1xf32, #tpu.memory_space<vmem>>, %arg9: memref<1x64x256xf32, #tpu.memory_space<vmem>>, %arg10: memref<1x256xf32, #tpu.memory_space<vmem>>, %arg11: memref<1x256xf32, #tpu.memory_space<vmem>>, %arg12: memref<64x256xf32, #tpu.memory_space<vmem>>) attributes {dimension_semantics = [#tpu.dimension_semantics<parallel>, #tpu.dimension_semantics<parallel>, #tpu.dimension_semantics<arbitrary>], iteration_bounds = array<i64: 2, 4, 2>, scalar_prefetch = 0 : i64, scratch_operands = 3 : i64, tpu.core_type = #tpu.core_type<tc>, window_params = [{transform_indices = @transform_0, window_bounds = array<i64: 1, 64, 256>}, {transform_indices = @transform_1, window_bounds = array<i64: 1, 512, 64>}, {transform_indices = @transform_2, window_bounds = array<i64: 1, 64, 512>}, {transform_indices = @transform_3, window_bounds = array<i64: 1, 64, 256>}, {pipeline_mode = #tpu.pipeline_mode<synchronous>, transform_indices = @transform_4, window_bounds = array<i64: 64, 64>}, {pipeline_mode = #tpu.pipeline_mode<synchronous>, transform_indices = @transform_5, window_bounds = array<i64: 64, 1>}, {transform_indices = @transform_6, window_bounds = array<i64: 1, 64, 256>}]} {
    %c0_i32 = arith.constant 0 : i32
    %0 = arith.cmpi eq, %arg2, %c0_i32 : i32
    %1 = arith.extui %0 : i1 to i32
    %c0_i32_0 = arith.constant 0 : i32
    %2 = arith.cmpi ne, %1, %c0_i32_0 : i32
    scf.if %2 {
      %cst_25 = arith.constant 0xFF800000 : f32
      %36 = vector.broadcast %cst_25 : f32 to vector<1x256xf32>
      %c0_26 = arith.constant 0 : index
      %c0_27 = arith.constant 0 : index
      %37 = vector.load %arg10[%c0_26, %c0_27] : memref<1x256xf32, #tpu.memory_space<vmem>>, vector<1x256xf32>
      tpu.vector_store %arg10[%c0_26, %c0_27], %36 {strides = array<i32>} : memref<1x256xf32, #tpu.memory_space<vmem>>, vector<1x256xf32>,
      %cst_28 = arith.constant 0.000000e+00 : f32
      %38 = vector.broadcast %cst_28 : f32 to vector<1x256xf32>
      %c0_29 = arith.constant 0 : index
      %c0_30 = arith.constant 0 : index
      %39 = vector.load %arg11[%c0_29, %c0_30] : memref<1x256xf32, #tpu.memory_space<vmem>>, vector<1x256xf32>
      tpu.vector_store %arg11[%c0_29, %c0_30], %38 {strides = array<i32>} : memref<1x256xf32, #tpu.memory_space<vmem>>, vector<1x256xf32>,
      %cst_31 = arith.constant 0.000000e+00 : f32
      %40 = vector.broadcast %cst_31 : f32 to vector<64x256xf32>
      %c0_32 = arith.constant 0 : index
      %c0_33 = arith.constant 0 : index
      %41 = vector.load %arg12[%c0_32, %c0_33] : memref<64x256xf32, #tpu.memory_space<vmem>>, vector<64x256xf32>
      tpu.vector_store %arg12[%c0_32, %c0_33], %40 {strides = array<i32>} : memref<64x256xf32, #tpu.memory_space<vmem>>, vector<64x256xf32>,
    } else {
    }
    %c0 = arith.constant 0 : index
    %c0_1 = arith.constant 0 : index
    %c0_2 = arith.constant 0 : index
    %3 = vector.load %arg4[%c0, %c0_1, %c0_2] : memref<1x512x64xbf16, #tpu.memory_space<vmem>>, vector<1x512x64xbf16>
    %4 = vector.shape_cast %3 : vector<1x512x64xbf16> to vector<512x64xbf16>
    %c0_3 = arith.constant 0 : index
    %c0_4 = arith.constant 0 : index
    %c0_5 = arith.constant 0 : index
    %5 = vector.load %arg3[%c0_3, %c0_4, %c0_5] : memref<1x64x256xbf16, #tpu.memory_space<vmem>>, vector<1x64x256xbf16>
    %6 = vector.shape_cast %5 : vector<1x64x256xbf16> to vector<64x256xbf16>
    %cst = arith.constant dense<0.000000e+00> : vector<512x256xf32>
    %7 = tpu.matmul %4, %6, %cst {dimension_numbers = #tpu.dot_dimension_numbers<[1], [0], [0], [1], [0, 0, 1, 1], [], []>} : vector<512x64xbf16>, vector<64x256xbf16>, vector<512x256xf32> -> vector<512x256xf32>
    %c0_6 = arith.constant 0 : index
    %c0_7 = arith.constant 0 : index
    %8 = vector.load %arg10[%c0_6, %c0_7] : memref<1x256xf32, #tpu.memory_space<vmem>>, vector<1x256xf32>
    %cst_8 = arith.constant dense<0xFF800000> : vector<256xf32>
    %9 = vector.multi_reduction <maximumf>, %7, %cst_8 [0] : vector<512x256xf32> to vector<256xf32>
    %10 = vector.shape_cast %9 : vector<256xf32> to vector<1x256xf32>
    %11 = arith.maximumf %8, %10 : vector<1x256xf32>
    %12 = arith.subf %8, %11 : vector<1x256xf32>
    %13 = math.exp %12 : vector<1x256xf32>
    %14 = vector.broadcast %11 : vector<1x256xf32> to vector<512x256xf32>
    %15 = arith.subf %7, %14 : vector<512x256xf32>
    %16 = math.exp %15 : vector<512x256xf32>
    %c0_9 = arith.constant 0 : index
    %c0_10 = arith.constant 0 : index
    %17 = vector.load %arg11[%c0_9, %c0_10] : memref<1x256xf32, #tpu.memory_space<vmem>>, vector<1x256xf32>
    %18 = arith.mulf %13, %17 : vector<1x256xf32>
    %cst_11 = arith.constant dense<0.000000e+00> : vector<256xf32>
    %19 = vector.multi_reduction <add>, %16, %cst_11 [0] : vector<512x256xf32> to vector<256xf32>
    %20 = vector.shape_cast %19 : vector<256xf32> to vector<1x256xf32>
    %21 = arith.addf %18, %20 : vector<1x256xf32>
    %c0_12 = arith.constant 0 : index
    %c0_13 = arith.constant 0 : index
    %22 = vector.load %arg11[%c0_12, %c0_13] : memref<1x256xf32, #tpu.memory_space<vmem>>, vector<1x256xf32>
    tpu.vector_store %arg11[%c0_12, %c0_13], %21 {strides = array<i32>} : memref<1x256xf32, #tpu.memory_space<vmem>>, vector<1x256xf32>,
    %c0_14 = arith.constant 0 : index
    %c0_15 = arith.constant 0 : index
    %23 = vector.load %arg12[%c0_14, %c0_15] : memref<64x256xf32, #tpu.memory_space<vmem>>, vector<64x256xf32>
    %24 = vector.broadcast %13 : vector<1x256xf32> to vector<64x256xf32>
    %25 = arith.mulf %24, %23 : vector<64x256xf32>
    %c0_16 = arith.constant 0 : index
    %c0_17 = arith.constant 0 : index
    %c0_18 = arith.constant 0 : index
    %26 = vector.load %arg5[%c0_16, %c0_17, %c0_18] : memref<1x64x512xbf16, #tpu.memory_space<vmem>>, vector<1x64x512xbf16>
    %27 = vector.shape_cast %26 : vector<1x64x512xbf16> to vector<64x512xbf16>
    %28 = arith.truncf %16 : vector<512x256xf32> to vector<512x256xbf16>
    %cst_19 = arith.constant dense<0.000000e+00> : vector<64x256xf32>
    %29 = tpu.matmul %27, %28, %cst_19 {dimension_numbers = #tpu.dot_dimension_numbers<[1], [0], [0], [1], [0, 0, 1, 1], [], []>} : vector<64x512xbf16>, vector<512x256xbf16>, vector<64x256xf32> -> vector<64x256xf32>
    %30 = arith.addf %25, %29 : vector<64x256xf32>
    %c0_20 = arith.constant 0 : index
    %c0_21 = arith.constant 0 : index
    %31 = vector.load %arg12[%c0_20, %c0_21] : memref<64x256xf32, #tpu.memory_space<vmem>>, vector<64x256xf32>
    tpu.vector_store %arg12[%c0_20, %c0_21], %30 {strides = array<i32>} : memref<64x256xf32, #tpu.memory_space<vmem>>, vector<64x256xf32>,
    %c0_22 = arith.constant 0 : index
    %c0_23 = arith.constant 0 : index
    %32 = vector.load %arg10[%c0_22, %c0_23] : memref<1x256xf32, #tpu.memory_space<vmem>>, vector<1x256xf32>
    tpu.vector_store %arg10[%c0_22, %c0_23], %11 {strides = array<i32>} : memref<1x256xf32, #tpu.memory_space<vmem>>, vector<1x256xf32>,
    %c1_i32 = arith.constant 1 : i32
    %33 = arith.cmpi eq, %arg2, %c1_i32 : i32
    %34 = arith.extui %33 : i1 to i32
    %c0_i32_24 = arith.constant 0 : i32
    %35 = arith.cmpi ne, %34, %c0_i32_24 : i32
    scf.if %35 {
      %c0_25 = arith.constant 0 : index
      %c0_26 = arith.constant 0 : index
      %36 = vector.load %arg12[%c0_25, %c0_26] : memref<64x256xf32, #tpu.memory_space<vmem>>, vector<64x256xf32>
      %c0_27 = arith.constant 0 : index
      %c0_28 = arith.constant 0 : index
      %37 = vector.load %arg11[%c0_27, %c0_28] : memref<1x256xf32, #tpu.memory_space<vmem>>, vector<1x256xf32>
      %38 = tpu.reciprocal %37 {approx = true} : vector<1x256xf32> -> vector<1x256xf32>
      %39 = vector.broadcast %38 : vector<1x256xf32> to vector<64x256xf32>
      %40 = arith.mulf %36, %39 : vector<64x256xf32>
      %41 = arith.truncf %40 : vector<64x256xf32> to vector<64x256xbf16>
      %c0_29 = arith.constant 0 : index
      %c0_30 = arith.constant 0 : index
      %42 = vector.load %arg7[%c0_29, %c0_30] : memref<64x64xbf16, #tpu.memory_space<vmem>>, vector<64x64xbf16>
      %cst_31 = arith.constant dense<0.000000e+00> : vector<64x256xf32>
      %43 = tpu.matmul %42, %41, %cst_31 {dimension_numbers = #tpu.dot_dimension_numbers<[1], [0], [0], [1], [0, 0, 1, 1], [], []>} : vector<64x64xbf16>, vector<64x256xbf16>, vector<64x256xf32> -> vector<64x256xf32>
      %c0_32 = arith.constant 0 : index
      %c0_33 = arith.constant 0 : index
      %44 = vector.load %arg8[%c0_32, %c0_33] : memref<64x1xf32, #tpu.memory_space<vmem>>, vector<64x1xf32>
      %45 = vector.broadcast %44 : vector<64x1xf32> to vector<64x256xf32>
      %46 = arith.addf %43, %45 : vector<64x256xf32>
      %c0_34 = arith.constant 0 : index
      %c0_35 = arith.constant 0 : index
      %c0_36 = arith.constant 0 : index
      %47 = vector.load %arg6[%c0_34, %c0_35, %c0_36] : memref<1x64x256xf32, #tpu.memory_space<vmem>>, vector<1x64x256xf32>
      %48 = vector.shape_cast %47 : vector<1x64x256xf32> to vector<64x256xf32>
      %49 = arith.addf %48, %46 : vector<64x256xf32>
      %c0_37 = arith.constant 0 : index
      %c0_38 = arith.constant 0 : index
      %c0_39 = arith.constant 0 : index
      %50 = vector.load %arg9[%c0_37, %c0_38, %c0_39] : memref<1x64x256xf32, #tpu.memory_space<vmem>>, vector<1x64x256xf32>
      %51 = vector.shape_cast %50 : vector<1x64x256xf32> to vector<64x256xf32>
      %52 = vector.shape_cast %49 : vector<64x256xf32> to vector<1x64x256xf32>
      tpu.vector_store %arg9[%c0_37, %c0_38, %c0_39], %52 {strides = array<i32>} : memref<1x64x256xf32, #tpu.memory_space<vmem>>, vector<1x64x256xf32>,
    } else {
    }
    return
  }
  func.func @transform_0(%arg0: i32, %arg1: i32, %arg2: i32) -> (i32, i32, i32) {
    %c0_i32 = arith.constant 0 : i32
    %c0_i32_0 = arith.constant 0 : i32
    return %arg0, %c0_i32, %arg1 : i32, i32, i32
  }
  func.func @transform_1(%arg0: i32, %arg1: i32, %arg2: i32) -> (i32, i32, i32) {
    %c0_i32 = arith.constant 0 : i32
    %c0_i32_0 = arith.constant 0 : i32
    return %arg0, %arg2, %c0_i32 : i32, i32, i32
  }
  func.func @transform_2(%arg0: i32, %arg1: i32, %arg2: i32) -> (i32, i32, i32) {
    %c0_i32 = arith.constant 0 : i32
    %c0_i32_0 = arith.constant 0 : i32
    return %arg0, %c0_i32, %arg2 : i32, i32, i32
  }
  func.func @transform_3(%arg0: i32, %arg1: i32, %arg2: i32) -> (i32, i32, i32) {
    %c0_i32 = arith.constant 0 : i32
    %c0_i32_0 = arith.constant 0 : i32
    return %arg0, %c0_i32, %arg1 : i32, i32, i32
  }
  func.func @transform_4(%arg0: i32, %arg1: i32, %arg2: i32) -> (i32, i32) {
    %c0_i32 = arith.constant 0 : i32
    %c0_i32_0 = arith.constant 0 : i32
    %c0_i32_1 = arith.constant 0 : i32
    return %c0_i32, %c0_i32_0 : i32, i32
  }
  func.func @transform_5(%arg0: i32, %arg1: i32, %arg2: i32) -> (i32, i32) {
    %c0_i32 = arith.constant 0 : i32
    %c0_i32_0 = arith.constant 0 : i32
    %c0_i32_1 = arith.constant 0 : i32
    return %c0_i32, %c0_i32_0 : i32, i32
  }
  func.func @transform_6(%arg0: i32, %arg1: i32, %arg2: i32) -> (i32, i32, i32) {
    %c0_i32 = arith.constant 0 : i32
    %c0_i32_0 = arith.constant 0 : i32
    return %arg0, %c0_i32, %arg1 : i32, i32, i32
  }
}

</mosaic_0001>

<llo_original>
// kernel: attention_block_3d.2
$region0: #{attention_block_3d.2}
  #allocation0 [shape = 'u32[]', space=smem, size = 0x4, offset = 0x4, fixed_abs, tag = 'smem constant byte address 0x4 - core index']
  #allocation1 [shape = 'u32[144,128]{1,0:T(1,128)}', space=vmem, size = 0x12000, scoped, tag = 'internal scratch']
  %s0 = inlined_call_operand.vmem [shape: f32[2,64,1024], index: 0, kind: input, shape index: {}]
  %s1 = inlined_call_operand.vmem [shape: f32[2,64,1], index: 1, kind: input, shape index: {}]
  %s2 = inlined_call_operand.vmem [shape: f32[2,64,1], index: 2, kind: input, shape index: {}]
  %s3 = inlined_call_operand.vmem [shape: bf16[192,64], index: 3, kind: input, shape index: {}]
  %s4 = inlined_call_operand.vmem [shape: f32[192,1], index: 4, kind: input, shape index: {}]
  %s5 = inlined_call_operand.vmem [shape: bf16[2,64,1024], index: 5, kind: output, shape index: {0}]
  %s6 = inlined_call_operand.vmem [shape: bf16[2,64,1024], index: 6, kind: output, shape index: {1}]
  %s7 = inlined_call_operand.vmem [shape: bf16[2,64,1024], index: 7, kind: output, shape index: {2}]
  %8 = xla_tuple %s5, %s6, %s7
  %s9 = sld [smem:[#allocation0]]
  $region149: #{attention_block_3d.2} parent=0
    _
  %s11 = ssub.s32 1, %s9
  %s12 = scalar_select 0, %s11, %s9
  $region1: #{attention_block_3d.2} parent=0
    #allocation2 [shape = 'u8[262144]{0}', space=vmem, size = 0x40000, scoped, tag = 'input window, operand 0']
    #allocation3 [shape = 'u8[131072]{0}', space=vmem, size = 0x20000, scoped, tag = 'output window, operand 0']
    #allocation4 [shape = 'u8[131072]{0}', space=vmem, size = 0x20000, scoped, tag = 'output window, operand 1']
    #allocation5 [shape = 'u8[131072]{0}', space=vmem, size = 0x20000, scoped, tag = 'output window, operand 2']
    loop: start=0, step=1, limit=6
    $region2: #{attention_block_3d.2} parent=1 // loop_pre_header
      _
    $region3: #{attention_block_3d.2} parent=1 // loop_header
      %s14 = sphi 0, %s18
      %p15 = scmp.ge.s32.totalorder %s14, 6
      %s21 = sphi 0, %s33
      %s22 = sphi 0, %s29
      %s23 = sphi 0, %s21
      %s24 = sphi 0, %s22
      %s25 = sphi 0, %s23
      %s26 = sphi 0, %s24
      %s38 = sphi 0, %s40
      %s41 = sphi 0, %s38
      %s42 = sphi 0, %s41
      %s58 = sphi 0, %s42
      %s64 = sphi 0, %s66
      %s67 = sphi 0, %s64
      %s68 = sphi 0, %s67
      %s84 = sphi 0, %s68
      %s90 = sphi 0, %s92
      %s93 = sphi 0, %s90
      %s94 = sphi 0, %s93
      %s110 = sphi 0, %s94
      %s114 = sphi 0, %s114
      %s116 = sphi 0, %s114
      %s117 = sphi 0, %s116
      %s131 = sphi 0, %s117
      %s135 = sphi 0, %s135
      %s137 = sphi 0, %s135
      %s138 = sphi 0, %s137
      %s152 = sphi 0, %s138
      %s160 = sphi 0, %s162
      %s163 = sphi 0, %s160
      %s164 = sphi 0, %s163
      %s180 = sphi 0, %s164
      %s188 = sphi 0, %s190
      %s191 = sphi 0, %s188
      %s192 = sphi 0, %s191
      %s208 = sphi 0, %s192
      %s216 = sphi 0, %s218
      %s219 = sphi 0, %s216
      %s220 = sphi 0, %s219
      %s236 = sphi 0, %s220
    $region4: #{attention_block_3d.2} parent=1 // loop_header_branch
      %17 = sbr.rel (%p15) target = $region8
    $region5: #{attention_block_3d.2} parent=1 // loop_body
      %s19 = ssub.s32 %s14, 1
      %s20 = ssub.s32 %s14, 2
      %s27 = sadd.s32 1, %s22
      %p28 = scmp.ge.s32.totalorder %s27, 2
      %s29 = scalar_select %p28, 0, %s27
      %s30 = sadd.s32 1, %s21
      %s31 = scalar_select %p28, %s30, %s21
      %p32 = scmp.ge.s32.totalorder %s31, 2
      %s33 = scalar_select %p32, 0, %s31
      %s34 = ssub.s32 %s21, %s33
      %s35 = ssub.s32 %s22, %s29
      %s36 = sor.u32 %s34, %s35
      %p37 = scmp.eq.s32.totalorder %s36, 0
      %s39 = sadd.s32 %s38, 1
      %s40 = scalar_select %p37, %s38, %s39
      %p43 = pneg %p37
      %p44 = scmp.eq.s32.totalorder %s14, 3
      %p45 = por %p43, %p44
      %p46 = scmp.ne.s32.totalorder %s38, %s41
      %p47 = scmp.eq.s32.totalorder %s14, 0
      %p48 = por %p46, %p47
      %p49 = scmp.ne.s32.totalorder %s38, %s41
      %p50 = scmp.eq.s32.totalorder %s19, 3
      %p51 = por %p49, %p50
      %p52 = scmp.ne.s32.totalorder %s41, %s42
      %p53 = scmp.eq.s32.totalorder %s19, 0
      %p54 = por %p52, %p53
      %p55 = scmp.ne.s32.totalorder %s41, %s42
      %p56 = scmp.eq.s32.totalorder %s20, 3
      %p57 = por %p55, %p56
      %p59 = scmp.ne.s32.totalorder %s42, %s58
      %p60 = scmp.eq.s32.totalorder %s20, 0
      %p61 = por %p59, %p60
      %s62 = ssub.s32 %s21, %s33
      %p63 = scmp.eq.s32.totalorder %s62, 0
      %s65 = sadd.s32 %s64, 1
      %s66 = scalar_select %p63, %s64, %s65
      %p69 = pneg %p63
      %p70 = scmp.eq.s32.totalorder %s14, 3
      %p71 = por %p69, %p70
      %p72 = scmp.ne.s32.totalorder %s64, %s67
      %p73 = scmp.eq.s32.totalorder %s14, 0
      %p74 = por %p72, %p73
      %p75 = scmp.ne.s32.totalorder %s64, %s67
      %p76 = scmp.eq.s32.totalorder %s19, 3
      %p77 = por %p75, %p76
      %p78 = scmp.ne.s32.totalorder %s67, %s68
      %p79 = scmp.eq.s32.totalorder %s19, 0
      %p80 = por %p78, %p79
      %p81 = scmp.ne.s32.totalorder %s67, %s68
      %p82 = scmp.eq.s32.totalorder %s20, 3
      %p83 = por %p81, %p82
      %p85 = scmp.ne.s32.totalorder %s68, %s84
      %p86 = scmp.eq.s32.totalorder %s20, 0
      %p87 = por %p85, %p86
      %s88 = ssub.s32 %s21, %s33
      %p89 = scmp.eq.s32.totalorder %s88, 0
      %s91 = sadd.s32 %s90, 1
      %s92 = scalar_select %p89, %s90, %s91
      %p95 = pneg %p89
      %p96 = scmp.eq.s32.totalorder %s14, 3
      %p97 = por %p95, %p96
      %p98 = scmp.ne.s32.totalorder %s90, %s93
      %p99 = scmp.eq.s32.totalorder %s14, 0
      %p100 = por %p98, %p99
      %p101 = scmp.ne.s32.totalorder %s90, %s93
      %p102 = scmp.eq.s32.totalorder %s19, 3
      %p103 = por %p101, %p102
      %p104 = scmp.ne.s32.totalorder %s93, %s94
      %p105 = scmp.eq.s32.totalorder %s19, 0
      %p106 = por %p104, %p105
      %p107 = scmp.ne.s32.totalorder %s93, %s94
      %p108 = scmp.eq.s32.totalorder %s20, 3
      %p109 = por %p107, %p108
      %p111 = scmp.ne.s32.totalorder %s94, %s110
      %p112 = scmp.eq.s32.totalorder %s20, 0
      %p113 = por %p111, %p112
      %s115 = sadd.s32 %s114, 1
      %p118 = scmp.eq.s32.totalorder %s14, 3
      %p119 = scmp.ne.s32.totalorder %s114, %s116
      %p120 = scmp.eq.s32.totalorder %s14, 0
      %p121 = por %p119, %p120
      %p122 = scmp.ne.s32.totalorder %s114, %s116
      %p123 = scmp.eq.s32.totalorder %s19, 3
      %p124 = por %p122, %p123
      %p125 = scmp.ne.s32.totalorder %s116, %s117
      %p126 = scmp.eq.s32.totalorder %s19, 0
      %p127 = por %p125, %p126
      %p128 = scmp.ne.s32.totalorder %s116, %s117
      %p129 = scmp.eq.s32.totalorder %s20, 3
      %p130 = por %p128, %p129
      %p132 = scmp.ne.s32.totalorder %s117, %s131
      %p133 = scmp.eq.s32.totalorder %s20, 0
      %p134 = por %p132, %p133
      %s136 = sadd.s32 %s135, 1
      %p139 = scmp.eq.s32.totalorder %s14, 3
      %p140 = scmp.ne.s32.totalorder %s135, %s137
      %p141 = scmp.eq.s32.totalorder %s14, 0
      %p142 = por %p140, %p141
      %p143 = scmp.ne.s32.totalorder %s135, %s137
      %p144 = scmp.eq.s32.totalorder %s19, 3
      %p145 = por %p143, %p144
      %p146 = scmp.ne.s32.totalorder %s137, %s138
      %p147 = scmp.eq.s32.totalorder %s19, 0
      %p148 = por %p146, %p147
      %p149 = scmp.ne.s32.totalorder %s137, %s138
      %p150 = scmp.eq.s32.totalorder %s20, 3
      %p151 = por %p149, %p150
      %p153 = scmp.ne.s32.totalorder %s138, %s152
      %p154 = scmp.eq.s32.totalorder %s20, 0
      %p155 = por %p153, %p154
      %s156 = ssub.s32 %s21, %s33
      %s157 = ssub.s32 %s22, %s29
      %s158 = sor.u32 %s156, %s157
      %p159 = scmp.eq.s32.totalorder %s158, 0
      %s161 = sadd.s32 %s160, 1
      %s162 = scalar_select %p159, %s160, %s161
      %p165 = pneg %p159
      %p166 = scmp.eq.s32.totalorder %s14, 3
      %p167 = por %p165, %p166
      %p168 = scmp.ne.s32.totalorder %s160, %s163
      %p169 = scmp.eq.s32.totalorder %s14, 0
      %p170 = por %p168, %p169
      %p171 = scmp.ne.s32.totalorder %s160, %s163
      %p172 = scmp.eq.s32.totalorder %s19, 3
      %p173 = por %p171, %p172
      %p174 = scmp.ne.s32.totalorder %s163, %s164
      %p175 = scmp.eq.s32.totalorder %s19, 0
      %p176 = por %p174, %p175
      %p177 = scmp.ne.s32.totalorder %s163, %s164
      %p178 = scmp.eq.s32.totalorder %s20, 3
      %p179 = por %p177, %p178
      %p181 = scmp.ne.s32.totalorder %s164, %s180
      %p182 = scmp.eq.s32.totalorder %s20, 0
      %p183 = por %p181, %p182
      %s184 = ssub.s32 %s21, %s33
      %s185 = ssub.s32 %s22, %s29
      %s186 = sor.u32 %s184, %s185
      %p187 = scmp.eq.s32.totalorder %s186, 0
      %s189 = sadd.s32 %s188, 1
      %s190 = scalar_select %p187, %s188, %s189
      %p193 = pneg %p187
      %p194 = scmp.eq.s32.totalorder %s14, 3
      %p195 = por %p193, %p194
      %p196 = scmp.ne.s32.totalorder %s188, %s191
      %p197 = scmp.eq.s32.totalorder %s14, 0
      %p198 = por %p196, %p197
      %p199 = scmp.ne.s32.totalorder %s188, %s191
      %p200 = scmp.eq.s32.totalorder %s19, 3
      %p201 = por %p199, %p200
      %p202 = scmp.ne.s32.totalorder %s191, %s192
      %p203 = scmp.eq.s32.totalorder %s19, 0
      %p204 = por %p202, %p203
      %p205 = scmp.ne.s32.totalorder %s191, %s192
      %p206 = scmp.eq.s32.totalorder %s20, 3
      %p207 = por %p205, %p206
      %p209 = scmp.ne.s32.totalorder %s192, %s208
      %p210 = scmp.eq.s32.totalorder %s20, 0
      %p211 = por %p209, %p210
      %s212 = ssub.s32 %s21, %s33
      %s213 = ssub.s32 %s22, %s29
      %s214 = sor.u32 %s212, %s213
      %p215 = scmp.eq.s32.totalorder %s214, 0
      %s217 = sadd.s32 %s216, 1
      %s218 = scalar_select %p215, %s216, %s217
      %p221 = pneg %p215
      %p222 = scmp.eq.s32.totalorder %s14, 3
      %p223 = por %p221, %p222
      %p224 = scmp.ne.s32.totalorder %s216, %s219
      %p225 = scmp.eq.s32.totalorder %s14, 0
      %p226 = por %p224, %p225
      %p227 = scmp.ne.s32.totalorder %s216, %s219
      %p228 = scmp.eq.s32.totalorder %s19, 3
      %p229 = por %p227, %p228
      %p230 = scmp.ne.s32.totalorder %s219, %s220
      %p231 = scmp.eq.s32.totalorder %s19, 0
      %p232 = por %p230, %p231
      %p233 = scmp.ne.s32.totalorder %s219, %s220
      %p234 = scmp.eq.s32.totalorder %s20, 3
      %p235 = por %p233, %p234
      %p237 = scmp.ne.s32.totalorder %s220, %s236
      %p238 = scmp.eq.s32.totalorder %s20, 0
      %p239 = por %p237, %p238
      %p240 = scmp.le.s32.totalorder 1, %s14
      %p241 = scmp.lt.s32.totalorder %s14, 5
      %p242 = pnand %p240, %p241
      %p243 = pneg %p242
      // Predicated region
      $region9: #{attention_block_3d.2} parent=5 // pred_check
        _
      $region10: #{attention_block_3d.2} parent=5 // pred_check_branch
        %245 = sbr.rel (%p242) target = $region12
      $region11: #{attention_block_3d.2} parent=5 // pred_region
        %s246 = ssub.s32 %s14, 1
        // Predicated region
        $region13: #{attention_block_3d.2} parent=11 // pred_check
          %p247 = pneg %p127
        $region14: #{attention_block_3d.2} parent=11 // pred_check_branch
          %249 = sbr.rel (%p247) target = $region16
        $region15: #{attention_block_3d.2} parent=11 // pred_region
          _
        $region16: #{attention_block_3d.2} parent=11 // pred_fallthru
          _
        // Predicated region
        $region17: #{attention_block_3d.2} parent=11 // pred_check
          %p250 = pneg %p148
        $region18: #{attention_block_3d.2} parent=11 // pred_check_branch
          %252 = sbr.rel (%p250) target = $region20
        $region19: #{attention_block_3d.2} parent=11 // pred_region
          _
        $region20: #{attention_block_3d.2} parent=11 // pred_fallthru
          _
      $region12: #{attention_block_3d.2} parent=5 // pred_fallthru
        _
      %p253 = scmp.lt.s32.totalorder %s14, 4
      // Predicated region
      $region21: #{attention_block_3d.2} parent=5 // pred_check
        %p254 = pneg %p253
      $region22: #{attention_block_3d.2} parent=5 // pred_check_branch
        %256 = sbr.rel (%p254) target = $region24
      $region23: #{attention_block_3d.2} parent=5 // pred_region
        // Predicated region
        $region25: #{attention_block_3d.2} parent=23 // pred_check
          %p257 = pneg %p48
        $region26: #{attention_block_3d.2} parent=23 // pred_check_branch
          %259 = sbr.rel (%p257) target = $region28
        $region27: #{attention_block_3d.2} parent=23 // pred_region
          %s260 = sand.u32 %s38, 1
          %s261 = sand.u32 %s38, 1
          %s262 = smul.addr %s261, 256
          %s263 = scalar_lea.vmem [#allocation2], %s262
          %s264 = smul.u32 4, %s22
          %s265 = smul.addr %s21, 64
          %s266 = sadd.s32 %s264, %s265
          %s267 = smul.addr %s266, 8
          %s268 = scalar_lea.vmem %s0, %s267
          // Predicated region
          $region29: #{attention_block_3d.2} parent=27 // pred_check
            _
          $region30: #{attention_block_3d.2} parent=27 // pred_check_branch
            %270 = sbr.rel (0) target = $region32
          $region31: #{attention_block_3d.2} parent=27 // pred_region
            // Predicated region
            $region33: #{attention_block_3d.2} parent=31 // pred_check
              _
            $region34: #{attention_block_3d.2} parent=31 // pred_check_branch
              %272 = sbr.rel (0) target = $region36
            $region35: #{attention_block_3d.2} parent=31 // pred_region
              loop: start=0, step=1, limit=1
              $region37: #{attention_block_3d.2} parent=35 // loop_pre_header
                _
              $region38: #{attention_block_3d.2} parent=35 // loop_header
                %s274 = sphi 0, %s278
                %p275 = scmp.ge.s32.totalorder %s274, 1
                %s279 = sphi %s268, %s268
                %s280 = sphi %s263, %s263
              $region39: #{attention_block_3d.2} parent=35 // loop_header_branch
                %277 = sbr.rel (%p275) target = $region43
              $region40: #{attention_block_3d.2} parent=35 // loop_body
                %v281 = vld [vmem:[%s279] sm:$0xff]
                %282 = vst [vmem:[%s280] sm:$0xff] %v281
                %v283 = vld [vmem:[%s279 + $0x8] sm:$0xff]
                %284 = vst [vmem:[%s280 + $0x8] sm:$0xff] %v283
                %v285 = vld [vmem:[%s279 + $0x10] sm:$0xff]
                %286 = vst [vmem:[%s280 + $0x10] sm:$0xff] %v285
                %v287 = vld [vmem:[%s279 + $0x18] sm:$0xff]
                %288 = vst [vmem:[%s280 + $0x18] sm:$0xff] %v287
                %v289 = vld [vmem:[%s279 + $0x40] sm:$0xff]
                %290 = vst [vmem:[%s280 + $0x20] sm:$0xff] %v289
                %v291 = vld [vmem:[%s279 + $0x48] sm:$0xff]
                %292 = vst [vmem:[%s280 + $0x28] sm:$0xff] %v291
                %v293 = vld [vmem:[%s279 + $0x50] sm:$0xff]
                %294 = vst [vmem:[%s280 + $0x30] sm:$0xff] %v293
                %v295 = vld [vmem:[%s279 + $0x58] sm:$0xff]
                %296 = vst [vmem:[%s280 + $0x38] sm:$0xff] %v295
                %v297 = vld [vmem:[%s279 + $0x80] sm:$0xff]
                %298 = vst [vmem:[%s280 + $0x40] sm:$0xff] %v297
                %v299 = vld [vmem:[%s279 + $0x88] sm:$0xff]
                %300 = vst [vmem:[%s280 + $0x48] sm:$0xff] %v299
                %v301 = vld [vmem:[%s279 + $0x90] sm:$0xff]
                %302 = vst [vmem:[%s280 + $0x50] sm:$0xff] %v301
                %v303 = vld [vmem:[%s279 + $0x98] sm:$0xff]
                %304 = vst [vmem:[%s280 + $0x58] sm:$0xff] %v303
                %v305 = vld [vmem:[%s279 + $0xc0] sm:$0xff]
                %306 = vst [vmem:[%s280 + $0x60] sm:$0xff] %v305
                %v307 = vld [vmem:[%s279 + $0xc8] sm:$0xff]
                %308 = vst [vmem:[%s280 + $0x68] sm:$0xff] %v307
                %v309 = vld [vmem:[%s279 + $0xd0] sm:$0xff]
                %310 = vst [vmem:[%s280 + $0x70] sm:$0xff] %v309
                %v311 = vld [vmem:[%s279 + $0xd8] sm:$0xff]
                %312 = vst [vmem:[%s280 + $0x78] sm:$0xff] %v311
                %v313 = vld [vmem:[%s279 + $0x100] sm:$0xff]
                %314 = vst [vmem:[%s280 + $0x80] sm:$0xff] %v313
                %v315 = vld [vmem:[%s279 + $0x108] sm:$0xff]
                %316 = vst [vmem:[%s280 + $0x88] sm:$0xff] %v315
                %v317 = vld [vmem:[%s279 + $0x110] sm:$0xff]
                %318 = vst [vmem:[%s280 + $0x90] sm:$0xff] %v317
                %v319 = vld [vmem:[%s279 + $0x118] sm:$0xff]
                %320 = vst [vmem:[%s280 + $0x98] sm:$0xff] %v319
                %v321 = vld [vmem:[%s279 + $0x140] sm:$0xff]
                %322 = vst [vmem:[%s280 + $0xa0] sm:$0xff] %v321
                %v323 = vld [vmem:[%s279 + $0x148] sm:$0xff]
                %324 = vst [vmem:[%s280 + $0xa8] sm:$0xff] %v323
                %v325 = vld [vmem:[%s279 + $0x150] sm:$0xff]
                %326 = vst [vmem:[%s280 + $0xb0] sm:$0xff] %v325
                %v327 = vld [vmem:[%s279 + $0x158] sm:$0xff]
                %328 = vst [vmem:[%s280 + $0xb8] sm:$0xff] %v327
                %v329 = vld [vmem:[%s279 + $0x180] sm:$0xff]
                %330 = vst [vmem:[%s280 + $0xc0] sm:$0xff] %v329
                %v331 = vld [vmem:[%s279 + $0x188] sm:$0xff]
                %332 = vst [vmem:[%s280 + $0xc8] sm:$0xff] %v331
                %v333 = vld [vmem:[%s279 + $0x190] sm:$0xff]
                %334 = vst [vmem:[%s280 + $0xd0] sm:$0xff] %v333
                %v335 = vld [vmem:[%s279 + $0x198] sm:$0xff]
                %336 = vst [vmem:[%s280 + $0xd8] sm:$0xff] %v335
                %v337 = vld [vmem:[%s279 + $0x1c0] sm:$0xff]
                %338 = vst [vmem:[%s280 + $0xe0] sm:$0xff] %v337
                %v339 = vld [vmem:[%s279 + $0x1c8] sm:$0xff]
                %340 = vst [vmem:[%s280 + $0xe8] sm:$0xff] %v339
                %v341 = vld [vmem:[%s279 + $0x1d0] sm:$0xff]
                %342 = vst [vmem:[%s280 + $0xf0] sm:$0xff] %v341
                %v343 = vld [vmem:[%s279 + $0x1d8] sm:$0xff]
                %344 = vst [vmem:[%s280 + $0xf8] sm:$0xff] %v343
              $region41: #{attention_block_3d.2} parent=35 // loop_footer
                %s278 = sadd.s32 1, %s274
              $region42: #{attention_block_3d.2} parent=35 // loop_footer_branch
                %273 = sbr.rel target = $region38
              $region43: #{attention_block_3d.2} parent=35 // loop_exit
                _
            $region36: #{attention_block_3d.2} parent=31 // pred_fallthru
              _
            // Predicated region
            $region44: #{attention_block_3d.2} parent=31 // pred_check
              _
            $region45: #{attention_block_3d.2} parent=31 // pred_check_branch
              %346 = sbr.rel target = $region47
            $region46: #{attention_block_3d.2} parent=31 // pred_region
              _
            $region47: #{attention_block_3d.2} parent=31 // pred_fallthru
              _
          $region32: #{attention_block_3d.2} parent=27 // pred_fallthru
            _
          %347 = vnop
        $region28: #{attention_block_3d.2} parent=23 // pred_fallthru
          _
        // Predicated region
        $region48: #{attention_block_3d.2} parent=23 // pred_check
          %p348 = pneg %p74
        $region49: #{attention_block_3d.2} parent=23 // pred_check_branch
          %350 = sbr.rel (%p348) target = $region51
        $region50: #{attention_block_3d.2} parent=23 // pred_region
          %p351 = scmp.lt.s32.totalorder %s21, 1
          %s352 = scalar_select %p351, %s21, 1
          %s353 = smul.addr %s352, 8
          %s354 = smul.addr %s353, 8
          %s355 = scalar_lea.vmem %s1, %s354
        $region51: #{attention_block_3d.2} parent=23 // pred_fallthru
          _
        // Predicated region
        $region52: #{attention_block_3d.2} parent=23 // pred_check
          %p356 = pneg %p100
        $region53: #{attention_block_3d.2} parent=23 // pred_check_branch
          %358 = sbr.rel (%p356) target = $region55
        $region54: #{attention_block_3d.2} parent=23 // pred_region
          %p359 = scmp.lt.s32.totalorder %s21, 1
          %s360 = scalar_select %p359, %s21, 1
          %s361 = smul.addr %s360, 8
          %s362 = smul.addr %s361, 8
          %s363 = scalar_lea.vmem %s2, %s362
        $region55: #{attention_block_3d.2} parent=23 // pred_fallthru
          _
      $region24: #{attention_block_3d.2} parent=5 // pred_fallthru
        _
      %p364 = scmp.le.s32.totalorder 1, %s14
      %p365 = scmp.lt.s32.totalorder %s14, 5
      %p366 = pnand %p364, %p365
      %p367 = pneg %p366
      // Predicated region
      $region56: #{attention_block_3d.2} parent=5 // pred_check
        _
      $region57: #{attention_block_3d.2} parent=5 // pred_check_branch
        %369 = sbr.rel (%p366) target = $region59
      $region58: #{attention_block_3d.2} parent=5 // pred_region
        %s370 = ssub.s32 %s14, 1
        %s371 = sand.u32 %s41, 1
        %s372 = sand.u32 %s41, 1
        %s373 = smul.addr %s372, 256
        %s374 = scalar_lea.vmem [#allocation2], %s373
        // Predicated region
        $region60: #{attention_block_3d.2} parent=58 // pred_check
          %p375 = pneg %p54
        $region61: #{attention_block_3d.2} parent=58 // pred_check_branch
          %377 = sbr.rel (%p375) target = $region63
        $region62: #{attention_block_3d.2} parent=58 // pred_region
          _
        $region63: #{attention_block_3d.2} parent=58 // pred_fallthru
          _
        %s378 = sand.u32 %s41, 1
        %s379 = sand.u32 %s41, 1
        %s380 = smul.addr %s379, 256
        %s381 = scalar_lea.vmem [#allocation2], %s380
        %p382 = pneg %p54
        %p383 = pneg %p51
        %p384 = scmp.lt.s32.totalorder %s23, 1
        %s385 = scalar_select %p384, %s23, 1
        %s386 = smul.addr %s385, 8
        %s387 = smul.addr %s386, 8
        %s388 = scalar_lea.vmem %s1, %s387
        %p389 = pneg %p80
        %p390 = pneg %p77
        %p391 = scmp.lt.s32.totalorder %s23, 1
        %s392 = scalar_select %p391, %s23, 1
        %s393 = smul.addr %s392, 8
        %s394 = smul.addr %s393, 8
        %s395 = scalar_lea.vmem %s2, %s394
        %p396 = pneg %p106
        %p397 = pneg %p103
        %p398 = pneg %p127
        %p399 = pneg %p124
        %p400 = pneg %p148
        %p401 = pneg %p145
        %p402 = pneg %p176
        %p403 = pneg %p173
        %s404 = sand.u32 %s163, 1
        %s405 = sand.u32 %s163, 1
        %s406 = smul.addr %s405, 128
        %s407 = scalar_lea.vmem [#allocation3], %s406
        %p408 = pneg %p204
        %p409 = pneg %p201
        %s410 = sand.u32 %s191, 1
        %s411 = sand.u32 %s191, 1
        %s412 = smul.addr %s411, 128
        %s413 = scalar_lea.vmem [#allocation4], %s412
        %p414 = pneg %p232
        %p415 = pneg %p229
        %s416 = sand.u32 %s219, 1
        %s417 = sand.u32 %s219, 1
        %s418 = smul.addr %s417, 128
        %s419 = scalar_lea.vmem [#allocation5], %s418
        %s420 = smul.u32 4, %s24
        %p421 = scmp.lt.s32.totalorder %s23, 1
        %s422 = scalar_select %p421, %s23, 1
        %s423 = smul.addr %s422, 8
        %s424 = smul.addr %s423, 8
        %s425 = scalar_lea.vmem %s1, %s424
        %p426 = scmp.lt.s32.totalorder %s23, 1
        %s427 = scalar_select %p426, %s23, 1
        %s428 = smul.addr %s427, 8
        %s429 = smul.addr %s428, 8
        %s430 = scalar_lea.vmem %s2, %s429
        %s431 = smul.u32 4, %s24
        %s432 = smul.u32 4, %s24
        %s433 = smul.u32 4, %s24
        %v435 = vld [vmem:[%s374] sm:$0xff]
        %v436 = vld [vmem:[%s374 + $0x8] sm:$0xff]
        %v437 = vld [vmem:[%s374 + $0x10] sm:$0xff]
        %v438 = vld [vmem:[%s374 + $0x18] sm:$0xff]
        %v439 = vld [vmem:[%s374 + $0x20] sm:$0xff]
        %v440 = vld [vmem:[%s374 + $0x28] sm:$0xff]
        %v441 = vld [vmem:[%s374 + $0x30] sm:$0xff]
        %v442 = vld [vmem:[%s374 + $0x38] sm:$0xff]
        %v443 = vld [vmem:[%s374 + $0x40] sm:$0xff]
        %v444 = vld [vmem:[%s374 + $0x48] sm:$0xff]
        %v445 = vld [vmem:[%s374 + $0x50] sm:$0xff]
        %v446 = vld [vmem:[%s374 + $0x58] sm:$0xff]
        %v447 = vld [vmem:[%s374 + $0x60] sm:$0xff]
        %v448 = vld [vmem:[%s374 + $0x68] sm:$0xff]
        %v449 = vld [vmem:[%s374 + $0x70] sm:$0xff]
        %v450 = vld [vmem:[%s374 + $0x78] sm:$0xff]
        %v451 = vld [vmem:[%s374 + $0x80] sm:$0xff]
        %v452 = vld [vmem:[%s374 + $0x88] sm:$0xff]
        %v453 = vld [vmem:[%s374 + $0x90] sm:$0xff]
        %v454 = vld [vmem:[%s374 + $0x98] sm:$0xff]
        %v455 = vld [vmem:[%s374 + $0xa0] sm:$0xff]
        %v456 = vld [vmem:[%s374 + $0xa8] sm:$0xff]
        %v457 = vld [vmem:[%s374 + $0xb0] sm:$0xff]
        %v458 = vld [vmem:[%s374 + $0xb8] sm:$0xff]
        %v459 = vld [vmem:[%s374 + $0xc0] sm:$0xff]
        %v460 = vld [vmem:[%s374 + $0xc8] sm:$0xff]
        %v461 = vld [vmem:[%s374 + $0xd0] sm:$0xff]
        %v462 = vld [vmem:[%s374 + $0xd8] sm:$0xff]
        %v463 = vld [vmem:[%s374 + $0xe0] sm:$0xff]
        %v464 = vld [vmem:[%s374 + $0xe8] sm:$0xff]
        %v465 = vld [vmem:[%s374 + $0xf0] sm:$0xff]
        %v466 = vld [vmem:[%s374 + $0xf8] sm:$0xff]
        %v467 = vld [vmem:[%s425] sm:$0xff]
        %v468 = vld [vmem:[%s425 + $0x8] sm:$0xff]
        %v469 = vld [vmem:[%s425 + $0x10] sm:$0xff]
        %v470 = vld [vmem:[%s425 + $0x18] sm:$0xff]
        %v471 = vld [vmem:[%s425 + $0x20] sm:$0xff]
        %v472 = vld [vmem:[%s425 + $0x28] sm:$0xff]
        %v473 = vld [vmem:[%s425 + $0x30] sm:$0xff]
        %v474 = vld [vmem:[%s425 + $0x38] sm:$0xff]
        %476 = vset.pattern.permute.xlu0 0
        %477 = vperm.xlu0 %476, %v467
        %v478 = vpop.permute.xlu0 %477
        %481 = vset.pattern.permute.xlu0 0
        %482 = vperm.xlu0 %481, %v468
        %v483 = vpop.permute.xlu0 %482
        %486 = vset.pattern.permute.xlu0 0
        %487 = vperm.xlu0 %486, %v469
        %v488 = vpop.permute.xlu0 %487
        %491 = vset.pattern.permute.xlu0 0
        %492 = vperm.xlu0 %491, %v470
        %v493 = vpop.permute.xlu0 %492
        %496 = vset.pattern.permute.xlu0 0
        %497 = vperm.xlu0 %496, %v471
        %v498 = vpop.permute.xlu0 %497
        %501 = vset.pattern.permute.xlu0 0
        %502 = vperm.xlu0 %501, %v472
        %v503 = vpop.permute.xlu0 %502
        %506 = vset.pattern.permute.xlu0 0
        %507 = vperm.xlu0 %506, %v473
        %v508 = vpop.permute.xlu0 %507
        %511 = vset.pattern.permute.xlu0 0
        %512 = vperm.xlu0 %511, %v474
        %v513 = vpop.permute.xlu0 %512
        %v515 = vsub.f32 %v435, %v478
        %v516 = vsub.f32 %v436, %v478
        %v517 = vsub.f32 %v437, %v478
        %v518 = vsub.f32 %v438, %v478
        %v519 = vsub.f32 %v439, %v483
        %v520 = vsub.f32 %v440, %v483
        %v521 = vsub.f32 %v441, %v483
        %v522 = vsub.f32 %v442, %v483
        %v523 = vsub.f32 %v443, %v488
        %v524 = vsub.f32 %v444, %v488
        %v525 = vsub.f32 %v445, %v488
        %v526 = vsub.f32 %v446, %v488
        %v527 = vsub.f32 %v447, %v493
        %v528 = vsub.f32 %v448, %v493
        %v529 = vsub.f32 %v449, %v493
        %v530 = vsub.f32 %v450, %v493
        %v531 = vsub.f32 %v451, %v498
        %v532 = vsub.f32 %v452, %v498
        %v533 = vsub.f32 %v453, %v498
        %v534 = vsub.f32 %v454, %v498
        %v535 = vsub.f32 %v455, %v503
        %v536 = vsub.f32 %v456, %v503
        %v537 = vsub.f32 %v457, %v503
        %v538 = vsub.f32 %v458, %v503
        %v539 = vsub.f32 %v459, %v508
        %v540 = vsub.f32 %v460, %v508
        %v541 = vsub.f32 %v461, %v508
        %v542 = vsub.f32 %v462, %v508
        %v543 = vsub.f32 %v463, %v513
        %v544 = vsub.f32 %v464, %v513
        %v545 = vsub.f32 %v465, %v513
        %v546 = vsub.f32 %v466, %v513
        %v547 = vld [vmem:[%s430] sm:$0xff]
        %v548 = vld [vmem:[%s430 + $0x8] sm:$0xff]
        %v549 = vld [vmem:[%s430 + $0x10] sm:$0xff]
        %v550 = vld [vmem:[%s430 + $0x18] sm:$0xff]
        %v551 = vld [vmem:[%s430 + $0x20] sm:$0xff]
        %v552 = vld [vmem:[%s430 + $0x28] sm:$0xff]
        %v553 = vld [vmem:[%s430 + $0x30] sm:$0xff]
        %v554 = vld [vmem:[%s430 + $0x38] sm:$0xff]
        %556 = vset.pattern.permute.xlu0 0
        %557 = vperm.xlu0 %556, %v547
        %v558 = vpop.permute.xlu0 %557
        %561 = vset.pattern.permute.xlu0 0
        %562 = vperm.xlu0 %561, %v548
        %v563 = vpop.permute.xlu0 %562
        %566 = vset.pattern.permute.xlu0 0
        %567 = vperm.xlu0 %566, %v549
        %v568 = vpop.permute.xlu0 %567
        %571 = vset.pattern.permute.xlu0 0
        %572 = vperm.xlu0 %571, %v550
        %v573 = vpop.permute.xlu0 %572
        %576 = vset.pattern.permute.xlu0 0
        %577 = vperm.xlu0 %576, %v551
        %v578 = vpop.permute.xlu0 %577
        %581 = vset.pattern.permute.xlu0 0
        %582 = vperm.xlu0 %581, %v552
        %v583 = vpop.permute.xlu0 %582
        %586 = vset.pattern.permute.xlu0 0
        %587 = vperm.xlu0 %586, %v553
        %v588 = vpop.permute.xlu0 %587
        %591 = vset.pattern.permute.xlu0 0
        %592 = vperm.xlu0 %591, %v554
        %v593 = vpop.permute.xlu0 %592
        %v595 = vmul.f32 %v515, %v558
        %v596 = vmul.f32 %v516, %v558
        %v597 = vmul.f32 %v517, %v558
        %v598 = vmul.f32 %v518, %v558
        %v599 = vmul.f32 %v519, %v563
        %v600 = vmul.f32 %v520, %v563
        %v601 = vmul.f32 %v521, %v563
        %v602 = vmul.f32 %v522, %v563
        %v603 = vmul.f32 %v523, %v568
        %v604 = vmul.f32 %v524, %v568
        %v605 = vmul.f32 %v525, %v568
        %v606 = vmul.f32 %v526, %v568
        %v607 = vmul.f32 %v527, %v573
        %v608 = vmul.f32 %v528, %v573
        %v609 = vmul.f32 %v529, %v573
        %v610 = vmul.f32 %v530, %v573
        %v611 = vmul.f32 %v531, %v578
        %v612 = vmul.f32 %v532, %v578
        %v613 = vmul.f32 %v533, %v578
        %v614 = vmul.f32 %v534, %v578
        %v615 = vmul.f32 %v535, %v583
        %v616 = vmul.f32 %v536, %v583
        %v617 = vmul.f32 %v537, %v583
        %v618 = vmul.f32 %v538, %v583
        %v619 = vmul.f32 %v539, %v588
        %v620 = vmul.f32 %v540, %v588
        %v621 = vmul.f32 %v541, %v588
        %v622 = vmul.f32 %v542, %v588
        %v623 = vmul.f32 %v543, %v593
        %v624 = vmul.f32 %v544, %v593
        %v625 = vmul.f32 %v545, %v593
        %v626 = vmul.f32 %v546, %v593
        %v627 = vpack.c.bf16 %v599, %v595
        %v628 = vpack.c.bf16 %v600, %v596
        %v629 = vpack.c.bf16 %v601, %v597
        %v630 = vpack.c.bf16 %v602, %v598
        %v631 = vpack.c.bf16 %v607, %v603
        %v632 = vpack.c.bf16 %v608, %v604
        %v633 = vpack.c.bf16 %v609, %v605
        %v634 = vpack.c.bf16 %v610, %v606
        %v635 = vpack.c.bf16 %v615, %v611
        %v636 = vpack.c.bf16 %v616, %v612
        %v637 = vpack.c.bf16 %v617, %v613
        %v638 = vpack.c.bf16 %v618, %v614
        %v639 = vpack.c.bf16 %v623, %v619
        %v640 = vpack.c.bf16 %v624, %v620
        %v641 = vpack.c.bf16 %v625, %v621
        %v642 = vpack.c.bf16 %v626, %v622
        %v643 = vld [vmem:[%s3] sm:$0xf]
        %v644 = vld [vmem:[%s3 + $0x4] sm:$0xf]
        %v645 = vld [vmem:[%s3 + $0x8] sm:$0xf]
        %v646 = vld [vmem:[%s3 + $0xc] sm:$0xf]
        %v647 = vld [vmem:[%s3 + $0x10] sm:$0xf]
        %v648 = vld [vmem:[%s3 + $0x14] sm:$0xf]
        %v649 = vld [vmem:[%s3 + $0x18] sm:$0xf]
        %v650 = vld [vmem:[%s3 + $0x1c] sm:$0xf]
        %v651 = vld [vmem:[%s3 + $0x20] sm:$0xf]
        %v652 = vld [vmem:[%s3 + $0x24] sm:$0xf]
        %v653 = vld [vmem:[%s3 + $0x28] sm:$0xf]
        %v654 = vld [vmem:[%s3 + $0x2c] sm:$0xf]
        %v655 = vld [vmem:[%s3 + $0x30] sm:$0xf]
        %v656 = vld [vmem:[%s3 + $0x34] sm:$0xf]
        %v657 = vld [vmem:[%s3 + $0x38] sm:$0xf]
        %v658 = vld [vmem:[%s3 + $0x3c] sm:$0xf]
        %v659 = vld [vmem:[%s3 + $0x40] sm:$0xf]
        %v660 = vld [vmem:[%s3 + $0x44] sm:$0xf]
        %v661 = vld [vmem:[%s3 + $0x48] sm:$0xf]
        %v662 = vld [vmem:[%s3 + $0x4c] sm:$0xf]
        %v663 = vld [vmem:[%s3 + $0x50] sm:$0xf]
        %v664 = vld [vmem:[%s3 + $0x54] sm:$0xf]
        %v665 = vld [vmem:[%s3 + $0x58] sm:$0xf]
        %v666 = vld [vmem:[%s3 + $0x5c] sm:$0xf]
        %v667 = vld [vmem:[%s4] sm:$0xff]
        %v668 = vld [vmem:[%s4 + $0x8] sm:$0xff]
        %v669 = vld [vmem:[%s4 + $0x10] sm:$0xff]
        %v670 = vld [vmem:[%s4 + $0x18] sm:$0xff]
        %v671 = vld [vmem:[%s4 + $0x20] sm:$0xff]
        %v672 = vld [vmem:[%s4 + $0x28] sm:$0xff]
        %v673 = vld [vmem:[%s4 + $0x30] sm:$0xff]
        %v674 = vld [vmem:[%s4 + $0x38] sm:$0xff]
        %v675 = vld [vmem:[%s4 + $0x40] sm:$0xff]
        %v676 = vld [vmem:[%s4 + $0x48] sm:$0xff]
        %v677 = vld [vmem:[%s4 + $0x50] sm:$0xff]
        %v678 = vld [vmem:[%s4 + $0x58] sm:$0xff]
        %v679 = vld [vmem:[%s4 + $0x60] sm:$0xff]
        %v680 = vld [vmem:[%s4 + $0x68] sm:$0xff]
        %v681 = vld [vmem:[%s4 + $0x70] sm:$0xff]
        %v682 = vld [vmem:[%s4 + $0x78] sm:$0xff]
        %v683 = vld [vmem:[%s4 + $0x80] sm:$0xff]
        %v684 = vld [vmem:[%s4 + $0x88] sm:$0xff]
        %v685 = vld [vmem:[%s4 + $0x90] sm:$0xff]
        %v686 = vld [vmem:[%s4 + $0x98] sm:$0xff]
        %v687 = vld [vmem:[%s4 + $0xa0] sm:$0xff]
        %v688 = vld [vmem:[%s4 + $0xa8] sm:$0xff]
        %v689 = vld [vmem:[%s4 + $0xb0] sm:$0xff]
        %v690 = vld [vmem:[%s4 + $0xb8] sm:$0xff]
        %692 = vset.pattern.permute.xlu0 0
        %693 = vperm.xlu0 %692, %v667
        %v694 = vpop.permute.xlu0 %693
        %697 = vset.pattern.permute.xlu0 0
        %698 = vperm.xlu0 %697, %v668
        %v699 = vpop.permute.xlu0 %698
        %702 = vset.pattern.permute.xlu0 0
        %703 = vperm.xlu0 %702, %v669
        %v704 = vpop.permute.xlu0 %703
        %707 = vset.pattern.permute.xlu0 0
        %708 = vperm.xlu0 %707, %v670
        %v709 = vpop.permute.xlu0 %708
        %712 = vset.pattern.permute.xlu0 0
        %713 = vperm.xlu0 %712, %v671
        %v714 = vpop.permute.xlu0 %713
        %717 = vset.pattern.permute.xlu0 0
        %718 = vperm.xlu0 %717, %v672
        %v719 = vpop.permute.xlu0 %718
        %722 = vset.pattern.permute.xlu0 0
        %723 = vperm.xlu0 %722, %v673
        %v724 = vpop.permute.xlu0 %723
        %727 = vset.pattern.permute.xlu0 0
        %728 = vperm.xlu0 %727, %v674
        %v729 = vpop.permute.xlu0 %728
        %732 = vset.pattern.permute.xlu0 0
        %733 = vperm.xlu0 %732, %v675
        %v734 = vpop.permute.xlu0 %733
        %737 = vset.pattern.permute.xlu0 0
        %738 = vperm.xlu0 %737, %v676
        %v739 = vpop.permute.xlu0 %738
        %742 = vset.pattern.permute.xlu0 0
        %743 = vperm.xlu0 %742, %v677
        %v744 = vpop.permute.xlu0 %743
        %747 = vset.pattern.permute.xlu0 0
        %748 = vperm.xlu0 %747, %v678
        %v749 = vpop.permute.xlu0 %748
        %752 = vset.pattern.permute.xlu0 0
        %753 = vperm.xlu0 %752, %v679
        %v754 = vpop.permute.xlu0 %753
        %757 = vset.pattern.permute.xlu0 0
        %758 = vperm.xlu0 %757, %v680
        %v759 = vpop.permute.xlu0 %758
        %762 = vset.pattern.permute.xlu0 0
        %763 = vperm.xlu0 %762, %v681
        %v764 = vpop.permute.xlu0 %763
        %767 = vset.pattern.permute.xlu0 0
        %768 = vperm.xlu0 %767, %v682
        %v769 = vpop.permute.xlu0 %768
        %772 = vset.pattern.permute.xlu0 0
        %773 = vperm.xlu0 %772, %v683
        %v774 = vpop.permute.xlu0 %773
        %777 = vset.pattern.permute.xlu0 0
        %778 = vperm.xlu0 %777, %v684
        %v779 = vpop.permute.xlu0 %778
        %782 = vset.pattern.permute.xlu0 0
        %783 = vperm.xlu0 %782, %v685
        %v784 = vpop.permute.xlu0 %783
        %787 = vset.pattern.permute.xlu0 0
        %788 = vperm.xlu0 %787, %v686
        %v789 = vpop.permute.xlu0 %788
        %792 = vset.pattern.permute.xlu0 0
        %793 = vperm.xlu0 %792, %v687
        %v794 = vpop.permute.xlu0 %793
        %797 = vset.pattern.permute.xlu0 0
        %798 = vperm.xlu0 %797, %v688
        %v799 = vpop.permute.xlu0 %798
        %802 = vset.pattern.permute.xlu0 0
        %803 = vperm.xlu0 %802, %v689
        %v804 = vpop.permute.xlu0 %803
        %807 = vset.pattern.permute.xlu0 0
        %808 = vperm.xlu0 %807, %v690
        %v809 = vpop.permute.xlu0 %808
        %v835 = vunpack.c.l.b16 %v643
        %v836 = vunpack.c.l.b16 %v644
        %v837 = vunpack.c.l.b16 %v645
        %v838 = vunpack.c.l.b16 %v646
        %v839 = vunpack.c.l.b16 %v647
        %v840 = vunpack.c.l.b16 %v648
        %v841 = vunpack.c.l.b16 %v649
        %v842 = vunpack.c.l.b16 %v650
        %v843 = vunpack.c.l.b16 %v651
        %v844 = vunpack.c.l.b16 %v652
        %v845 = vunpack.c.l.b16 %v653
        %v846 = vunpack.c.l.b16 %v654
        %v847 = vunpack.c.l.b16 %v655
        %v848 = vunpack.c.l.b16 %v656
        %v849 = vunpack.c.l.b16 %v657
        %v850 = vunpack.c.l.b16 %v658
        %v851 = vunpack.c.l.b16 %v659
        %v852 = vunpack.c.l.b16 %v660
        %v853 = vunpack.c.l.b16 %v661
        %v854 = vunpack.c.l.b16 %v662
        %v855 = vunpack.c.l.b16 %v663
        %v856 = vunpack.c.l.b16 %v664
        %v857 = vunpack.c.l.b16 %v665
        %v858 = vunpack.c.l.b16 %v666
        %v859 = vpack.c.b16 %v836, %v835
        %v860 = vpack.c.b16 %v838, %v837
        %v861 = vpack.c.b16 %v840, %v839
        %v862 = vpack.c.b16 %v842, %v841
        %v863 = vpack.c.b16 %v844, %v843
        %v864 = vpack.c.b16 %v846, %v845
        %v865 = vpack.c.b16 %v848, %v847
        %v866 = vpack.c.b16 %v850, %v849
        %v867 = vpack.c.b16 %v852, %v851
        %v868 = vpack.c.b16 %v854, %v853
        %v869 = vpack.c.b16 %v856, %v855
        %v870 = vpack.c.b16 %v858, %v857
        %vm871 = vcmask 523264
        %v873 = vsel %vm871, %v859, 0
        %v876 = vsel %vm871, %v860, 0
        %v879 = vsel %vm871, %v861, 0
        %v882 = vsel %vm871, %v862, 0
        %v885 = vsel %vm871, %v863, 0
        %v888 = vsel %vm871, %v864, 0
        %v891 = vsel %vm871, %v865, 0
        %v894 = vsel %vm871, %v866, 0
        %v897 = vsel %vm871, %v867, 0
        %v900 = vsel %vm871, %v868, 0
        %v903 = vsel %vm871, %v869, 0
        %v906 = vsel %vm871, %v870, 0
        %908 = vmatprep.subr.bf16.mxu0 0
        %909 = vmatpush1.bf16.msra.mxu0 0
        %910 = vmatprep.subr.bf16.mxu0 0
        %911 = vmatpush1.bf16.msra.mxu0 0
        %912 = vmatprep.subr.bf16.mxu0 0
        %913 = vmatpush1.bf16.msra.mxu0 0
        %914 = vmatprep.subr.bf16.mxu0 0
        %915 = vmatpush1.bf16.msra.mxu0 0
        %916 = vmatprep.subr.bf16.mxu0 %v640
        %917 = vmatpush1.bf16.msra.mxu0 %v639
        %918 = vmatprep.subr.bf16.mxu0 %v636
        %919 = vmatpush1.bf16.msra.mxu0 %v635
        %920 = vmatprep.subr.bf16.mxu0 %v632
        %921 = vmatpush1.bf16.msra.mxu0 %v631
        %922 = vmatprep.subr.bf16.mxu0 %v628
        %923 = vmatpush1.bf16.msra.mxu0 %v627
        %924 = vmatprep.subr.bf16.mxu0 0
        %925 = vmatpush2.bf16.msra.mxu0 0
        %926 = vmatprep.subr.bf16.mxu0 0
        %927 = vmatpush2.bf16.msra.mxu0 0
        %928 = vmatprep.subr.bf16.mxu0 0
        %929 = vmatpush2.bf16.msra.mxu0 0
        %930 = vmatprep.subr.bf16.mxu0 0
        %931 = vmatpush2.bf16.msra.mxu0 0
        %932 = vmatprep.subr.bf16.mxu0 0
        %933 = vmatpush2.bf16.msra.mxu0 0
        %934 = vmatprep.subr.bf16.mxu0 0
        %935 = vmatpush2.bf16.msra.mxu0 0
        %936 = vmatprep.subr.bf16.mxu0 0
        %937 = vmatpush2.bf16.msra.mxu0 0
        %938 = vmatprep.subr.bf16.mxu0 0
        %939 = vmatpush2.bf16.msra.mxu0 0
        %940 = vmatprep.mubr.bf16.mxu0 0
        %941 = vmatmul.mubr.bf16.gmra.mxu0 %v873
        %v942 = vpop.f32.mrf.mxu0
        %v943 = vadd.f32 %v694, %v942
        %v944 = vpop.f32.mrf.mxu0
        %v945 = vadd.f32 %v694, %v944
        %v946 = vpop.f32.mrf.mxu0
        %v947 = vadd.f32 %v699, %v946
        %v948 = vpop.f32.mrf.mxu0
        %v949 = vadd.f32 %v699, %v948
        %950 = vmatprep.mubr.bf16.mxu0 0
        %951 = vmatmul.mubr.bf16.gmra.mxu0 %v876
        %v952 = vpop.f32.mrf.mxu0
        %v953 = vadd.f32 %v704, %v952
        %v954 = vpop.f32.mrf.mxu0
        %v955 = vadd.f32 %v704, %v954
        %v956 = vpop.f32.mrf.mxu0
        %v957 = vadd.f32 %v709, %v956
        %v958 = vpop.f32.mrf.mxu0
        %v959 = vadd.f32 %v709, %v958
        %960 = vmatprep.mubr.bf16.mxu0 0
        %961 = vmatmul.mubr.bf16.gmra.mxu0 %v879
        %v962 = vpop.f32.mrf.mxu0
        %v963 = vadd.f32 %v714, %v962
        %v964 = vpop.f32.mrf.mxu0
        %v965 = vadd.f32 %v714, %v964
        %v966 = vpop.f32.mrf.mxu0
        %v967 = vadd.f32 %v719, %v966
        %v968 = vpop.f32.mrf.mxu0
        %v969 = vadd.f32 %v719, %v968
        %970 = vmatprep.mubr.bf16.mxu0 0
        %971 = vmatmul.mubr.bf16.gmra.mxu0 %v882
        %v972 = vpop.f32.mrf.mxu0
        %v973 = vadd.f32 %v724, %v972
        %v974 = vpop.f32.mrf.mxu0
        %v975 = vadd.f32 %v724, %v974
        %v976 = vpop.f32.mrf.mxu0
        %v977 = vadd.f32 %v729, %v976
        %v978 = vpop.f32.mrf.mxu0
        %v979 = vadd.f32 %v729, %v978
        %980 = vmatprep.mubr.bf16.mxu0 0
        %981 = vmatmul.mubr.bf16.gmra.mxu0 %v885
        %v982 = vpop.f32.mrf.mxu0
        %v983 = vadd.f32 %v734, %v982
        %v984 = vpop.f32.mrf.mxu0
        %v985 = vadd.f32 %v734, %v984
        %v986 = vpop.f32.mrf.mxu0
        %v987 = vadd.f32 %v739, %v986
        %v988 = vpop.f32.mrf.mxu0
        %v989 = vadd.f32 %v739, %v988
        %990 = vmatprep.mubr.bf16.mxu0 0
        %991 = vmatmul.mubr.bf16.gmra.mxu0 %v888
        %v992 = vpop.f32.mrf.mxu0
        %v993 = vadd.f32 %v744, %v992
        %v994 = vpop.f32.mrf.mxu0
        %v995 = vadd.f32 %v744, %v994
        %v996 = vpop.f32.mrf.mxu0
        %v997 = vadd.f32 %v749, %v996
        %v998 = vpop.f32.mrf.mxu0
        %v999 = vadd.f32 %v749, %v998
        %1000 = vmatprep.mubr.bf16.mxu0 0
        %1001 = vmatmul.mubr.bf16.gmra.mxu0 %v891
        %v1002 = vpop.f32.mrf.mxu0
        %v1003 = vadd.f32 %v754, %v1002
        %v1004 = vpop.f32.mrf.mxu0
        %v1005 = vadd.f32 %v754, %v1004
        %v1006 = vpop.f32.mrf.mxu0
        %v1007 = vadd.f32 %v759, %v1006
        %v1008 = vpop.f32.mrf.mxu0
        %v1009 = vadd.f32 %v759, %v1008
        %1010 = vmatprep.mubr.bf16.mxu0 0
        %1011 = vmatmul.mubr.bf16.gmra.mxu0 %v894
        %v1012 = vpop.f32.mrf.mxu0
        %v1013 = vadd.f32 %v764, %v1012
        %v1014 = vpop.f32.mrf.mxu0
        %v1015 = vadd.f32 %v764, %v1014
        %v1016 = vpop.f32.mrf.mxu0
        %v1017 = vadd.f32 %v769, %v1016
        %v1018 = vpop.f32.mrf.mxu0
        %v1019 = vadd.f32 %v769, %v1018
        %1020 = vmatprep.mubr.bf16.mxu0 0
        %1021 = vmatmul.mubr.bf16.gmra.mxu0 %v897
        %v1022 = vpop.f32.mrf.mxu0
        %v1023 = vadd.f32 %v774, %v1022
        %v1024 = vpop.f32.mrf.mxu0
        %v1025 = vadd.f32 %v774, %v1024
        %v1026 = vpop.f32.mrf.mxu0
        %v1027 = vadd.f32 %v779, %v1026
        %v1028 = vpop.f32.mrf.mxu0
        %v1029 = vadd.f32 %v779, %v1028
        %1030 = vmatprep.mubr.bf16.mxu0 0
        %1031 = vmatmul.mubr.bf16.gmra.mxu0 %v900
        %v1032 = vpop.f32.mrf.mxu0
        %v1033 = vadd.f32 %v784, %v1032
        %v1034 = vpop.f32.mrf.mxu0
        %v1035 = vadd.f32 %v784, %v1034
        %v1036 = vpop.f32.mrf.mxu0
        %v1037 = vadd.f32 %v789, %v1036
        %v1038 = vpop.f32.mrf.mxu0
        %v1039 = vadd.f32 %v789, %v1038
        %1040 = vmatprep.mubr.bf16.mxu0 0
        %1041 = vmatmul.mubr.bf16.gmra.mxu0 %v903
        %v1042 = vpop.f32.mrf.mxu0
        %v1043 = vadd.f32 %v794, %v1042
        %v1044 = vpop.f32.mrf.mxu0
        %v1045 = vadd.f32 %v794, %v1044
        %v1046 = vpop.f32.mrf.mxu0
        %v1047 = vadd.f32 %v799, %v1046
        %v1048 = vpop.f32.mrf.mxu0
        %v1049 = vadd.f32 %v799, %v1048
        %1050 = vmatprep.mubr.bf16.mxu0 0
        %1051 = vmatmul.mubr.bf16.gmra.mxu0 %v906
        %v1052 = vpop.f32.mrf.mxu0
        %v1053 = vadd.f32 %v804, %v1052
        %v1054 = vpop.f32.mrf.mxu0
        %v1055 = vadd.f32 %v804, %v1054
        %v1056 = vpop.f32.mrf.mxu0
        %v1057 = vadd.f32 %v809, %v1056
        %v1058 = vpop.f32.mrf.mxu0
        %v1059 = vadd.f32 %v809, %v1058
        %1060 = vdwg.mxu0
        %1061 = vmatprep.subr.bf16.mxu0 0
        %1062 = vmatpush1.bf16.msra.mxu0 0
        %1063 = vmatprep.subr.bf16.mxu0 0
        %1064 = vmatpush1.bf16.msra.mxu0 0
        %1065 = vmatprep.subr.bf16.mxu0 0
        %1066 = vmatpush1.bf16.msra.mxu0 0
        %1067 = vmatprep.subr.bf16.mxu0 0
        %1068 = vmatpush1.bf16.msra.mxu0 0
        %1069 = vmatprep.subr.bf16.mxu0 %v642
        %1070 = vmatpush1.bf16.msra.mxu0 %v641
        %1071 = vmatprep.subr.bf16.mxu0 %v638
        %1072 = vmatpush1.bf16.msra.mxu0 %v637
        %1073 = vmatprep.subr.bf16.mxu0 %v634
        %1074 = vmatpush1.bf16.msra.mxu0 %v633
        %1075 = vmatprep.subr.bf16.mxu0 %v630
        %1076 = vmatpush1.bf16.msra.mxu0 %v629
        %1077 = vmatprep.subr.bf16.mxu0 0
        %1078 = vmatpush2.bf16.msra.mxu0 0
        %1079 = vmatprep.subr.bf16.mxu0 0
        %1080 = vmatpush2.bf16.msra.mxu0 0
        %1081 = vmatprep.subr.bf16.mxu0 0
        %1082 = vmatpush2.bf16.msra.mxu0 0
        %1083 = vmatprep.subr.bf16.mxu0 0
        %1084 = vmatpush2.bf16.msra.mxu0 0
        %1085 = vmatprep.subr.bf16.mxu0 0
        %1086 = vmatpush2.bf16.msra.mxu0 0
        %1087 = vmatprep.subr.bf16.mxu0 0
        %1088 = vmatpush2.bf16.msra.mxu0 0
        %1089 = vmatprep.subr.bf16.mxu0 0
        %1090 = vmatpush2.bf16.msra.mxu0 0
        %1091 = vmatprep.subr.bf16.mxu0 0
        %1092 = vmatpush2.bf16.msra.mxu0 0
        %1093 = vmatprep.mubr.bf16.mxu0 0
        %1094 = vmatmul.mubr.bf16.gmra.mxu0 %v873
        %v1095 = vpop.f32.mrf.mxu0
        %v1096 = vadd.f32 %v694, %v1095
        %v1097 = vpop.f32.mrf.mxu0
        %v1098 = vadd.f32 %v694, %v1097
        %v1099 = vpop.f32.mrf.mxu0
        %v1100 = vadd.f32 %v699, %v1099
        %v1101 = vpop.f32.mrf.mxu0
        %v1102 = vadd.f32 %v699, %v1101
        %1103 = vmatprep.mubr.bf16.mxu0 0
        %1104 = vmatmul.mubr.bf16.gmra.mxu0 %v876
        %v1105 = vpop.f32.mrf.mxu0
        %v1106 = vadd.f32 %v704, %v1105
        %v1107 = vpop.f32.mrf.mxu0
        %v1108 = vadd.f32 %v704, %v1107
        %v1109 = vpop.f32.mrf.mxu0
        %v1110 = vadd.f32 %v709, %v1109
        %v1111 = vpop.f32.mrf.mxu0
        %v1112 = vadd.f32 %v709, %v1111
        %1113 = vmatprep.mubr.bf16.mxu0 0
        %1114 = vmatmul.mubr.bf16.gmra.mxu0 %v879
        %v1115 = vpop.f32.mrf.mxu0
        %v1116 = vadd.f32 %v714, %v1115
        %v1117 = vpop.f32.mrf.mxu0
        %v1118 = vadd.f32 %v714, %v1117
        %v1119 = vpop.f32.mrf.mxu0
        %v1120 = vadd.f32 %v719, %v1119
        %v1121 = vpop.f32.mrf.mxu0
        %v1122 = vadd.f32 %v719, %v1121
        %1123 = vmatprep.mubr.bf16.mxu0 0
        %1124 = vmatmul.mubr.bf16.gmra.mxu0 %v882
        %v1125 = vpop.f32.mrf.mxu0
        %v1126 = vadd.f32 %v724, %v1125
        %v1127 = vpop.f32.mrf.mxu0
        %v1128 = vadd.f32 %v724, %v1127
        %v1129 = vpop.f32.mrf.mxu0
        %v1130 = vadd.f32 %v729, %v1129
        %v1131 = vpop.f32.mrf.mxu0
        %v1132 = vadd.f32 %v729, %v1131
        %1133 = vmatprep.mubr.bf16.mxu0 0
        %1134 = vmatmul.mubr.bf16.gmra.mxu0 %v885
        %v1135 = vpop.f32.mrf.mxu0
        %v1136 = vadd.f32 %v734, %v1135
        %v1137 = vpop.f32.mrf.mxu0
        %v1138 = vadd.f32 %v734, %v1137
        %v1139 = vpop.f32.mrf.mxu0
        %v1140 = vadd.f32 %v739, %v1139
        %v1141 = vpop.f32.mrf.mxu0
        %v1142 = vadd.f32 %v739, %v1141
        %1143 = vmatprep.mubr.bf16.mxu0 0
        %1144 = vmatmul.mubr.bf16.gmra.mxu0 %v888
        %v1145 = vpop.f32.mrf.mxu0
        %v1146 = vadd.f32 %v744, %v1145
        %v1147 = vpop.f32.mrf.mxu0
        %v1148 = vadd.f32 %v744, %v1147
        %v1149 = vpop.f32.mrf.mxu0
        %v1150 = vadd.f32 %v749, %v1149
        %v1151 = vpop.f32.mrf.mxu0
        %v1152 = vadd.f32 %v749, %v1151
        %1153 = vmatprep.mubr.bf16.mxu0 0
        %1154 = vmatmul.mubr.bf16.gmra.mxu0 %v891
        %v1155 = vpop.f32.mrf.mxu0
        %v1156 = vadd.f32 %v754, %v1155
        %v1157 = vpop.f32.mrf.mxu0
        %v1158 = vadd.f32 %v754, %v1157
        %v1159 = vpop.f32.mrf.mxu0
        %v1160 = vadd.f32 %v759, %v1159
        %v1161 = vpop.f32.mrf.mxu0
        %v1162 = vadd.f32 %v759, %v1161
        %1163 = vmatprep.mubr.bf16.mxu0 0
        %1164 = vmatmul.mubr.bf16.gmra.mxu0 %v894
        %v1165 = vpop.f32.mrf.mxu0
        %v1166 = vadd.f32 %v764, %v1165
        %v1167 = vpop.f32.mrf.mxu0
        %v1168 = vadd.f32 %v764, %v1167
        %v1169 = vpop.f32.mrf.mxu0
        %v1170 = vadd.f32 %v769, %v1169
        %v1171 = vpop.f32.mrf.mxu0
        %v1172 = vadd.f32 %v769, %v1171
        %1173 = vmatprep.mubr.bf16.mxu0 0
        %1174 = vmatmul.mubr.bf16.gmra.mxu0 %v897
        %v1175 = vpop.f32.mrf.mxu0
        %v1176 = vadd.f32 %v774, %v1175
        %v1177 = vpop.f32.mrf.mxu0
        %v1178 = vadd.f32 %v774, %v1177
        %v1179 = vpop.f32.mrf.mxu0
        %v1180 = vadd.f32 %v779, %v1179
        %v1181 = vpop.f32.mrf.mxu0
        %v1182 = vadd.f32 %v779, %v1181
        %1183 = vmatprep.mubr.bf16.mxu0 0
        %1184 = vmatmul.mubr.bf16.gmra.mxu0 %v900
        %v1185 = vpop.f32.mrf.mxu0
        %v1186 = vadd.f32 %v784, %v1185
        %v1187 = vpop.f32.mrf.mxu0
        %v1188 = vadd.f32 %v784, %v1187
        %v1189 = vpop.f32.mrf.mxu0
        %v1190 = vadd.f32 %v789, %v1189
        %v1191 = vpop.f32.mrf.mxu0
        %v1192 = vadd.f32 %v789, %v1191
        %1193 = vmatprep.mubr.bf16.mxu0 0
        %1194 = vmatmul.mubr.bf16.gmra.mxu0 %v903
        %v1195 = vpop.f32.mrf.mxu0
        %v1196 = vadd.f32 %v794, %v1195
        %v1197 = vpop.f32.mrf.mxu0
        %v1198 = vadd.f32 %v794, %v1197
        %v1199 = vpop.f32.mrf.mxu0
        %v1200 = vadd.f32 %v799, %v1199
        %v1201 = vpop.f32.mrf.mxu0
        %v1202 = vadd.f32 %v799, %v1201
        %1203 = vmatprep.mubr.bf16.mxu0 0
        %1204 = vmatmul.mubr.bf16.gmra.mxu0 %v906
        %v1205 = vpop.f32.mrf.mxu0
        %v1206 = vadd.f32 %v804, %v1205
        %v1207 = vpop.f32.mrf.mxu0
        %v1208 = vadd.f32 %v804, %v1207
        %v1209 = vpop.f32.mrf.mxu0
        %v1210 = vadd.f32 %v809, %v1209
        %v1211 = vpop.f32.mrf.mxu0
        %v1212 = vadd.f32 %v809, %v1211
        %1213 = vdwg.mxu0
        %v1214 = vpack.c.bf16 %v947, %v943
        %v1215 = vpack.c.bf16 %v949, %v945
        %v1216 = vpack.c.bf16 %v1100, %v1096
        %v1217 = vpack.c.bf16 %v1102, %v1098
        %v1218 = vpack.c.bf16 %v957, %v953
        %v1219 = vpack.c.bf16 %v959, %v955
        %v1220 = vpack.c.bf16 %v1110, %v1106
        %v1221 = vpack.c.bf16 %v1112, %v1108
        %v1222 = vpack.c.bf16 %v967, %v963
        %v1223 = vpack.c.bf16 %v969, %v965
        %v1224 = vpack.c.bf16 %v1120, %v1116
        %v1225 = vpack.c.bf16 %v1122, %v1118
        %v1226 = vpack.c.bf16 %v977, %v973
        %v1227 = vpack.c.bf16 %v979, %v975
        %v1228 = vpack.c.bf16 %v1130, %v1126
        %v1229 = vpack.c.bf16 %v1132, %v1128
        %v1230 = vpack.c.bf16 %v987, %v983
        %v1231 = vpack.c.bf16 %v989, %v985
        %v1232 = vpack.c.bf16 %v1140, %v1136
        %v1233 = vpack.c.bf16 %v1142, %v1138
        %v1234 = vpack.c.bf16 %v997, %v993
        %v1235 = vpack.c.bf16 %v999, %v995
        %v1236 = vpack.c.bf16 %v1150, %v1146
        %v1237 = vpack.c.bf16 %v1152, %v1148
        %v1238 = vpack.c.bf16 %v1007, %v1003
        %v1239 = vpack.c.bf16 %v1009, %v1005
        %v1240 = vpack.c.bf16 %v1160, %v1156
        %v1241 = vpack.c.bf16 %v1162, %v1158
        %v1242 = vpack.c.bf16 %v1017, %v1013
        %v1243 = vpack.c.bf16 %v1019, %v1015
        %v1244 = vpack.c.bf16 %v1170, %v1166
        %v1245 = vpack.c.bf16 %v1172, %v1168
        %v1246 = vpack.c.bf16 %v1027, %v1023
        %v1247 = vpack.c.bf16 %v1029, %v1025
        %v1248 = vpack.c.bf16 %v1180, %v1176
        %v1249 = vpack.c.bf16 %v1182, %v1178
        %v1250 = vpack.c.bf16 %v1037, %v1033
        %v1251 = vpack.c.bf16 %v1039, %v1035
        %v1252 = vpack.c.bf16 %v1190, %v1186
        %v1253 = vpack.c.bf16 %v1192, %v1188
        %v1254 = vpack.c.bf16 %v1047, %v1043
        %v1255 = vpack.c.bf16 %v1049, %v1045
        %v1256 = vpack.c.bf16 %v1200, %v1196
        %v1257 = vpack.c.bf16 %v1202, %v1198
        %v1258 = vpack.c.bf16 %v1057, %v1053
        %v1259 = vpack.c.bf16 %v1059, %v1055
        %v1260 = vpack.c.bf16 %v1210, %v1206
        %v1261 = vpack.c.bf16 %v1212, %v1208
        %v1278 = vunpack.c.l.b16 %v1214
        %v1279 = vunpack.c.l.b16 %v1215
        %v1280 = vunpack.c.l.b16 %v1216
        %v1281 = vunpack.c.l.b16 %v1217
        %v1282 = vunpack.c.h.b16 %v1214
        %v1283 = vunpack.c.h.b16 %v1215
        %v1284 = vunpack.c.h.b16 %v1216
        %v1285 = vunpack.c.h.b16 %v1217
        %v1286 = vunpack.c.l.b16 %v1218
        %v1287 = vunpack.c.l.b16 %v1219
        %v1288 = vunpack.c.l.b16 %v1220
        %v1289 = vunpack.c.l.b16 %v1221
        %v1290 = vunpack.c.h.b16 %v1218
        %v1291 = vunpack.c.h.b16 %v1219
        %v1292 = vunpack.c.h.b16 %v1220
        %v1293 = vunpack.c.h.b16 %v1221
        %v1294 = vunpack.c.l.b16 %v1222
        %v1295 = vunpack.c.l.b16 %v1223
        %v1296 = vunpack.c.l.b16 %v1224
        %v1297 = vunpack.c.l.b16 %v1225
        %v1298 = vunpack.c.h.b16 %v1222
        %v1299 = vunpack.c.h.b16 %v1223
        %v1300 = vunpack.c.h.b16 %v1224
        %v1301 = vunpack.c.h.b16 %v1225
        %v1302 = vunpack.c.l.b16 %v1226
        %v1303 = vunpack.c.l.b16 %v1227
        %v1304 = vunpack.c.l.b16 %v1228
        %v1305 = vunpack.c.l.b16 %v1229
        %v1306 = vunpack.c.h.b16 %v1226
        %v1307 = vunpack.c.h.b16 %v1227
        %v1308 = vunpack.c.h.b16 %v1228
        %v1309 = vunpack.c.h.b16 %v1229
        %v1310 = vpack.c.b16 %v1279, %v1278
        %v1311 = vpack.c.b16 %v1281, %v1280
        %v1312 = vpack.c.b16 %v1283, %v1282
        %v1313 = vpack.c.b16 %v1285, %v1284
        %v1314 = vpack.c.b16 %v1287, %v1286
        %v1315 = vpack.c.b16 %v1289, %v1288
        %v1316 = vpack.c.b16 %v1291, %v1290
        %v1317 = vpack.c.b16 %v1293, %v1292
        %v1318 = vpack.c.b16 %v1295, %v1294
        %v1319 = vpack.c.b16 %v1297, %v1296
        %v1320 = vpack.c.b16 %v1299, %v1298
        %v1321 = vpack.c.b16 %v1301, %v1300
        %v1322 = vpack.c.b16 %v1303, %v1302
        %v1323 = vpack.c.b16 %v1305, %v1304
        %v1324 = vpack.c.b16 %v1307, %v1306
        %v1325 = vpack.c.b16 %v1309, %v1308
        %1342 = vst [vmem:[%s407] sm:$0xff] %v1310
        %1343 = vst [vmem:[%s407 + $0x8] sm:$0xff] %v1311
        %1344 = vst [vmem:[%s407 + $0x10] sm:$0xff] %v1312
        %1345 = vst [vmem:[%s407 + $0x18] sm:$0xff] %v1313
        %1346 = vst [vmem:[%s407 + $0x20] sm:$0xff] %v1314
        %1347 = vst [vmem:[%s407 + $0x28] sm:$0xff] %v1315
        %1348 = vst [vmem:[%s407 + $0x30] sm:$0xff] %v1316
        %1349 = vst [vmem:[%s407 + $0x38] sm:$0xff] %v1317
        %1350 = vst [vmem:[%s407 + $0x40] sm:$0xff] %v1318
        %1351 = vst [vmem:[%s407 + $0x48] sm:$0xff] %v1319
        %1352 = vst [vmem:[%s407 + $0x50] sm:$0xff] %v1320
        %1353 = vst [vmem:[%s407 + $0x58] sm:$0xff] %v1321
        %1354 = vst [vmem:[%s407 + $0x60] sm:$0xff] %v1322
        %1355 = vst [vmem:[%s407 + $0x68] sm:$0xff] %v1323
        %1356 = vst [vmem:[%s407 + $0x70] sm:$0xff] %v1324
        %1357 = vst [vmem:[%s407 + $0x78] sm:$0xff] %v1325
        %v1374 = vunpack.c.l.b16 %v1230
        %v1375 = vunpack.c.l.b16 %v1231
        %v1376 = vunpack.c.l.b16 %v1232
        %v1377 = vunpack.c.l.b16 %v1233
        %v1378 = vunpack.c.h.b16 %v1230
        %v1379 = vunpack.c.h.b16 %v1231
        %v1380 = vunpack.c.h.b16 %v1232
        %v1381 = vunpack.c.h.b16 %v1233
        %v1382 = vunpack.c.l.b16 %v1234
        %v1383 = vunpack.c.l.b16 %v1235
        %v1384 = vunpack.c.l.b16 %v1236
        %v1385 = vunpack.c.l.b16 %v1237
        %v1386 = vunpack.c.h.b16 %v1234
        %v1387 = vunpack.c.h.b16 %v1235
        %v1388 = vunpack.c.h.b16 %v1236
        %v1389 = vunpack.c.h.b16 %v1237
        %v1390 = vunpack.c.l.b16 %v1238
        %v1391 = vunpack.c.l.b16 %v1239
        %v1392 = vunpack.c.l.b16 %v1240
        %v1393 = vunpack.c.l.b16 %v1241
        %v1394 = vunpack.c.h.b16 %v1238
        %v1395 = vunpack.c.h.b16 %v1239
        %v1396 = vunpack.c.h.b16 %v1240
        %v1397 = vunpack.c.h.b16 %v1241
        %v1398 = vunpack.c.l.b16 %v1242
        %v1399 = vunpack.c.l.b16 %v1243
        %v1400 = vunpack.c.l.b16 %v1244
        %v1401 = vunpack.c.l.b16 %v1245
        %v1402 = vunpack.c.h.b16 %v1242
        %v1403 = vunpack.c.h.b16 %v1243
        %v1404 = vunpack.c.h.b16 %v1244
        %v1405 = vunpack.c.h.b16 %v1245
        %v1406 = vpack.c.b16 %v1375, %v1374
        %v1407 = vpack.c.b16 %v1377, %v1376
        %v1408 = vpack.c.b16 %v1379, %v1378
        %v1409 = vpack.c.b16 %v1381, %v1380
        %v1410 = vpack.c.b16 %v1383, %v1382
        %v1411 = vpack.c.b16 %v1385, %v1384
        %v1412 = vpack.c.b16 %v1387, %v1386
        %v1413 = vpack.c.b16 %v1389, %v1388
        %v1414 = vpack.c.b16 %v1391, %v1390
        %v1415 = vpack.c.b16 %v1393, %v1392
        %v1416 = vpack.c.b16 %v1395, %v1394
        %v1417 = vpack.c.b16 %v1397, %v1396
        %v1418 = vpack.c.b16 %v1399, %v1398
        %v1419 = vpack.c.b16 %v1401, %v1400
        %v1420 = vpack.c.b16 %v1403, %v1402
        %v1421 = vpack.c.b16 %v1405, %v1404
        %1438 = vst [vmem:[%s413] sm:$0xff] %v1406
        %1439 = vst [vmem:[%s413 + $0x8] sm:$0xff] %v1407
        %1440 = vst [vmem:[%s413 + $0x10] sm:$0xff] %v1408
        %1441 = vst [vmem:[%s413 + $0x18] sm:$0xff] %v1409
        %1442 = vst [vmem:[%s413 + $0x20] sm:$0xff] %v1410
        %1443 = vst [vmem:[%s413 + $0x28] sm:$0xff] %v1411
        %1444 = vst [vmem:[%s413 + $0x30] sm:$0xff] %v1412
        %1445 = vst [vmem:[%s413 + $0x38] sm:$0xff] %v1413
        %1446 = vst [vmem:[%s413 + $0x40] sm:$0xff] %v1414
        %1447 = vst [vmem:[%s413 + $0x48] sm:$0xff] %v1415
        %1448 = vst [vmem:[%s413 + $0x50] sm:$0xff] %v1416
        %1449 = vst [vmem:[%s413 + $0x58] sm:$0xff] %v1417
        %1450 = vst [vmem:[%s413 + $0x60] sm:$0xff] %v1418
        %1451 = vst [vmem:[%s413 + $0x68] sm:$0xff] %v1419
        %1452 = vst [vmem:[%s413 + $0x70] sm:$0xff] %v1420
        %1453 = vst [vmem:[%s413 + $0x78] sm:$0xff] %v1421
        %v1470 = vunpack.c.l.b16 %v1246
        %v1471 = vunpack.c.l.b16 %v1247
        %v1472 = vunpack.c.l.b16 %v1248
        %v1473 = vunpack.c.l.b16 %v1249
        %v1474 = vunpack.c.h.b16 %v1246
        %v1475 = vunpack.c.h.b16 %v1247
        %v1476 = vunpack.c.h.b16 %v1248
        %v1477 = vunpack.c.h.b16 %v1249
        %v1478 = vunpack.c.l.b16 %v1250
        %v1479 = vunpack.c.l.b16 %v1251
        %v1480 = vunpack.c.l.b16 %v1252
        %v1481 = vunpack.c.l.b16 %v1253
        %v1482 = vunpack.c.h.b16 %v1250
        %v1483 = vunpack.c.h.b16 %v1251
        %v1484 = vunpack.c.h.b16 %v1252
        %v1485 = vunpack.c.h.b16 %v1253
        %v1486 = vunpack.c.l.b16 %v1254
        %v1487 = vunpack.c.l.b16 %v1255
        %v1488 = vunpack.c.l.b16 %v1256
        %v1489 = vunpack.c.l.b16 %v1257
        %v1490 = vunpack.c.h.b16 %v1254
        %v1491 = vunpack.c.h.b16 %v1255
        %v1492 = vunpack.c.h.b16 %v1256
        %v1493 = vunpack.c.h.b16 %v1257
        %v1494 = vunpack.c.l.b16 %v1258
        %v1495 = vunpack.c.l.b16 %v1259
        %v1496 = vunpack.c.l.b16 %v1260
        %v1497 = vunpack.c.l.b16 %v1261
        %v1498 = vunpack.c.h.b16 %v1258
        %v1499 = vunpack.c.h.b16 %v1259
        %v1500 = vunpack.c.h.b16 %v1260
        %v1501 = vunpack.c.h.b16 %v1261
        %v1502 = vpack.c.b16 %v1471, %v1470
        %v1503 = vpack.c.b16 %v1473, %v1472
        %v1504 = vpack.c.b16 %v1475, %v1474
        %v1505 = vpack.c.b16 %v1477, %v1476
        %v1506 = vpack.c.b16 %v1479, %v1478
        %v1507 = vpack.c.b16 %v1481, %v1480
        %v1508 = vpack.c.b16 %v1483, %v1482
        %v1509 = vpack.c.b16 %v1485, %v1484
        %v1510 = vpack.c.b16 %v1487, %v1486
        %v1511 = vpack.c.b16 %v1489, %v1488
        %v1512 = vpack.c.b16 %v1491, %v1490
        %v1513 = vpack.c.b16 %v1493, %v1492
        %v1514 = vpack.c.b16 %v1495, %v1494
        %v1515 = vpack.c.b16 %v1497, %v1496
        %v1516 = vpack.c.b16 %v1499, %v1498
        %v1517 = vpack.c.b16 %v1501, %v1500
        %1534 = vst [vmem:[%s419] sm:$0xff] %v1502
        %1535 = vst [vmem:[%s419 + $0x8] sm:$0xff] %v1503
        %1536 = vst [vmem:[%s419 + $0x10] sm:$0xff] %v1504
        %1537 = vst [vmem:[%s419 + $0x18] sm:$0xff] %v1505
        %1538 = vst [vmem:[%s419 + $0x20] sm:$0xff] %v1506
        %1539 = vst [vmem:[%s419 + $0x28] sm:$0xff] %v1507
        %1540 = vst [vmem:[%s419 + $0x30] sm:$0xff] %v1508
        %1541 = vst [vmem:[%s419 + $0x38] sm:$0xff] %v1509
        %1542 = vst [vmem:[%s419 + $0x40] sm:$0xff] %v1510
        %1543 = vst [vmem:[%s419 + $0x48] sm:$0xff] %v1511
        %1544 = vst [vmem:[%s419 + $0x50] sm:$0xff] %v1512
        %1545 = vst [vmem:[%s419 + $0x58] sm:$0xff] %v1513
        %1546 = vst [vmem:[%s419 + $0x60] sm:$0xff] %v1514
        %1547 = vst [vmem:[%s419 + $0x68] sm:$0xff] %v1515
        %1548 = vst [vmem:[%s419 + $0x70] sm:$0xff] %v1516
        %1549 = vst [vmem:[%s419 + $0x78] sm:$0xff] %v1517
        %s1550 = sand.u32 %s163, 1
        %s1551 = sand.u32 %s163, 1
        %s1552 = smul.addr %s1551, 128
        %s1553 = scalar_lea.vmem [#allocation3], %s1552
        %s1554 = sand.u32 %s191, 1
        %s1555 = sand.u32 %s191, 1
        %s1556 = smul.addr %s1555, 128
        %s1557 = scalar_lea.vmem [#allocation4], %s1556
        %s1558 = sand.u32 %s219, 1
        %s1559 = sand.u32 %s219, 1
        %s1560 = smul.addr %s1559, 128
        %s1561 = scalar_lea.vmem [#allocation5], %s1560
        // Predicated region
        $region64: #{attention_block_3d.2} parent=58 // pred_check
          %p1562 = pneg %p173
        $region65: #{attention_block_3d.2} parent=58 // pred_check_branch
          %1564 = sbr.rel (%p1562) target = $region67
        $region66: #{attention_block_3d.2} parent=58 // pred_region
          %s1565 = smul.u32 4, %s24
          %s1566 = smul.addr %s23, 64
          %s1567 = sadd.s32 %s1565, %s1566
          %s1568 = smul.addr %s1567, 4
          %s1569 = scalar_lea.vmem %s5, %s1568
          // Predicated region
          $region68: #{attention_block_3d.2} parent=66 // pred_check
            _
          $region69: #{attention_block_3d.2} parent=66 // pred_check_branch
            %1571 = sbr.rel (0) target = $region71
          $region70: #{attention_block_3d.2} parent=66 // pred_region
            // Predicated region
            $region72: #{attention_block_3d.2} parent=70 // pred_check
              _
            $region73: #{attention_block_3d.2} parent=70 // pred_check_branch
              %1573 = sbr.rel (0) target = $region75
            $region74: #{attention_block_3d.2} parent=70 // pred_region
              loop: start=0, step=1, limit=1
              $region76: #{attention_block_3d.2} parent=74 // loop_pre_header
                _
              $region77: #{attention_block_3d.2} parent=74 // loop_header
                %s1575 = sphi 0, %s1579
                %p1576 = scmp.ge.s32.totalorder %s1575, 1
                %s1580 = sphi %s1553, %s1553
                %s1581 = sphi %s1569, %s1569
              $region78: #{attention_block_3d.2} parent=74 // loop_header_branch
                %1578 = sbr.rel (%p1576) target = $region82
              $region79: #{attention_block_3d.2} parent=74 // loop_body
                %v1582 = vld [vmem:[%s1580] sm:$0xff]
                %1583 = vst [vmem:[%s1581] sm:$0xff] %v1582
                %v1584 = vld [vmem:[%s1580 + $0x8] sm:$0xff]
                %1585 = vst [vmem:[%s1581 + $0x8] sm:$0xff] %v1584
                %v1586 = vld [vmem:[%s1580 + $0x10] sm:$0xff]
                %1587 = vst [vmem:[%s1581 + $0x20] sm:$0xff] %v1586
                %v1588 = vld [vmem:[%s1580 + $0x18] sm:$0xff]
                %1589 = vst [vmem:[%s1581 + $0x28] sm:$0xff] %v1588
                %v1590 = vld [vmem:[%s1580 + $0x20] sm:$0xff]
                %1591 = vst [vmem:[%s1581 + $0x40] sm:$0xff] %v1590
                %v1592 = vld [vmem:[%s1580 + $0x28] sm:$0xff]
                %1593 = vst [vmem:[%s1581 + $0x48] sm:$0xff] %v1592
                %v1594 = vld [vmem:[%s1580 + $0x30] sm:$0xff]
                %1595 = vst [vmem:[%s1581 + $0x60] sm:$0xff] %v1594
                %v1596 = vld [vmem:[%s1580 + $0x38] sm:$0xff]
                %1597 = vst [vmem:[%s1581 + $0x68] sm:$0xff] %v1596
                %v1598 = vld [vmem:[%s1580 + $0x40] sm:$0xff]
                %1599 = vst [vmem:[%s1581 + $0x80] sm:$0xff] %v1598
                %v1600 = vld [vmem:[%s1580 + $0x48] sm:$0xff]
                %1601 = vst [vmem:[%s1581 + $0x88] sm:$0xff] %v1600
                %v1602 = vld [vmem:[%s1580 + $0x50] sm:$0xff]
                %1603 = vst [vmem:[%s1581 + $0xa0] sm:$0xff] %v1602
                %v1604 = vld [vmem:[%s1580 + $0x58] sm:$0xff]
                %1605 = vst [vmem:[%s1581 + $0xa8] sm:$0xff] %v1604
                %v1606 = vld [vmem:[%s1580 + $0x60] sm:$0xff]
                %1607 = vst [vmem:[%s1581 + $0xc0] sm:$0xff] %v1606
                %v1608 = vld [vmem:[%s1580 + $0x68] sm:$0xff]
                %1609 = vst [vmem:[%s1581 + $0xc8] sm:$0xff] %v1608
                %v1610 = vld [vmem:[%s1580 + $0x70] sm:$0xff]
                %1611 = vst [vmem:[%s1581 + $0xe0] sm:$0xff] %v1610
                %v1612 = vld [vmem:[%s1580 + $0x78] sm:$0xff]
                %1613 = vst [vmem:[%s1581 + $0xe8] sm:$0xff] %v1612
              $region80: #{attention_block_3d.2} parent=74 // loop_footer
                %s1579 = sadd.s32 1, %s1575
              $region81: #{attention_block_3d.2} parent=74 // loop_footer_branch
                %1574 = sbr.rel target = $region77
              $region82: #{attention_block_3d.2} parent=74 // loop_exit
                _
            $region75: #{attention_block_3d.2} parent=70 // pred_fallthru
              _
            // Predicated region
            $region83: #{attention_block_3d.2} parent=70 // pred_check
              _
            $region84: #{attention_block_3d.2} parent=70 // pred_check_branch
              %1615 = sbr.rel target = $region86
            $region85: #{attention_block_3d.2} parent=70 // pred_region
              _
            $region86: #{attention_block_3d.2} parent=70 // pred_fallthru
              _
          $region71: #{attention_block_3d.2} parent=66 // pred_fallthru
            _
          %1616 = vnop
        $region67: #{attention_block_3d.2} parent=58 // pred_fallthru
          _
        // Predicated region
        $region87: #{attention_block_3d.2} parent=58 // pred_check
          %p1617 = pneg %p201
        $region88: #{attention_block_3d.2} parent=58 // pred_check_branch
          %1619 = sbr.rel (%p1617) target = $region90
        $region89: #{attention_block_3d.2} parent=58 // pred_region
          %s1620 = smul.u32 4, %s24
          %s1621 = smul.addr %s23, 64
          %s1622 = sadd.s32 %s1620, %s1621
          %s1623 = smul.addr %s1622, 4
          %s1624 = scalar_lea.vmem %s6, %s1623
          // Predicated region
          $region91: #{attention_block_3d.2} parent=89 // pred_check
            _
          $region92: #{attention_block_3d.2} parent=89 // pred_check_branch
            %1626 = sbr.rel (0) target = $region94
          $region93: #{attention_block_3d.2} parent=89 // pred_region
            // Predicated region
            $region95: #{attention_block_3d.2} parent=93 // pred_check
              _
            $region96: #{attention_block_3d.2} parent=93 // pred_check_branch
              %1628 = sbr.rel (0) target = $region98
            $region97: #{attention_block_3d.2} parent=93 // pred_region
              loop: start=0, step=1, limit=1
              $region99: #{attention_block_3d.2} parent=97 // loop_pre_header
                _
              $region100: #{attention_block_3d.2} parent=97 // loop_header
                %s1630 = sphi 0, %s1634
                %p1631 = scmp.ge.s32.totalorder %s1630, 1
                %s1635 = sphi %s1557, %s1557
                %s1636 = sphi %s1624, %s1624
              $region101: #{attention_block_3d.2} parent=97 // loop_header_branch
                %1633 = sbr.rel (%p1631) target = $region105
              $region102: #{attention_block_3d.2} parent=97 // loop_body
                %v1637 = vld [vmem:[%s1635] sm:$0xff]
                %1638 = vst [vmem:[%s1636] sm:$0xff] %v1637
                %v1639 = vld [vmem:[%s1635 + $0x8] sm:$0xff]
                %1640 = vst [vmem:[%s1636 + $0x8] sm:$0xff] %v1639
                %v1641 = vld [vmem:[%s1635 + $0x10] sm:$0xff]
                %1642 = vst [vmem:[%s1636 + $0x20] sm:$0xff] %v1641
                %v1643 = vld [vmem:[%s1635 + $0x18] sm:$0xff]
                %1644 = vst [vmem:[%s1636 + $0x28] sm:$0xff] %v1643
                %v1645 = vld [vmem:[%s1635 + $0x20] sm:$0xff]
                %1646 = vst [vmem:[%s1636 + $0x40] sm:$0xff] %v1645
                %v1647 = vld [vmem:[%s1635 + $0x28] sm:$0xff]
                %1648 = vst [vmem:[%s1636 + $0x48] sm:$0xff] %v1647
                %v1649 = vld [vmem:[%s1635 + $0x30] sm:$0xff]
                %1650 = vst [vmem:[%s1636 + $0x60] sm:$0xff] %v1649
                %v1651 = vld [vmem:[%s1635 + $0x38] sm:$0xff]
                %1652 = vst [vmem:[%s1636 + $0x68] sm:$0xff] %v1651
                %v1653 = vld [vmem:[%s1635 + $0x40] sm:$0xff]
                %1654 = vst [vmem:[%s1636 + $0x80] sm:$0xff] %v1653
                %v1655 = vld [vmem:[%s1635 + $0x48] sm:$0xff]
                %1656 = vst [vmem:[%s1636 + $0x88] sm:$0xff] %v1655
                %v1657 = vld [vmem:[%s1635 + $0x50] sm:$0xff]
                %1658 = vst [vmem:[%s1636 + $0xa0] sm:$0xff] %v1657
                %v1659 = vld [vmem:[%s1635 + $0x58] sm:$0xff]
                %1660 = vst [vmem:[%s1636 + $0xa8] sm:$0xff] %v1659
                %v1661 = vld [vmem:[%s1635 + $0x60] sm:$0xff]
                %1662 = vst [vmem:[%s1636 + $0xc0] sm:$0xff] %v1661
                %v1663 = vld [vmem:[%s1635 + $0x68] sm:$0xff]
                %1664 = vst [vmem:[%s1636 + $0xc8] sm:$0xff] %v1663
                %v1665 = vld [vmem:[%s1635 + $0x70] sm:$0xff]
                %1666 = vst [vmem:[%s1636 + $0xe0] sm:$0xff] %v1665
                %v1667 = vld [vmem:[%s1635 + $0x78] sm:$0xff]
                %1668 = vst [vmem:[%s1636 + $0xe8] sm:$0xff] %v1667
              $region103: #{attention_block_3d.2} parent=97 // loop_footer
                %s1634 = sadd.s32 1, %s1630
              $region104: #{attention_block_3d.2} parent=97 // loop_footer_branch
                %1629 = sbr.rel target = $region100
              $region105: #{attention_block_3d.2} parent=97 // loop_exit
                _
            $region98: #{attention_block_3d.2} parent=93 // pred_fallthru
              _
            // Predicated region
            $region106: #{attention_block_3d.2} parent=93 // pred_check
              _
            $region107: #{attention_block_3d.2} parent=93 // pred_check_branch
              %1670 = sbr.rel target = $region109
            $region108: #{attention_block_3d.2} parent=93 // pred_region
              _
            $region109: #{attention_block_3d.2} parent=93 // pred_fallthru
              _
          $region94: #{attention_block_3d.2} parent=89 // pred_fallthru
            _
          %1671 = vnop
        $region90: #{attention_block_3d.2} parent=58 // pred_fallthru
          _
        // Predicated region
        $region110: #{attention_block_3d.2} parent=58 // pred_check
          %p1672 = pneg %p229
        $region111: #{attention_block_3d.2} parent=58 // pred_check_branch
          %1674 = sbr.rel (%p1672) target = $region113
        $region112: #{attention_block_3d.2} parent=58 // pred_region
          %s1675 = smul.u32 4, %s24
          %s1676 = smul.addr %s23, 64
          %s1677 = sadd.s32 %s1675, %s1676
          %s1678 = smul.addr %s1677, 4
          %s1679 = scalar_lea.vmem %s7, %s1678
          // Predicated region
          $region114: #{attention_block_3d.2} parent=112 // pred_check
            _
          $region115: #{attention_block_3d.2} parent=112 // pred_check_branch
            %1681 = sbr.rel (0) target = $region117
          $region116: #{attention_block_3d.2} parent=112 // pred_region
            // Predicated region
            $region118: #{attention_block_3d.2} parent=116 // pred_check
              _
            $region119: #{attention_block_3d.2} parent=116 // pred_check_branch
              %1683 = sbr.rel (0) target = $region121
            $region120: #{attention_block_3d.2} parent=116 // pred_region
              loop: start=0, step=1, limit=1
              $region122: #{attention_block_3d.2} parent=120 // loop_pre_header
                _
              $region123: #{attention_block_3d.2} parent=120 // loop_header
                %s1685 = sphi 0, %s1689
                %p1686 = scmp.ge.s32.totalorder %s1685, 1
                %s1690 = sphi %s1561, %s1561
                %s1691 = sphi %s1679, %s1679
              $region124: #{attention_block_3d.2} parent=120 // loop_header_branch
                %1688 = sbr.rel (%p1686) target = $region128
              $region125: #{attention_block_3d.2} parent=120 // loop_body
                %v1692 = vld [vmem:[%s1690] sm:$0xff]
                %1693 = vst [vmem:[%s1691] sm:$0xff] %v1692
                %v1694 = vld [vmem:[%s1690 + $0x8] sm:$0xff]
                %1695 = vst [vmem:[%s1691 + $0x8] sm:$0xff] %v1694
                %v1696 = vld [vmem:[%s1690 + $0x10] sm:$0xff]
                %1697 = vst [vmem:[%s1691 + $0x20] sm:$0xff] %v1696
                %v1698 = vld [vmem:[%s1690 + $0x18] sm:$0xff]
                %1699 = vst [vmem:[%s1691 + $0x28] sm:$0xff] %v1698
                %v1700 = vld [vmem:[%s1690 + $0x20] sm:$0xff]
                %1701 = vst [vmem:[%s1691 + $0x40] sm:$0xff] %v1700
                %v1702 = vld [vmem:[%s1690 + $0x28] sm:$0xff]
                %1703 = vst [vmem:[%s1691 + $0x48] sm:$0xff] %v1702
                %v1704 = vld [vmem:[%s1690 + $0x30] sm:$0xff]
                %1705 = vst [vmem:[%s1691 + $0x60] sm:$0xff] %v1704
                %v1706 = vld [vmem:[%s1690 + $0x38] sm:$0xff]
                %1707 = vst [vmem:[%s1691 + $0x68] sm:$0xff] %v1706
                %v1708 = vld [vmem:[%s1690 + $0x40] sm:$0xff]
                %1709 = vst [vmem:[%s1691 + $0x80] sm:$0xff] %v1708
                %v1710 = vld [vmem:[%s1690 + $0x48] sm:$0xff]
                %1711 = vst [vmem:[%s1691 + $0x88] sm:$0xff] %v1710
                %v1712 = vld [vmem:[%s1690 + $0x50] sm:$0xff]
                %1713 = vst [vmem:[%s1691 + $0xa0] sm:$0xff] %v1712
                %v1714 = vld [vmem:[%s1690 + $0x58] sm:$0xff]
                %1715 = vst [vmem:[%s1691 + $0xa8] sm:$0xff] %v1714
                %v1716 = vld [vmem:[%s1690 + $0x60] sm:$0xff]
                %1717 = vst [vmem:[%s1691 + $0xc0] sm:$0xff] %v1716
                %v1718 = vld [vmem:[%s1690 + $0x68] sm:$0xff]
                %1719 = vst [vmem:[%s1691 + $0xc8] sm:$0xff] %v1718
                %v1720 = vld [vmem:[%s1690 + $0x70] sm:$0xff]
                %1721 = vst [vmem:[%s1691 + $0xe0] sm:$0xff] %v1720
                %v1722 = vld [vmem:[%s1690 + $0x78] sm:$0xff]
                %1723 = vst [vmem:[%s1691 + $0xe8] sm:$0xff] %v1722
              $region126: #{attention_block_3d.2} parent=120 // loop_footer
                %s1689 = sadd.s32 1, %s1685
              $region127: #{attention_block_3d.2} parent=120 // loop_footer_branch
                %1684 = sbr.rel target = $region123
              $region128: #{attention_block_3d.2} parent=120 // loop_exit
                _
            $region121: #{attention_block_3d.2} parent=116 // pred_fallthru
              _
            // Predicated region
            $region129: #{attention_block_3d.2} parent=116 // pred_check
              _
            $region130: #{attention_block_3d.2} parent=116 // pred_check_branch
              %1725 = sbr.rel target = $region132
            $region131: #{attention_block_3d.2} parent=116 // pred_region
              _
            $region132: #{attention_block_3d.2} parent=116 // pred_fallthru
              _
          $region117: #{attention_block_3d.2} parent=112 // pred_fallthru
            _
          %1726 = vnop
        $region113: #{attention_block_3d.2} parent=58 // pred_fallthru
          _
      $region59: #{attention_block_3d.2} parent=5 // pred_fallthru
        _
      %p1727 = scmp.le.s32.totalorder 2, %s14
      // Predicated region
      $region133: #{attention_block_3d.2} parent=5 // pred_check
        %p1728 = pneg %p1727
      $region134: #{attention_block_3d.2} parent=5 // pred_check_branch
        %1730 = sbr.rel (%p1728) target = $region136
      $region135: #{attention_block_3d.2} parent=5 // pred_region
        %s1731 = ssub.s32 %s14, 2
        // Predicated region
        $region137: #{attention_block_3d.2} parent=135 // pred_check
          %p1732 = pneg %p179
        $region138: #{attention_block_3d.2} parent=135 // pred_check_branch
          %1734 = sbr.rel (%p1732) target = $region140
        $region139: #{attention_block_3d.2} parent=135 // pred_region
          %s1735 = sand.u32 %s164, 1
          %s1736 = sand.u32 %s164, 1
          %s1737 = smul.addr %s1736, 128
          %s1738 = scalar_lea.vmem [#allocation3], %s1737
        $region140: #{attention_block_3d.2} parent=135 // pred_fallthru
          _
        // Predicated region
        $region141: #{attention_block_3d.2} parent=135 // pred_check
          %p1739 = pneg %p207
        $region142: #{attention_block_3d.2} parent=135 // pred_check_branch
          %1741 = sbr.rel (%p1739) target = $region144
        $region143: #{attention_block_3d.2} parent=135 // pred_region
          %s1742 = sand.u32 %s192, 1
          %s1743 = sand.u32 %s192, 1
          %s1744 = smul.addr %s1743, 128
          %s1745 = scalar_lea.vmem [#allocation4], %s1744
        $region144: #{attention_block_3d.2} parent=135 // pred_fallthru
          _
        // Predicated region
        $region145: #{attention_block_3d.2} parent=135 // pred_check
          %p1746 = pneg %p235
        $region146: #{attention_block_3d.2} parent=135 // pred_check_branch
          %1748 = sbr.rel (%p1746) target = $region148
        $region147: #{attention_block_3d.2} parent=135 // pred_region
          %s1749 = sand.u32 %s220, 1
          %s1750 = sand.u32 %s220, 1
          %s1751 = smul.addr %s1750, 128
          %s1752 = scalar_lea.vmem [#allocation5], %s1751
        $region148: #{attention_block_3d.2} parent=135 // pred_fallthru
          _
      $region136: #{attention_block_3d.2} parent=5 // pred_fallthru
        _
    $region6: #{attention_block_3d.2} parent=1 // loop_footer
      %s18 = sadd.s32 1, %s14
    $region7: #{attention_block_3d.2} parent=1 // loop_footer_branch
      %13 = sbr.rel target = $region3
    $region8: #{attention_block_3d.2} parent=1 // loop_exit
      _

// kernel: attention_block_3d.3
$region0: #{attention_block_3d.3}
  #allocation0 [shape = 'u32[]', space=smem, size = 0x4, offset = 0x4, fixed_abs, tag = 'smem constant byte address 0x4 - core index']
  #allocation1 [shape = 'u32[144,128]{1,0:T(1,128)}', space=vmem, size = 0x12000, scoped, tag = 'internal scratch']
  #allocation2 [shape = 'f32[1,256]{1,0:T(1,128)}', space=vmem, size = 0x400, scoped, tag = 'scratch operand']
  #allocation3 [shape = 'f32[1,256]{1,0:T(1,128)}', space=vmem, size = 0x400, scoped, tag = 'scratch operand']
  #allocation4 [shape = 'f32[64,256]{1,0:T(8,128)}', space=vmem, size = 0x10000, scoped, tag = 'scratch operand']
  %s0 = inlined_call_operand.vmem [shape: bf16[2,64,1024], index: 0, kind: input, shape index: {}]
  %s1 = inlined_call_operand.vmem [shape: bf16[2,1024,64], index: 1, kind: input, shape index: {}]
  %s2 = inlined_call_operand.vmem [shape: bf16[2,64,1024], index: 2, kind: input, shape index: {}]
  %s3 = inlined_call_operand.vmem [shape: f32[2,64,1024], index: 3, kind: input, shape index: {}]
  %s4 = inlined_call_operand.vmem [shape: bf16[64,64], index: 4, kind: input, shape index: {}]
  %s5 = inlined_call_operand.vmem [shape: f32[64,1], index: 5, kind: input, shape index: {}]
  %s6 = inlined_call_operand.vmem [shape: f32[2,64,1024], index: 6, kind: output, shape index: {}]
  %s7 = sld [smem:[#allocation0]]
  $region168: #{attention_block_3d.3} parent=0
    _
  %s9 = ssub.s32 1, %s7
  %s10 = scalar_select 0, %s9, %s7
  $region1: #{attention_block_3d.3} parent=0
    #allocation5 [shape = 'u8[65536]{0}', space=vmem, size = 0x10000, scoped, tag = 'input window, operand 0']
    #allocation6 [shape = 'u8[131072]{0}', space=vmem, size = 0x20000, scoped, tag = 'input window, operand 2']
    #allocation7 [shape = 'u8[131072]{0}', space=vmem, size = 0x20000, scoped, tag = 'input window, operand 3']
    #allocation8 [shape = 'u8[131072]{0}', space=vmem, size = 0x20000, scoped, tag = 'output window, operand 0']
    loop: start=0, step=1, limit=18
    $region2: #{attention_block_3d.3} parent=1 // loop_pre_header
      _
    $region3: #{attention_block_3d.3} parent=1 // loop_header
      %s12 = sphi 0, %s16
      %p13 = scmp.ge.s32.totalorder %s12, 18
      %s19 = sphi 0, %s38
      %s20 = sphi 0, %s34
      %s21 = sphi 0, %s30
      %s22 = sphi 0, %s19
      %s23 = sphi 0, %s20
      %s24 = sphi 0, %s21
      %s25 = sphi 0, %s22
      %s26 = sphi 0, %s23
      %s27 = sphi 0, %s24
      %s43 = sphi 0, %s45
      %s46 = sphi 0, %s43
      %s47 = sphi 0, %s46
      %s63 = sphi 0, %s47
      %s71 = sphi 0, %s73
      %s74 = sphi 0, %s71
      %s75 = sphi 0, %s74
      %s91 = sphi 0, %s75
      %s99 = sphi 0, %s101
      %s102 = sphi 0, %s99
      %s103 = sphi 0, %s102
      %s119 = sphi 0, %s103
      %s127 = sphi 0, %s129
      %s130 = sphi 0, %s127
      %s131 = sphi 0, %s130
      %s147 = sphi 0, %s131
      %s151 = sphi 0, %s151
      %s153 = sphi 0, %s151
      %s154 = sphi 0, %s153
      %s168 = sphi 0, %s154
      %s172 = sphi 0, %s172
      %s174 = sphi 0, %s172
      %s175 = sphi 0, %s174
      %s189 = sphi 0, %s175
      %s197 = sphi 0, %s199
      %s200 = sphi 0, %s197
      %s201 = sphi 0, %s200
      %s217 = sphi 0, %s201
    $region4: #{attention_block_3d.3} parent=1 // loop_header_branch
      %15 = sbr.rel (%p13) target = $region8
    $region5: #{attention_block_3d.3} parent=1 // loop_body
      %s17 = ssub.s32 %s12, 1
      %s18 = ssub.s32 %s12, 2
      %s28 = sadd.s32 1, %s21
      %p29 = scmp.ge.s32.totalorder %s28, 2
      %s30 = scalar_select %p29, 0, %s28
      %s31 = sadd.s32 1, %s20
      %s32 = scalar_select %p29, %s31, %s20
      %p33 = scmp.ge.s32.totalorder %s32, 4
      %s34 = scalar_select %p33, 0, %s32
      %s35 = sadd.s32 1, %s19
      %s36 = scalar_select %p33, %s35, %s19
      %p37 = scmp.ge.s32.totalorder %s36, 2
      %s38 = scalar_select %p37, 0, %s36
      %s39 = ssub.s32 %s19, %s38
      %s40 = ssub.s32 %s20, %s34
      %s41 = sor.u32 %s39, %s40
      %p42 = scmp.eq.s32.totalorder %s41, 0
      %s44 = sadd.s32 %s43, 1
      %s45 = scalar_select %p42, %s43, %s44
      %p48 = pneg %p42
      %p49 = scmp.eq.s32.totalorder %s12, 15
      %p50 = por %p48, %p49
      %p51 = scmp.ne.s32.totalorder %s43, %s46
      %p52 = scmp.eq.s32.totalorder %s12, 0
      %p53 = por %p51, %p52
      %p54 = scmp.ne.s32.totalorder %s43, %s46
      %p55 = scmp.eq.s32.totalorder %s17, 15
      %p56 = por %p54, %p55
      %p57 = scmp.ne.s32.totalorder %s46, %s47
      %p58 = scmp.eq.s32.totalorder %s17, 0
      %p59 = por %p57, %p58
      %p60 = scmp.ne.s32.totalorder %s46, %s47
      %p61 = scmp.eq.s32.totalorder %s18, 15
      %p62 = por %p60, %p61
      %p64 = scmp.ne.s32.totalorder %s47, %s63
      %p65 = scmp.eq.s32.totalorder %s18, 0
      %p66 = por %p64, %p65
      %s67 = ssub.s32 %s19, %s38
      %s68 = ssub.s32 %s21, %s30
      %s69 = sor.u32 %s67, %s68
      %p70 = scmp.eq.s32.totalorder %s69, 0
      %s72 = sadd.s32 %s71, 1
      %s73 = scalar_select %p70, %s71, %s72
      %p76 = pneg %p70
      %p77 = scmp.eq.s32.totalorder %s12, 15
      %p78 = por %p76, %p77
      %p79 = scmp.ne.s32.totalorder %s71, %s74
      %p80 = scmp.eq.s32.totalorder %s12, 0
      %p81 = por %p79, %p80
      %p82 = scmp.ne.s32.totalorder %s71, %s74
      %p83 = scmp.eq.s32.totalorder %s17, 15
      %p84 = por %p82, %p83
      %p85 = scmp.ne.s32.totalorder %s74, %s75
      %p86 = scmp.eq.s32.totalorder %s17, 0
      %p87 = por %p85, %p86
      %p88 = scmp.ne.s32.totalorder %s74, %s75
      %p89 = scmp.eq.s32.totalorder %s18, 15
      %p90 = por %p88, %p89
      %p92 = scmp.ne.s32.totalorder %s75, %s91
      %p93 = scmp.eq.s32.totalorder %s18, 0
      %p94 = por %p92, %p93
      %s95 = ssub.s32 %s19, %s38
      %s96 = ssub.s32 %s21, %s30
      %s97 = sor.u32 %s95, %s96
      %p98 = scmp.eq.s32.totalorder %s97, 0
      %s100 = sadd.s32 %s99, 1
      %s101 = scalar_select %p98, %s99, %s100
      %p104 = pneg %p98
      %p105 = scmp.eq.s32.totalorder %s12, 15
      %p106 = por %p104, %p105
      %p107 = scmp.ne.s32.totalorder %s99, %s102
      %p108 = scmp.eq.s32.totalorder %s12, 0
      %p109 = por %p107, %p108
      %p110 = scmp.ne.s32.totalorder %s99, %s102
      %p111 = scmp.eq.s32.totalorder %s17, 15
      %p112 = por %p110, %p111
      %p113 = scmp.ne.s32.totalorder %s102, %s103
      %p114 = scmp.eq.s32.totalorder %s17, 0
      %p115 = por %p113, %p114
      %p116 = scmp.ne.s32.totalorder %s102, %s103
      %p117 = scmp.eq.s32.totalorder %s18, 15
      %p118 = por %p116, %p117
      %p120 = scmp.ne.s32.totalorder %s103, %s119
      %p121 = scmp.eq.s32.totalorder %s18, 0
      %p122 = por %p120, %p121
      %s123 = ssub.s32 %s19, %s38
      %s124 = ssub.s32 %s20, %s34
      %s125 = sor.u32 %s123, %s124
      %p126 = scmp.eq.s32.totalorder %s125, 0
      %s128 = sadd.s32 %s127, 1
      %s129 = scalar_select %p126, %s127, %s128
      %p132 = pneg %p126
      %p133 = scmp.eq.s32.totalorder %s12, 15
      %p134 = por %p132, %p133
      %p135 = scmp.ne.s32.totalorder %s127, %s130
      %p136 = scmp.eq.s32.totalorder %s12, 0
      %p137 = por %p135, %p136
      %p138 = scmp.ne.s32.totalorder %s127, %s130
      %p139 = scmp.eq.s32.totalorder %s17, 15
      %p140 = por %p138, %p139
      %p141 = scmp.ne.s32.totalorder %s130, %s131
      %p142 = scmp.eq.s32.totalorder %s17, 0
      %p143 = por %p141, %p142
      %p144 = scmp.ne.s32.totalorder %s130, %s131
      %p145 = scmp.eq.s32.totalorder %s18, 15
      %p146 = por %p144, %p145
      %p148 = scmp.ne.s32.totalorder %s131, %s147
      %p149 = scmp.eq.s32.totalorder %s18, 0
      %p150 = por %p148, %p149
      %s152 = sadd.s32 %s151, 1
      %p155 = scmp.eq.s32.totalorder %s12, 15
      %p156 = scmp.ne.s32.totalorder %s151, %s153
      %p157 = scmp.eq.s32.totalorder %s12, 0
      %p158 = por %p156, %p157
      %p159 = scmp.ne.s32.totalorder %s151, %s153
      %p160 = scmp.eq.s32.totalorder %s17, 15
      %p161 = por %p159, %p160
      %p162 = scmp.ne.s32.totalorder %s153, %s154
      %p163 = scmp.eq.s32.totalorder %s17, 0
      %p164 = por %p162, %p163
      %p165 = scmp.ne.s32.totalorder %s153, %s154
      %p166 = scmp.eq.s32.totalorder %s18, 15
      %p167 = por %p165, %p166
      %p169 = scmp.ne.s32.totalorder %s154, %s168
      %p170 = scmp.eq.s32.totalorder %s18, 0
      %p171 = por %p169, %p170
      %s173 = sadd.s32 %s172, 1
      %p176 = scmp.eq.s32.totalorder %s12, 15
      %p177 = scmp.ne.s32.totalorder %s172, %s174
      %p178 = scmp.eq.s32.totalorder %s12, 0
      %p179 = por %p177, %p178
      %p180 = scmp.ne.s32.totalorder %s172, %s174
      %p181 = scmp.eq.s32.totalorder %s17, 15
      %p182 = por %p180, %p181
      %p183 = scmp.ne.s32.totalorder %s174, %s175
      %p184 = scmp.eq.s32.totalorder %s17, 0
      %p185 = por %p183, %p184
      %p186 = scmp.ne.s32.totalorder %s174, %s175
      %p187 = scmp.eq.s32.totalorder %s18, 15
      %p188 = por %p186, %p187
      %p190 = scmp.ne.s32.totalorder %s175, %s189
      %p191 = scmp.eq.s32.totalorder %s18, 0
      %p192 = por %p190, %p191
      %s193 = ssub.s32 %s19, %s38
      %s194 = ssub.s32 %s20, %s34
      %s195 = sor.u32 %s193, %s194
      %p196 = scmp.eq.s32.totalorder %s195, 0
      %s198 = sadd.s32 %s197, 1
      %s199 = scalar_select %p196, %s197, %s198
      %p202 = pneg %p196
      %p203 = scmp.eq.s32.totalorder %s12, 15
      %p204 = por %p202, %p203
      %p205 = scmp.ne.s32.totalorder %s197, %s200
      %p206 = scmp.eq.s32.totalorder %s12, 0
      %p207 = por %p205, %p206
      %p208 = scmp.ne.s32.totalorder %s197, %s200
      %p209 = scmp.eq.s32.totalorder %s17, 15
      %p210 = por %p208, %p209
      %p211 = scmp.ne.s32.totalorder %s200, %s201
      %p212 = scmp.eq.s32.totalorder %s17, 0
      %p213 = por %p211, %p212
      %p214 = scmp.ne.s32.totalorder %s200, %s201
      %p215 = scmp.eq.s32.totalorder %s18, 15
      %p216 = por %p214, %p215
      %p218 = scmp.ne.s32.totalorder %s201, %s217
      %p219 = scmp.eq.s32.totalorder %s18, 0
      %p220 = por %p218, %p219
      %p221 = scmp.le.s32.totalorder 1, %s12
      %p222 = scmp.lt.s32.totalorder %s12, 17
      %p223 = pnand %p221, %p222
      %p224 = pneg %p223
      // Predicated region
      $region9: #{attention_block_3d.3} parent=5 // pred_check
        _
      $region10: #{attention_block_3d.3} parent=5 // pred_check_branch
        %226 = sbr.rel (%p223) target = $region12
      $region11: #{attention_block_3d.3} parent=5 // pred_region
        %s227 = ssub.s32 %s12, 1
        // Predicated region
        $region13: #{attention_block_3d.3} parent=11 // pred_check
          %p228 = pneg %p164
        $region14: #{attention_block_3d.3} parent=11 // pred_check_branch
          %230 = sbr.rel (%p228) target = $region16
        $region15: #{attention_block_3d.3} parent=11 // pred_region
          _
        $region16: #{attention_block_3d.3} parent=11 // pred_fallthru
          _
        // Predicated region
        $region17: #{attention_block_3d.3} parent=11 // pred_check
          %p231 = pneg %p185
        $region18: #{attention_block_3d.3} parent=11 // pred_check_branch
          %233 = sbr.rel (%p231) target = $region20
        $region19: #{attention_block_3d.3} parent=11 // pred_region
          _
        $region20: #{attention_block_3d.3} parent=11 // pred_fallthru
          _
      $region12: #{attention_block_3d.3} parent=5 // pred_fallthru
        _
      %p234 = scmp.lt.s32.totalorder %s12, 16
      // Predicated region
      $region21: #{attention_block_3d.3} parent=5 // pred_check
        %p235 = pneg %p234
      $region22: #{attention_block_3d.3} parent=5 // pred_check_branch
        %237 = sbr.rel (%p235) target = $region24
      $region23: #{attention_block_3d.3} parent=5 // pred_region
        // Predicated region
        $region25: #{attention_block_3d.3} parent=23 // pred_check
          %p238 = pneg %p53
        $region26: #{attention_block_3d.3} parent=23 // pred_check_branch
          %240 = sbr.rel (%p238) target = $region28
        $region27: #{attention_block_3d.3} parent=23 // pred_region
          %s241 = sand.u32 %s43, 1
          %s242 = sand.u32 %s43, 1
          %s243 = smul.addr %s242, 64
          %s244 = scalar_lea.vmem [#allocation5], %s243
          %s245 = smul.u32 2, %s20
          %s246 = smul.addr %s19, 64
          %s247 = sadd.s32 %s245, %s246
          %s248 = smul.addr %s247, 4
          %s249 = scalar_lea.vmem %s0, %s248
          // Predicated region
          $region29: #{attention_block_3d.3} parent=27 // pred_check
            _
          $region30: #{attention_block_3d.3} parent=27 // pred_check_branch
            %251 = sbr.rel (0) target = $region32
          $region31: #{attention_block_3d.3} parent=27 // pred_region
            // Predicated region
            $region33: #{attention_block_3d.3} parent=31 // pred_check
              _
            $region34: #{attention_block_3d.3} parent=31 // pred_check_branch
              %253 = sbr.rel (0) target = $region36
            $region35: #{attention_block_3d.3} parent=31 // pred_region
              // Predicated region
              $region48: #{attention_block_3d.3} parent=35 // pred_check
                _
              $region49: #{attention_block_3d.3} parent=35 // pred_check_branch
                %283 = sbr.rel (0) target = $region51
              $region50: #{attention_block_3d.3} parent=35 // pred_region
                loop: start=0, step=1, limit=1
                $region52: #{attention_block_3d.3} parent=50 // loop_pre_header
                  _
                $region53: #{attention_block_3d.3} parent=50 // loop_header
                  %s285 = sphi 0, %s289
                  %p286 = scmp.ge.s32.totalorder %s285, 1
                  %s290 = sphi %s249, %s249
                  %s291 = sphi %s244, %s244
                $region54: #{attention_block_3d.3} parent=50 // loop_header_branch
                  %288 = sbr.rel (%p286) target = $region58
                $region55: #{attention_block_3d.3} parent=50 // loop_body
                  %v292 = vld [vmem:[%s290] sm:$0xff]
                  %293 = vst [vmem:[%s291] sm:$0xff] %v292
                  %v294 = vld [vmem:[%s290 + $0x20] sm:$0xff]
                  %295 = vst [vmem:[%s291 + $0x8] sm:$0xff] %v294
                  %v296 = vld [vmem:[%s290 + $0x40] sm:$0xff]
                  %297 = vst [vmem:[%s291 + $0x10] sm:$0xff] %v296
                  %v298 = vld [vmem:[%s290 + $0x60] sm:$0xff]
                  %299 = vst [vmem:[%s291 + $0x18] sm:$0xff] %v298
                  %v300 = vld [vmem:[%s290 + $0x80] sm:$0xff]
                  %301 = vst [vmem:[%s291 + $0x20] sm:$0xff] %v300
                  %v302 = vld [vmem:[%s290 + $0xa0] sm:$0xff]
                  %303 = vst [vmem:[%s291 + $0x28] sm:$0xff] %v302
                  %v304 = vld [vmem:[%s290 + $0xc0] sm:$0xff]
                  %305 = vst [vmem:[%s291 + $0x30] sm:$0xff] %v304
                  %v306 = vld [vmem:[%s290 + $0xe0] sm:$0xff]
                  %307 = vst [vmem:[%s291 + $0x38] sm:$0xff] %v306
                $region56: #{attention_block_3d.3} parent=50 // loop_footer
                  %s289 = sadd.s32 1, %s285
                $region57: #{attention_block_3d.3} parent=50 // loop_footer_branch
                  %284 = sbr.rel target = $region53
                $region58: #{attention_block_3d.3} parent=50 // loop_exit
                  _
              $region51: #{attention_block_3d.3} parent=35 // pred_fallthru
                _
              // Predicated region
              $region59: #{attention_block_3d.3} parent=35 // pred_check
                _
              $region60: #{attention_block_3d.3} parent=35 // pred_check_branch
                %309 = sbr.rel target = $region62
              $region61: #{attention_block_3d.3} parent=35 // pred_region
                _
              $region62: #{attention_block_3d.3} parent=35 // pred_fallthru
                _
            $region36: #{attention_block_3d.3} parent=31 // pred_fallthru
              _
            // Predicated region
            $region37: #{attention_block_3d.3} parent=31 // pred_check
              _
            $region38: #{attention_block_3d.3} parent=31 // pred_check_branch
              %255 = sbr.rel target = $region40
            $region39: #{attention_block_3d.3} parent=31 // pred_region
              %s257 = ssub.s32 256, 1
              loop: start=0, step=1, limit=1
              $region41: #{attention_block_3d.3} parent=39 // loop_pre_header
                _
              $region42: #{attention_block_3d.3} parent=39 // loop_header
                %s259 = sphi 0, %s263
                %p260 = scmp.ge.s32.totalorder %s259, 1
                %s264 = sphi %s249, %s249
                %s265 = sphi %s244, %s244
              $region43: #{attention_block_3d.3} parent=39 // loop_header_branch
                %262 = sbr.rel (%p260) target = $region47
              $region44: #{attention_block_3d.3} parent=39 // loop_body
                %v266 = vld [vmem:[%s264] sm:%s257]
                %267 = vst [vmem:[%s265] sm:%s257] %v266
                %v268 = vld [vmem:[%s264 + $0x20] sm:%s257]
                %269 = vst [vmem:[%s265 + $0x8] sm:%s257] %v268
                %v270 = vld [vmem:[%s264 + $0x40] sm:%s257]
                %271 = vst [vmem:[%s265 + $0x10] sm:%s257] %v270
                %v272 = vld [vmem:[%s264 + $0x60] sm:%s257]
                %273 = vst [vmem:[%s265 + $0x18] sm:%s257] %v272
                %v274 = vld [vmem:[%s264 + $0x80] sm:%s257]
                %275 = vst [vmem:[%s265 + $0x20] sm:%s257] %v274
                %v276 = vld [vmem:[%s264 + $0xa0] sm:%s257]
                %277 = vst [vmem:[%s265 + $0x28] sm:%s257] %v276
                %v278 = vld [vmem:[%s264 + $0xc0] sm:%s257]
                %279 = vst [vmem:[%s265 + $0x30] sm:%s257] %v278
                %v280 = vld [vmem:[%s264 + $0xe0] sm:%s257]
                %281 = vst [vmem:[%s265 + $0x38] sm:%s257] %v280
              $region45: #{attention_block_3d.3} parent=39 // loop_footer
                %s263 = sadd.s32 1, %s259
              $region46: #{attention_block_3d.3} parent=39 // loop_footer_branch
                %258 = sbr.rel target = $region42
              $region47: #{attention_block_3d.3} parent=39 // loop_exit
                _
            $region40: #{attention_block_3d.3} parent=31 // pred_fallthru
              _
          $region32: #{attention_block_3d.3} parent=27 // pred_fallthru
            _
          %310 = vnop
        $region28: #{attention_block_3d.3} parent=23 // pred_fallthru
          _
        // Predicated region
        $region63: #{attention_block_3d.3} parent=23 // pred_check
          %p311 = pneg %p81
        $region64: #{attention_block_3d.3} parent=23 // pred_check_branch
          %313 = sbr.rel (%p311) target = $region66
        $region65: #{attention_block_3d.3} parent=23 // pred_region
          %s314 = smul.u32 64, %s21
          %p315 = scmp.lt.s32.totalorder %s19, 1
          %s316 = scalar_select %p315, %s19, 1
          %p317 = scmp.lt.s32.totalorder %s314, 127
          %s318 = scalar_select %p317, %s314, 127
          %s319 = smul.addr %s316, 128
          %s320 = sadd.s32 %s318, %s319
          %s321 = smul.addr %s320, 4
          %s322 = scalar_lea.vmem %s1, %s321
          %s323 = smul.u32 64, %s21
        $region66: #{attention_block_3d.3} parent=23 // pred_fallthru
          _
        // Predicated region
        $region67: #{attention_block_3d.3} parent=23 // pred_check
          %p324 = pneg %p109
        $region68: #{attention_block_3d.3} parent=23 // pred_check_branch
          %326 = sbr.rel (%p324) target = $region70
        $region69: #{attention_block_3d.3} parent=23 // pred_region
          %s327 = sand.u32 %s99, 1
          %s328 = sand.u32 %s99, 1
          %s329 = smul.addr %s328, 128
          %s330 = scalar_lea.vmem [#allocation6], %s329
          %s331 = smul.u32 4, %s21
          %s332 = smul.addr %s19, 64
          %s333 = sadd.s32 %s331, %s332
          %s334 = smul.addr %s333, 4
          %s335 = scalar_lea.vmem %s2, %s334
          // Predicated region
          $region71: #{attention_block_3d.3} parent=69 // pred_check
            _
          $region72: #{attention_block_3d.3} parent=69 // pred_check_branch
            %337 = sbr.rel (0) target = $region74
          $region73: #{attention_block_3d.3} parent=69 // pred_region
            // Predicated region
            $region75: #{attention_block_3d.3} parent=73 // pred_check
              _
            $region76: #{attention_block_3d.3} parent=73 // pred_check_branch
              %339 = sbr.rel (0) target = $region78
            $region77: #{attention_block_3d.3} parent=73 // pred_region
              loop: start=0, step=1, limit=1
              $region79: #{attention_block_3d.3} parent=77 // loop_pre_header
                _
              $region80: #{attention_block_3d.3} parent=77 // loop_header
                %s341 = sphi 0, %s345
                %p342 = scmp.ge.s32.totalorder %s341, 1
                %s346 = sphi %s335, %s335
                %s347 = sphi %s330, %s330
              $region81: #{attention_block_3d.3} parent=77 // loop_header_branch
                %344 = sbr.rel (%p342) target = $region85
              $region82: #{attention_block_3d.3} parent=77 // loop_body
                %v348 = vld [vmem:[%s346] sm:$0xff]
                %349 = vst [vmem:[%s347] sm:$0xff] %v348
                %v350 = vld [vmem:[%s346 + $0x8] sm:$0xff]
                %351 = vst [vmem:[%s347 + $0x8] sm:$0xff] %v350
                %v352 = vld [vmem:[%s346 + $0x20] sm:$0xff]
                %353 = vst [vmem:[%s347 + $0x10] sm:$0xff] %v352
                %v354 = vld [vmem:[%s346 + $0x28] sm:$0xff]
                %355 = vst [vmem:[%s347 + $0x18] sm:$0xff] %v354
                %v356 = vld [vmem:[%s346 + $0x40] sm:$0xff]
                %357 = vst [vmem:[%s347 + $0x20] sm:$0xff] %v356
                %v358 = vld [vmem:[%s346 + $0x48] sm:$0xff]
                %359 = vst [vmem:[%s347 + $0x28] sm:$0xff] %v358
                %v360 = vld [vmem:[%s346 + $0x60] sm:$0xff]
                %361 = vst [vmem:[%s347 + $0x30] sm:$0xff] %v360
                %v362 = vld [vmem:[%s346 + $0x68] sm:$0xff]
                %363 = vst [vmem:[%s347 + $0x38] sm:$0xff] %v362
                %v364 = vld [vmem:[%s346 + $0x80] sm:$0xff]
                %365 = vst [vmem:[%s347 + $0x40] sm:$0xff] %v364
                %v366 = vld [vmem:[%s346 + $0x88] sm:$0xff]
                %367 = vst [vmem:[%s347 + $0x48] sm:$0xff] %v366
                %v368 = vld [vmem:[%s346 + $0xa0] sm:$0xff]
                %369 = vst [vmem:[%s347 + $0x50] sm:$0xff] %v368
                %v370 = vld [vmem:[%s346 + $0xa8] sm:$0xff]
                %371 = vst [vmem:[%s347 + $0x58] sm:$0xff] %v370
                %v372 = vld [vmem:[%s346 + $0xc0] sm:$0xff]
                %373 = vst [vmem:[%s347 + $0x60] sm:$0xff] %v372
                %v374 = vld [vmem:[%s346 + $0xc8] sm:$0xff]
                %375 = vst [vmem:[%s347 + $0x68] sm:$0xff] %v374
                %v376 = vld [vmem:[%s346 + $0xe0] sm:$0xff]
                %377 = vst [vmem:[%s347 + $0x70] sm:$0xff] %v376
                %v378 = vld [vmem:[%s346 + $0xe8] sm:$0xff]
                %379 = vst [vmem:[%s347 + $0x78] sm:$0xff] %v378
              $region83: #{attention_block_3d.3} parent=77 // loop_footer
                %s345 = sadd.s32 1, %s341
              $region84: #{attention_block_3d.3} parent=77 // loop_footer_branch
                %340 = sbr.rel target = $region80
              $region85: #{attention_block_3d.3} parent=77 // loop_exit
                _
            $region78: #{attention_block_3d.3} parent=73 // pred_fallthru
              _
            // Predicated region
            $region86: #{attention_block_3d.3} parent=73 // pred_check
              _
            $region87: #{attention_block_3d.3} parent=73 // pred_check_branch
              %381 = sbr.rel target = $region89
            $region88: #{attention_block_3d.3} parent=73 // pred_region
              _
            $region89: #{attention_block_3d.3} parent=73 // pred_fallthru
              _
          $region74: #{attention_block_3d.3} parent=69 // pred_fallthru
            _
          %382 = vnop
        $region70: #{attention_block_3d.3} parent=23 // pred_fallthru
          _
        // Predicated region
        $region90: #{attention_block_3d.3} parent=23 // pred_check
          %p383 = pneg %p137
        $region91: #{attention_block_3d.3} parent=23 // pred_check_branch
          %385 = sbr.rel (%p383) target = $region93
        $region92: #{attention_block_3d.3} parent=23 // pred_region
          %s386 = sand.u32 %s127, 1
          %s387 = sand.u32 %s127, 1
          %s388 = smul.addr %s387, 128
          %s389 = scalar_lea.vmem [#allocation7], %s388
          %s390 = smul.u32 2, %s20
          %s391 = smul.addr %s19, 64
          %s392 = sadd.s32 %s390, %s391
          %s393 = smul.addr %s392, 8
          %s394 = scalar_lea.vmem %s3, %s393
          // Predicated region
          $region94: #{attention_block_3d.3} parent=92 // pred_check
            _
          $region95: #{attention_block_3d.3} parent=92 // pred_check_branch
            %396 = sbr.rel (0) target = $region97
          $region96: #{attention_block_3d.3} parent=92 // pred_region
            // Predicated region
            $region98: #{attention_block_3d.3} parent=96 // pred_check
              _
            $region99: #{attention_block_3d.3} parent=96 // pred_check_branch
              %398 = sbr.rel (0) target = $region101
            $region100: #{attention_block_3d.3} parent=96 // pred_region
              loop: start=0, step=1, limit=1
              $region102: #{attention_block_3d.3} parent=100 // loop_pre_header
                _
              $region103: #{attention_block_3d.3} parent=100 // loop_header
                %s400 = sphi 0, %s404
                %p401 = scmp.ge.s32.totalorder %s400, 1
                %s405 = sphi %s394, %s394
                %s406 = sphi %s389, %s389
              $region104: #{attention_block_3d.3} parent=100 // loop_header_branch
                %403 = sbr.rel (%p401) target = $region108
              $region105: #{attention_block_3d.3} parent=100 // loop_body
                %v407 = vld [vmem:[%s405] sm:$0xff]
                %408 = vst [vmem:[%s406] sm:$0xff] %v407
                %v409 = vld [vmem:[%s405 + $0x8] sm:$0xff]
                %410 = vst [vmem:[%s406 + $0x8] sm:$0xff] %v409
                %v411 = vld [vmem:[%s405 + $0x40] sm:$0xff]
                %412 = vst [vmem:[%s406 + $0x10] sm:$0xff] %v411
                %v413 = vld [vmem:[%s405 + $0x48] sm:$0xff]
                %414 = vst [vmem:[%s406 + $0x18] sm:$0xff] %v413
                %v415 = vld [vmem:[%s405 + $0x80] sm:$0xff]
                %416 = vst [vmem:[%s406 + $0x20] sm:$0xff] %v415
                %v417 = vld [vmem:[%s405 + $0x88] sm:$0xff]
                %418 = vst [vmem:[%s406 + $0x28] sm:$0xff] %v417
                %v419 = vld [vmem:[%s405 + $0xc0] sm:$0xff]
                %420 = vst [vmem:[%s406 + $0x30] sm:$0xff] %v419
                %v421 = vld [vmem:[%s405 + $0xc8] sm:$0xff]
                %422 = vst [vmem:[%s406 + $0x38] sm:$0xff] %v421
                %v423 = vld [vmem:[%s405 + $0x100] sm:$0xff]
                %424 = vst [vmem:[%s406 + $0x40] sm:$0xff] %v423
                %v425 = vld [vmem:[%s405 + $0x108] sm:$0xff]
                %426 = vst [vmem:[%s406 + $0x48] sm:$0xff] %v425
                %v427 = vld [vmem:[%s405 + $0x140] sm:$0xff]
                %428 = vst [vmem:[%s406 + $0x50] sm:$0xff] %v427
                %v429 = vld [vmem:[%s405 + $0x148] sm:$0xff]
                %430 = vst [vmem:[%s406 + $0x58] sm:$0xff] %v429
                %v431 = vld [vmem:[%s405 + $0x180] sm:$0xff]
                %432 = vst [vmem:[%s406 + $0x60] sm:$0xff] %v431
                %v433 = vld [vmem:[%s405 + $0x188] sm:$0xff]
                %434 = vst [vmem:[%s406 + $0x68] sm:$0xff] %v433
                %v435 = vld [vmem:[%s405 + $0x1c0] sm:$0xff]
                %436 = vst [vmem:[%s406 + $0x70] sm:$0xff] %v435
                %v437 = vld [vmem:[%s405 + $0x1c8] sm:$0xff]
                %438 = vst [vmem:[%s406 + $0x78] sm:$0xff] %v437
              $region106: #{attention_block_3d.3} parent=100 // loop_footer
                %s404 = sadd.s32 1, %s400
              $region107: #{attention_block_3d.3} parent=100 // loop_footer_branch
                %399 = sbr.rel target = $region103
              $region108: #{attention_block_3d.3} parent=100 // loop_exit
                _
            $region101: #{attention_block_3d.3} parent=96 // pred_fallthru
              _
            // Predicated region
            $region109: #{attention_block_3d.3} parent=96 // pred_check
              _
            $region110: #{attention_block_3d.3} parent=96 // pred_check_branch
              %440 = sbr.rel target = $region112
            $region111: #{attention_block_3d.3} parent=96 // pred_region
              _
            $region112: #{attention_block_3d.3} parent=96 // pred_fallthru
              _
          $region97: #{attention_block_3d.3} parent=92 // pred_fallthru
            _
          %441 = vnop
        $region93: #{attention_block_3d.3} parent=23 // pred_fallthru
          _
      $region24: #{attention_block_3d.3} parent=5 // pred_fallthru
        _
      %p442 = scmp.le.s32.totalorder 1, %s12
      %p443 = scmp.lt.s32.totalorder %s12, 17
      %p444 = pnand %p442, %p443
      %p445 = pneg %p444
      // Predicated region
      $region113: #{attention_block_3d.3} parent=5 // pred_check
        _
      $region114: #{attention_block_3d.3} parent=5 // pred_check_branch
        %447 = sbr.rel (%p444) target = $region116
      $region115: #{attention_block_3d.3} parent=5 // pred_region
        %s448 = ssub.s32 %s12, 1
        %s449 = sand.u32 %s46, 1
        %s450 = sand.u32 %s46, 1
        %s451 = smul.addr %s450, 64
        %s452 = scalar_lea.vmem [#allocation5], %s451
        // Predicated region
        $region117: #{attention_block_3d.3} parent=115 // pred_check
          %p453 = pneg %p59
        $region118: #{attention_block_3d.3} parent=115 // pred_check_branch
          %455 = sbr.rel (%p453) target = $region120
        $region119: #{attention_block_3d.3} parent=115 // pred_region
          _
        $region120: #{attention_block_3d.3} parent=115 // pred_fallthru
          _
        %s456 = sand.u32 %s102, 1
        %s457 = sand.u32 %s102, 1
        %s458 = smul.addr %s457, 128
        %s459 = scalar_lea.vmem [#allocation6], %s458
        // Predicated region
        $region121: #{attention_block_3d.3} parent=115 // pred_check
          %p460 = pneg %p115
        $region122: #{attention_block_3d.3} parent=115 // pred_check_branch
          %462 = sbr.rel (%p460) target = $region124
        $region123: #{attention_block_3d.3} parent=115 // pred_region
          _
        $region124: #{attention_block_3d.3} parent=115 // pred_fallthru
          _
        %s463 = sand.u32 %s130, 1
        %s464 = sand.u32 %s130, 1
        %s465 = smul.addr %s464, 128
        %s466 = scalar_lea.vmem [#allocation7], %s465
        // Predicated region
        $region125: #{attention_block_3d.3} parent=115 // pred_check
          %p467 = pneg %p143
        $region126: #{attention_block_3d.3} parent=115 // pred_check_branch
          %469 = sbr.rel (%p467) target = $region128
        $region127: #{attention_block_3d.3} parent=115 // pred_region
          _
        $region128: #{attention_block_3d.3} parent=115 // pred_fallthru
          _
        %s470 = sand.u32 %s46, 1
        %s471 = sand.u32 %s46, 1
        %s472 = smul.addr %s471, 64
        %s473 = scalar_lea.vmem [#allocation5], %s472
        %p474 = pneg %p59
        %p475 = pneg %p56
        %s476 = smul.u32 64, %s24
        %p477 = scmp.lt.s32.totalorder %s22, 1
        %s478 = scalar_select %p477, %s22, 1
        %p479 = scmp.lt.s32.totalorder %s476, 127
        %s480 = scalar_select %p479, %s476, 127
        %s481 = smul.addr %s478, 128
        %s482 = sadd.s32 %s480, %s481
        %s483 = smul.addr %s482, 4
        %s484 = scalar_lea.vmem %s1, %s483
        %p485 = pneg %p87
        %p486 = pneg %p84
        %s487 = sand.u32 %s102, 1
        %s488 = sand.u32 %s102, 1
        %s489 = smul.addr %s488, 128
        %s490 = scalar_lea.vmem [#allocation6], %s489
        %p491 = pneg %p115
        %p492 = pneg %p112
        %s493 = sand.u32 %s130, 1
        %s494 = sand.u32 %s130, 1
        %s495 = smul.addr %s494, 128
        %s496 = scalar_lea.vmem [#allocation7], %s495
        %p497 = pneg %p143
        %p498 = pneg %p140
        %p499 = pneg %p164
        %p500 = pneg %p161
        %p501 = pneg %p185
        %p502 = pneg %p182
        %p503 = pneg %p213
        %p504 = pneg %p210
        %s505 = sand.u32 %s200, 1
        %s506 = sand.u32 %s200, 1
        %s507 = smul.addr %s506, 128
        %s508 = scalar_lea.vmem [#allocation8], %s507
        %s509 = smul.u32 2, %s23
        %s510 = smul.u32 64, %s24
        %p511 = scmp.lt.s32.totalorder %s22, 1
        %s512 = scalar_select %p511, %s22, 1
        %p513 = scmp.lt.s32.totalorder %s510, 127
        %s514 = scalar_select %p513, %s510, 127
        %s515 = smul.addr %s512, 128
        %s516 = sadd.s32 %s514, %s515
        %s517 = smul.addr %s516, 4
        %s518 = scalar_lea.vmem %s1, %s517
        %s519 = smul.u32 64, %s24
        %s520 = smul.u32 4, %s24
        %s521 = smul.u32 2, %s23
        %s522 = smul.u32 2, %s23
        %p524 = scmp.eq.s32.totalorder %s24, 0
        // Predicated region
        $region129: #{attention_block_3d.3} parent=115 // pred_check
          %p525 = pneg %p524
        $region130: #{attention_block_3d.3} parent=115 // pred_check_branch
          %527 = sbr.rel (%p525) target = $region132
        $region131: #{attention_block_3d.3} parent=115 // pred_region
          %v528 = vlaneseq
          %vm529 = vcmp.ge.s32.totalorder %v528, 0
          %vm530 = vcmp.lt.s32.totalorder %v528, 256
          %vm531 = vmand %vm529, %vm530
          %532 = vst.msk [vmem:[#allocation2] sm:$0x3] %vm531, -inf
          %533 = vst.msk [vmem:[#allocation3] sm:$0x3] %vm531, 0.0
          %534 = vst [vmem:[#allocation4] sm:$0xff] 0.0
          %535 = vst [vmem:[#allocation4 + $0x8] sm:$0xff] 0.0
          %536 = vst [vmem:[#allocation4 + $0x10] sm:$0xff] 0.0
          %537 = vst [vmem:[#allocation4 + $0x18] sm:$0xff] 0.0
          %538 = vst [vmem:[#allocation4 + $0x20] sm:$0xff] 0.0
          %539 = vst [vmem:[#allocation4 + $0x28] sm:$0xff] 0.0
          %540 = vst [vmem:[#allocation4 + $0x30] sm:$0xff] 0.0
          %541 = vst [vmem:[#allocation4 + $0x38] sm:$0xff] 0.0
          %542 = vst [vmem:[#allocation4 + $0x40] sm:$0xff] 0.0
          %543 = vst [vmem:[#allocation4 + $0x48] sm:$0xff] 0.0
          %544 = vst [vmem:[#allocation4 + $0x50] sm:$0xff] 0.0
          %545 = vst [vmem:[#allocation4 + $0x58] sm:$0xff] 0.0
          %546 = vst [vmem:[#allocation4 + $0x60] sm:$0xff] 0.0
          %547 = vst [vmem:[#allocation4 + $0x68] sm:$0xff] 0.0
          %548 = vst [vmem:[#allocation4 + $0x70] sm:$0xff] 0.0
          %549 = vst [vmem:[#allocation4 + $0x78] sm:$0xff] 0.0
        $region132: #{attention_block_3d.3} parent=115 // pred_fallthru
          _
        %v550 = vld [vmem:[%s518] sm:$0xf]
        %v551 = vld [vmem:[%s518 + $0x4] sm:$0xf]
        %v552 = vld [vmem:[%s518 + $0x8] sm:$0xf]
        %v553 = vld [vmem:[%s518 + $0xc] sm:$0xf]
        %v554 = vld [vmem:[%s518 + $0x10] sm:$0xf]
        %v555 = vld [vmem:[%s518 + $0x14] sm:$0xf]
        %v556 = vld [vmem:[%s518 + $0x18] sm:$0xf]
        %v557 = vld [vmem:[%s518 + $0x1c] sm:$0xf]
        %v558 = vld [vmem:[%s518 + $0x20] sm:$0xf]
        %v559 = vld [vmem:[%s518 + $0x24] sm:$0xf]
        %v560 = vld [vmem:[%s518 + $0x28] sm:$0xf]
        %v561 = vld [vmem:[%s518 + $0x2c] sm:$0xf]
        %v562 = vld [vmem:[%s518 + $0x30] sm:$0xf]
        %v563 = vld [vmem:[%s518 + $0x34] sm:$0xf]
        %v564 = vld [vmem:[%s518 + $0x38] sm:$0xf]
        %v565 = vld [vmem:[%s518 + $0x3c] sm:$0xf]
        %v566 = vld [vmem:[%s518 + $0x40] sm:$0xf]
        %v567 = vld [vmem:[%s518 + $0x44] sm:$0xf]
        %v568 = vld [vmem:[%s518 + $0x48] sm:$0xf]
        %v569 = vld [vmem:[%s518 + $0x4c] sm:$0xf]
        %v570 = vld [vmem:[%s518 + $0x50] sm:$0xf]
        %v571 = vld [vmem:[%s518 + $0x54] sm:$0xf]
        %v572 = vld [vmem:[%s518 + $0x58] sm:$0xf]
        %v573 = vld [vmem:[%s518 + $0x5c] sm:$0xf]
        %v574 = vld [vmem:[%s518 + $0x60] sm:$0xf]
        %v575 = vld [vmem:[%s518 + $0x64] sm:$0xf]
        %v576 = vld [vmem:[%s518 + $0x68] sm:$0xf]
        %v577 = vld [vmem:[%s518 + $0x6c] sm:$0xf]
        %v578 = vld [vmem:[%s518 + $0x70] sm:$0xf]
        %v579 = vld [vmem:[%s518 + $0x74] sm:$0xf]
        %v580 = vld [vmem:[%s518 + $0x78] sm:$0xf]
        %v581 = vld [vmem:[%s518 + $0x7c] sm:$0xf]
        %v582 = vld [vmem:[%s518 + $0x80] sm:$0xf]
        %v583 = vld [vmem:[%s518 + $0x84] sm:$0xf]
        %v584 = vld [vmem:[%s518 + $0x88] sm:$0xf]
        %v585 = vld [vmem:[%s518 + $0x8c] sm:$0xf]
        %v586 = vld [vmem:[%s518 + $0x90] sm:$0xf]
        %v587 = vld [vmem:[%s518 + $0x94] sm:$0xf]
        %v588 = vld [vmem:[%s518 + $0x98] sm:$0xf]
        %v589 = vld [vmem:[%s518 + $0x9c] sm:$0xf]
        %v590 = vld [vmem:[%s518 + $0xa0] sm:$0xf]
        %v591 = vld [vmem:[%s518 + $0xa4] sm:$0xf]
        %v592 = vld [vmem:[%s518 + $0xa8] sm:$0xf]
        %v593 = vld [vmem:[%s518 + $0xac] sm:$0xf]
        %v594 = vld [vmem:[%s518 + $0xb0] sm:$0xf]
        %v595 = vld [vmem:[%s518 + $0xb4] sm:$0xf]
        %v596 = vld [vmem:[%s518 + $0xb8] sm:$0xf]
        %v597 = vld [vmem:[%s518 + $0xbc] sm:$0xf]
        %v598 = vld [vmem:[%s518 + $0xc0] sm:$0xf]
        %v599 = vld [vmem:[%s518 + $0xc4] sm:$0xf]
        %v600 = vld [vmem:[%s518 + $0xc8] sm:$0xf]
        %v601 = vld [vmem:[%s518 + $0xcc] sm:$0xf]
        %v602 = vld [vmem:[%s518 + $0xd0] sm:$0xf]
        %v603 = vld [vmem:[%s518 + $0xd4] sm:$0xf]
        %v604 = vld [vmem:[%s518 + $0xd8] sm:$0xf]
        %v605 = vld [vmem:[%s518 + $0xdc] sm:$0xf]
        %v606 = vld [vmem:[%s518 + $0xe0] sm:$0xf]
        %v607 = vld [vmem:[%s518 + $0xe4] sm:$0xf]
        %v608 = vld [vmem:[%s518 + $0xe8] sm:$0xf]
        %v609 = vld [vmem:[%s518 + $0xec] sm:$0xf]
        %v610 = vld [vmem:[%s518 + $0xf0] sm:$0xf]
        %v611 = vld [vmem:[%s518 + $0xf4] sm:$0xf]
        %v612 = vld [vmem:[%s518 + $0xf8] sm:$0xf]
        %v613 = vld [vmem:[%s518 + $0xfc] sm:$0xf]
        %v614 = vld [vmem:[%s452] sm:$0xff]
        %v615 = vld [vmem:[%s452 + $0x8] sm:$0xff]
        %v616 = vld [vmem:[%s452 + $0x10] sm:$0xff]
        %v617 = vld [vmem:[%s452 + $0x18] sm:$0xff]
        %v618 = vld [vmem:[%s452 + $0x20] sm:$0xff]
        %v619 = vld [vmem:[%s452 + $0x28] sm:$0xff]
        %v620 = vld [vmem:[%s452 + $0x30] sm:$0xff]
        %v621 = vld [vmem:[%s452 + $0x38] sm:$0xff]
        %v686 = vunpack.c.l.b16 %v550
        %v687 = vunpack.c.l.b16 %v551
        %v688 = vunpack.c.l.b16 %v552
        %v689 = vunpack.c.l.b16 %v553
        %v690 = vunpack.c.l.b16 %v554
        %v691 = vunpack.c.l.b16 %v555
        %v692 = vunpack.c.l.b16 %v556
        %v693 = vunpack.c.l.b16 %v557
        %v694 = vunpack.c.l.b16 %v558
        %v695 = vunpack.c.l.b16 %v559
        %v696 = vunpack.c.l.b16 %v560
        %v697 = vunpack.c.l.b16 %v561
        %v698 = vunpack.c.l.b16 %v562
        %v699 = vunpack.c.l.b16 %v563
        %v700 = vunpack.c.l.b16 %v564
        %v701 = vunpack.c.l.b16 %v565
        %v702 = vunpack.c.l.b16 %v566
        %v703 = vunpack.c.l.b16 %v567
        %v704 = vunpack.c.l.b16 %v568
        %v705 = vunpack.c.l.b16 %v569
        %v706 = vunpack.c.l.b16 %v570
        %v707 = vunpack.c.l.b16 %v571
        %v708 = vunpack.c.l.b16 %v572
        %v709 = vunpack.c.l.b16 %v573
        %v710 = vunpack.c.l.b16 %v574
        %v711 = vunpack.c.l.b16 %v575
        %v712 = vunpack.c.l.b16 %v576
        %v713 = vunpack.c.l.b16 %v577
        %v714 = vunpack.c.l.b16 %v578
        %v715 = vunpack.c.l.b16 %v579
        %v716 = vunpack.c.l.b16 %v580
        %v717 = vunpack.c.l.b16 %v581
        %v718 = vunpack.c.l.b16 %v582
        %v719 = vunpack.c.l.b16 %v583
        %v720 = vunpack.c.l.b16 %v584
        %v721 = vunpack.c.l.b16 %v585
        %v722 = vunpack.c.l.b16 %v586
        %v723 = vunpack.c.l.b16 %v587
        %v724 = vunpack.c.l.b16 %v588
        %v725 = vunpack.c.l.b16 %v589
        %v726 = vunpack.c.l.b16 %v590
        %v727 = vunpack.c.l.b16 %v591
        %v728 = vunpack.c.l.b16 %v592
        %v729 = vunpack.c.l.b16 %v593
        %v730 = vunpack.c.l.b16 %v594
        %v731 = vunpack.c.l.b16 %v595
        %v732 = vunpack.c.l.b16 %v596
        %v733 = vunpack.c.l.b16 %v597
        %v734 = vunpack.c.l.b16 %v598
        %v735 = vunpack.c.l.b16 %v599
        %v736 = vunpack.c.l.b16 %v600
        %v737 = vunpack.c.l.b16 %v601
        %v738 = vunpack.c.l.b16 %v602
        %v739 = vunpack.c.l.b16 %v603
        %v740 = vunpack.c.l.b16 %v604
        %v741 = vunpack.c.l.b16 %v605
        %v742 = vunpack.c.l.b16 %v606
        %v743 = vunpack.c.l.b16 %v607
        %v744 = vunpack.c.l.b16 %v608
        %v745 = vunpack.c.l.b16 %v609
        %v746 = vunpack.c.l.b16 %v610
        %v747 = vunpack.c.l.b16 %v611
        %v748 = vunpack.c.l.b16 %v612
        %v749 = vunpack.c.l.b16 %v613
        %v750 = vpack.c.b16 %v687, %v686
        %v751 = vpack.c.b16 %v689, %v688
        %v752 = vpack.c.b16 %v691, %v690
        %v753 = vpack.c.b16 %v693, %v692
        %v754 = vpack.c.b16 %v695, %v694
        %v755 = vpack.c.b16 %v697, %v696
        %v756 = vpack.c.b16 %v699, %v698
        %v757 = vpack.c.b16 %v701, %v700
        %v758 = vpack.c.b16 %v703, %v702
        %v759 = vpack.c.b16 %v705, %v704
        %v760 = vpack.c.b16 %v707, %v706
        %v761 = vpack.c.b16 %v709, %v708
        %v762 = vpack.c.b16 %v711, %v710
        %v763 = vpack.c.b16 %v713, %v712
        %v764 = vpack.c.b16 %v715, %v714
        %v765 = vpack.c.b16 %v717, %v716
        %v766 = vpack.c.b16 %v719, %v718
        %v767 = vpack.c.b16 %v721, %v720
        %v768 = vpack.c.b16 %v723, %v722
        %v769 = vpack.c.b16 %v725, %v724
        %v770 = vpack.c.b16 %v727, %v726
        %v771 = vpack.c.b16 %v729, %v728
        %v772 = vpack.c.b16 %v731, %v730
        %v773 = vpack.c.b16 %v733, %v732
        %v774 = vpack.c.b16 %v735, %v734
        %v775 = vpack.c.b16 %v737, %v736
        %v776 = vpack.c.b16 %v739, %v738
        %v777 = vpack.c.b16 %v741, %v740
        %v778 = vpack.c.b16 %v743, %v742
        %v779 = vpack.c.b16 %v745, %v744
        %v780 = vpack.c.b16 %v747, %v746
        %v781 = vpack.c.b16 %v749, %v748
        %v790 = vunpack.c.l.b16 %v614
        %v791 = vunpack.c.h.b16 %v614
        %v792 = vunpack.c.l.b16 %v615
        %v793 = vunpack.c.h.b16 %v615
        %v794 = vunpack.c.l.b16 %v616
        %v795 = vunpack.c.h.b16 %v616
        %v796 = vunpack.c.l.b16 %v617
        %v797 = vunpack.c.h.b16 %v617
        %v798 = vunpack.c.l.b16 %v618
        %v799 = vunpack.c.h.b16 %v618
        %v800 = vunpack.c.l.b16 %v619
        %v801 = vunpack.c.h.b16 %v619
        %v802 = vunpack.c.l.b16 %v620
        %v803 = vunpack.c.h.b16 %v620
        %v804 = vunpack.c.l.b16 %v621
        %v805 = vunpack.c.h.b16 %v621
        %v806 = vpack.c.b16 %v792, %v790
        %v807 = vpack.c.b16 %v793, %v791
        %v808 = vpack.c.b16 %v796, %v794
        %v809 = vpack.c.b16 %v797, %v795
        %v810 = vpack.c.b16 %v800, %v798
        %v811 = vpack.c.b16 %v801, %v799
        %v812 = vpack.c.b16 %v804, %v802
        %v813 = vpack.c.b16 %v805, %v803
        %vm822 = vcmask 523264
        %v824 = vsel %vm822, %v750, 0
        %v827 = vsel %vm822, %v751, 0
        %v830 = vsel %vm822, %v752, 0
        %v833 = vsel %vm822, %v753, 0
        %v836 = vsel %vm822, %v754, 0
        %v839 = vsel %vm822, %v755, 0
        %v842 = vsel %vm822, %v756, 0
        %v845 = vsel %vm822, %v757, 0
        %v848 = vsel %vm822, %v758, 0
        %v851 = vsel %vm822, %v759, 0
        %v854 = vsel %vm822, %v760, 0
        %v857 = vsel %vm822, %v761, 0
        %v860 = vsel %vm822, %v762, 0
        %v863 = vsel %vm822, %v763, 0
        %v866 = vsel %vm822, %v764, 0
        %v869 = vsel %vm822, %v765, 0
        %v872 = vsel %vm822, %v766, 0
        %v875 = vsel %vm822, %v767, 0
        %v878 = vsel %vm822, %v768, 0
        %v881 = vsel %vm822, %v769, 0
        %v884 = vsel %vm822, %v770, 0
        %v887 = vsel %vm822, %v771, 0
        %v890 = vsel %vm822, %v772, 0
        %v893 = vsel %vm822, %v773, 0
        %v896 = vsel %vm822, %v774, 0
        %v899 = vsel %vm822, %v775, 0
        %v902 = vsel %vm822, %v776, 0
        %v905 = vsel %vm822, %v777, 0
        %v908 = vsel %vm822, %v778, 0
        %v911 = vsel %vm822, %v779, 0
        %v914 = vsel %vm822, %v780, 0
        %v917 = vsel %vm822, %v781, 0
        %919 = vmatprep.subr.bf16.mxu0 0
        %920 = vmatpush1.bf16.msra.mxu0 0
        %921 = vmatprep.subr.bf16.mxu0 0
        %922 = vmatpush1.bf16.msra.mxu0 0
        %923 = vmatprep.subr.bf16.mxu0 0
        %924 = vmatpush1.bf16.msra.mxu0 0
        %925 = vmatprep.subr.bf16.mxu0 0
        %926 = vmatpush1.bf16.msra.mxu0 0
        %927 = vmatprep.subr.bf16.mxu0 %v813
        %928 = vmatpush1.bf16.msra.mxu0 %v812
        %929 = vmatprep.subr.bf16.mxu0 %v811
        %930 = vmatpush1.bf16.msra.mxu0 %v810
        %931 = vmatprep.subr.bf16.mxu0 %v809
        %932 = vmatpush1.bf16.msra.mxu0 %v808
        %933 = vmatprep.subr.bf16.mxu0 %v807
        %934 = vmatpush1.bf16.msra.mxu0 %v806
        %935 = vmatprep.subr.bf16.mxu0 0
        %936 = vmatpush2.bf16.msra.mxu0 0
        %937 = vmatprep.subr.bf16.mxu0 0
        %938 = vmatpush2.bf16.msra.mxu0 0
        %939 = vmatprep.subr.bf16.mxu0 0
        %940 = vmatpush2.bf16.msra.mxu0 0
        %941 = vmatprep.subr.bf16.mxu0 0
        %942 = vmatpush2.bf16.msra.mxu0 0
        %943 = vmatprep.subr.bf16.mxu0 0
        %944 = vmatpush2.bf16.msra.mxu0 0
        %945 = vmatprep.subr.bf16.mxu0 0
        %946 = vmatpush2.bf16.msra.mxu0 0
        %947 = vmatprep.subr.bf16.mxu0 0
        %948 = vmatpush2.bf16.msra.mxu0 0
        %949 = vmatprep.subr.bf16.mxu0 0
        %950 = vmatpush2.bf16.msra.mxu0 0
        %951 = vmatprep.mubr.bf16.mxu0 0
        %952 = vmatmul.mubr.bf16.gmra.mxu0 %v824
        %v953 = vpop.f32.mrf.mxu0
        %v954 = vadd.f32 0.0, %v953
        %v955 = vpop.f32.mrf.mxu0
        %v956 = vadd.f32 0.0, %v955
        %v957 = vpop.f32.mrf.mxu0
        %v958 = vadd.f32 0.0, %v957
        %v959 = vpop.f32.mrf.mxu0
        %v960 = vadd.f32 0.0, %v959
        %961 = vmatprep.mubr.bf16.mxu0 0
        %962 = vmatmul.mubr.bf16.gmra.mxu0 %v827
        %v963 = vpop.f32.mrf.mxu0
        %v964 = vadd.f32 0.0, %v963
        %v965 = vpop.f32.mrf.mxu0
        %v966 = vadd.f32 0.0, %v965
        %v967 = vpop.f32.mrf.mxu0
        %v968 = vadd.f32 0.0, %v967
        %v969 = vpop.f32.mrf.mxu0
        %v970 = vadd.f32 0.0, %v969
        %971 = vmatprep.mubr.bf16.mxu0 0
        %972 = vmatmul.mubr.bf16.gmra.mxu0 %v830
        %v973 = vpop.f32.mrf.mxu0
        %v974 = vadd.f32 0.0, %v973
        %v975 = vpop.f32.mrf.mxu0
        %v976 = vadd.f32 0.0, %v975
        %v977 = vpop.f32.mrf.mxu0
        %v978 = vadd.f32 0.0, %v977
        %v979 = vpop.f32.mrf.mxu0
        %v980 = vadd.f32 0.0, %v979
        %981 = vmatprep.mubr.bf16.mxu0 0
        %982 = vmatmul.mubr.bf16.gmra.mxu0 %v833
        %v983 = vpop.f32.mrf.mxu0
        %v984 = vadd.f32 0.0, %v983
        %v985 = vpop.f32.mrf.mxu0
        %v986 = vadd.f32 0.0, %v985
        %v987 = vpop.f32.mrf.mxu0
        %v988 = vadd.f32 0.0, %v987
        %v989 = vpop.f32.mrf.mxu0
        %v990 = vadd.f32 0.0, %v989
        %991 = vmatprep.mubr.bf16.mxu0 0
        %992 = vmatmul.mubr.bf16.gmra.mxu0 %v836
        %v993 = vpop.f32.mrf.mxu0
        %v994 = vadd.f32 0.0, %v993
        %v995 = vpop.f32.mrf.mxu0
        %v996 = vadd.f32 0.0, %v995
        %v997 = vpop.f32.mrf.mxu0
        %v998 = vadd.f32 0.0, %v997
        %v999 = vpop.f32.mrf.mxu0
        %v1000 = vadd.f32 0.0, %v999
        %1001 = vmatprep.mubr.bf16.mxu0 0
        %1002 = vmatmul.mubr.bf16.gmra.mxu0 %v839
        %v1003 = vpop.f32.mrf.mxu0
        %v1004 = vadd.f32 0.0, %v1003
        %v1005 = vpop.f32.mrf.mxu0
        %v1006 = vadd.f32 0.0, %v1005
        %v1007 = vpop.f32.mrf.mxu0
        %v1008 = vadd.f32 0.0, %v1007
        %v1009 = vpop.f32.mrf.mxu0
        %v1010 = vadd.f32 0.0, %v1009
        %1011 = vmatprep.mubr.bf16.mxu0 0
        %1012 = vmatmul.mubr.bf16.gmra.mxu0 %v842
        %v1013 = vpop.f32.mrf.mxu0
        %v1014 = vadd.f32 0.0, %v1013
        %v1015 = vpop.f32.mrf.mxu0
        %v1016 = vadd.f32 0.0, %v1015
        %v1017 = vpop.f32.mrf.mxu0
        %v1018 = vadd.f32 0.0, %v1017
        %v1019 = vpop.f32.mrf.mxu0
        %v1020 = vadd.f32 0.0, %v1019
        %1021 = vmatprep.mubr.bf16.mxu0 0
        %1022 = vmatmul.mubr.bf16.gmra.mxu0 %v845
        %v1023 = vpop.f32.mrf.mxu0
        %v1024 = vadd.f32 0.0, %v1023
        %v1025 = vpop.f32.mrf.mxu0
        %v1026 = vadd.f32 0.0, %v1025
        %v1027 = vpop.f32.mrf.mxu0
        %v1028 = vadd.f32 0.0, %v1027
        %v1029 = vpop.f32.mrf.mxu0
        %v1030 = vadd.f32 0.0, %v1029
        %1031 = vmatprep.mubr.bf16.mxu0 0
        %1032 = vmatmul.mubr.bf16.gmra.mxu0 %v848
        %v1033 = vpop.f32.mrf.mxu0
        %v1034 = vadd.f32 0.0, %v1033
        %v1035 = vpop.f32.mrf.mxu0
        %v1036 = vadd.f32 0.0, %v1035
        %v1037 = vpop.f32.mrf.mxu0
        %v1038 = vadd.f32 0.0, %v1037
        %v1039 = vpop.f32.mrf.mxu0
        %v1040 = vadd.f32 0.0, %v1039
        %1041 = vmatprep.mubr.bf16.mxu0 0
        %1042 = vmatmul.mubr.bf16.gmra.mxu0 %v851
        %v1043 = vpop.f32.mrf.mxu0
        %v1044 = vadd.f32 0.0, %v1043
        %v1045 = vpop.f32.mrf.mxu0
        %v1046 = vadd.f32 0.0, %v1045
        %v1047 = vpop.f32.mrf.mxu0
        %v1048 = vadd.f32 0.0, %v1047
        %v1049 = vpop.f32.mrf.mxu0
        %v1050 = vadd.f32 0.0, %v1049
        %1051 = vmatprep.mubr.bf16.mxu0 0
        %1052 = vmatmul.mubr.bf16.gmra.mxu0 %v854
        %v1053 = vpop.f32.mrf.mxu0
        %v1054 = vadd.f32 0.0, %v1053
        %v1055 = vpop.f32.mrf.mxu0
        %v1056 = vadd.f32 0.0, %v1055
        %v1057 = vpop.f32.mrf.mxu0
        %v1058 = vadd.f32 0.0, %v1057
        %v1059 = vpop.f32.mrf.mxu0
        %v1060 = vadd.f32 0.0, %v1059
        %1061 = vmatprep.mubr.bf16.mxu0 0
        %1062 = vmatmul.mubr.bf16.gmra.mxu0 %v857
        %v1063 = vpop.f32.mrf.mxu0
        %v1064 = vadd.f32 0.0, %v1063
        %v1065 = vpop.f32.mrf.mxu0
        %v1066 = vadd.f32 0.0, %v1065
        %v1067 = vpop.f32.mrf.mxu0
        %v1068 = vadd.f32 0.0, %v1067
        %v1069 = vpop.f32.mrf.mxu0
        %v1070 = vadd.f32 0.0, %v1069
        %1071 = vmatprep.mubr.bf16.mxu0 0
        %1072 = vmatmul.mubr.bf16.gmra.mxu0 %v860
        %v1073 = vpop.f32.mrf.mxu0
        %v1074 = vadd.f32 0.0, %v1073
        %v1075 = vpop.f32.mrf.mxu0
        %v1076 = vadd.f32 0.0, %v1075
        %v1077 = vpop.f32.mrf.mxu0
        %v1078 = vadd.f32 0.0, %v1077
        %v1079 = vpop.f32.mrf.mxu0
        %v1080 = vadd.f32 0.0, %v1079
        %1081 = vmatprep.mubr.bf16.mxu0 0
        %1082 = vmatmul.mubr.bf16.gmra.mxu0 %v863
        %v1083 = vpop.f32.mrf.mxu0
        %v1084 = vadd.f32 0.0, %v1083
        %v1085 = vpop.f32.mrf.mxu0
        %v1086 = vadd.f32 0.0, %v1085
        %v1087 = vpop.f32.mrf.mxu0
        %v1088 = vadd.f32 0.0, %v1087
        %v1089 = vpop.f32.mrf.mxu0
        %v1090 = vadd.f32 0.0, %v1089
        %1091 = vmatprep.mubr.bf16.mxu0 0
        %1092 = vmatmul.mubr.bf16.gmra.mxu0 %v866
        %v1093 = vpop.f32.mrf.mxu0
        %v1094 = vadd.f32 0.0, %v1093
        %v1095 = vpop.f32.mrf.mxu0
        %v1096 = vadd.f32 0.0, %v1095
        %v1097 = vpop.f32.mrf.mxu0
        %v1098 = vadd.f32 0.0, %v1097
        %v1099 = vpop.f32.mrf.mxu0
        %v1100 = vadd.f32 0.0, %v1099
        %1101 = vmatprep.mubr.bf16.mxu0 0
        %1102 = vmatmul.mubr.bf16.gmra.mxu0 %v869
        %v1103 = vpop.f32.mrf.mxu0
        %v1104 = vadd.f32 0.0, %v1103
        %v1105 = vpop.f32.mrf.mxu0
        %v1106 = vadd.f32 0.0, %v1105
        %v1107 = vpop.f32.mrf.mxu0
        %v1108 = vadd.f32 0.0, %v1107
        %v1109 = vpop.f32.mrf.mxu0
        %v1110 = vadd.f32 0.0, %v1109
        %1111 = vmatprep.mubr.bf16.mxu0 0
        %1112 = vmatmul.mubr.bf16.gmra.mxu0 %v872
        %v1113 = vpop.f32.mrf.mxu0
        %v1114 = vadd.f32 0.0, %v1113
        %v1115 = vpop.f32.mrf.mxu0
        %v1116 = vadd.f32 0.0, %v1115
        %v1117 = vpop.f32.mrf.mxu0
        %v1118 = vadd.f32 0.0, %v1117
        %v1119 = vpop.f32.mrf.mxu0
        %v1120 = vadd.f32 0.0, %v1119
        %1121 = vmatprep.mubr.bf16.mxu0 0
        %1122 = vmatmul.mubr.bf16.gmra.mxu0 %v875
        %v1123 = vpop.f32.mrf.mxu0
        %v1124 = vadd.f32 0.0, %v1123
        %v1125 = vpop.f32.mrf.mxu0
        %v1126 = vadd.f32 0.0, %v1125
        %v1127 = vpop.f32.mrf.mxu0
        %v1128 = vadd.f32 0.0, %v1127
        %v1129 = vpop.f32.mrf.mxu0
        %v1130 = vadd.f32 0.0, %v1129
        %1131 = vmatprep.mubr.bf16.mxu0 0
        %1132 = vmatmul.mubr.bf16.gmra.mxu0 %v878
        %v1133 = vpop.f32.mrf.mxu0
        %v1134 = vadd.f32 0.0, %v1133
        %v1135 = vpop.f32.mrf.mxu0
        %v1136 = vadd.f32 0.0, %v1135
        %v1137 = vpop.f32.mrf.mxu0
        %v1138 = vadd.f32 0.0, %v1137
        %v1139 = vpop.f32.mrf.mxu0
        %v1140 = vadd.f32 0.0, %v1139
        %1141 = vmatprep.mubr.bf16.mxu0 0
        %1142 = vmatmul.mubr.bf16.gmra.mxu0 %v881
        %v1143 = vpop.f32.mrf.mxu0
        %v1144 = vadd.f32 0.0, %v1143
        %v1145 = vpop.f32.mrf.mxu0
        %v1146 = vadd.f32 0.0, %v1145
        %v1147 = vpop.f32.mrf.mxu0
        %v1148 = vadd.f32 0.0, %v1147
        %v1149 = vpop.f32.mrf.mxu0
        %v1150 = vadd.f32 0.0, %v1149
        %1151 = vmatprep.mubr.bf16.mxu0 0
        %1152 = vmatmul.mubr.bf16.gmra.mxu0 %v884
        %v1153 = vpop.f32.mrf.mxu0
        %v1154 = vadd.f32 0.0, %v1153
        %v1155 = vpop.f32.mrf.mxu0
        %v1156 = vadd.f32 0.0, %v1155
        %v1157 = vpop.f32.mrf.mxu0
        %v1158 = vadd.f32 0.0, %v1157
        %v1159 = vpop.f32.mrf.mxu0
        %v1160 = vadd.f32 0.0, %v1159
        %1161 = vmatprep.mubr.bf16.mxu0 0
        %1162 = vmatmul.mubr.bf16.gmra.mxu0 %v887
        %v1163 = vpop.f32.mrf.mxu0
        %v1164 = vadd.f32 0.0, %v1163
        %v1165 = vpop.f32.mrf.mxu0
        %v1166 = vadd.f32 0.0, %v1165
        %v1167 = vpop.f32.mrf.mxu0
        %v1168 = vadd.f32 0.0, %v1167
        %v1169 = vpop.f32.mrf.mxu0
        %v1170 = vadd.f32 0.0, %v1169
        %1171 = vmatprep.mubr.bf16.mxu0 0
        %1172 = vmatmul.mubr.bf16.gmra.mxu0 %v890
        %v1173 = vpop.f32.mrf.mxu0
        %v1174 = vadd.f32 0.0, %v1173
        %v1175 = vpop.f32.mrf.mxu0
        %v1176 = vadd.f32 0.0, %v1175
        %v1177 = vpop.f32.mrf.mxu0
        %v1178 = vadd.f32 0.0, %v1177
        %v1179 = vpop.f32.mrf.mxu0
        %v1180 = vadd.f32 0.0, %v1179
        %1181 = vmatprep.mubr.bf16.mxu0 0
        %1182 = vmatmul.mubr.bf16.gmra.mxu0 %v893
        %v1183 = vpop.f32.mrf.mxu0
        %v1184 = vadd.f32 0.0, %v1183
        %v1185 = vpop.f32.mrf.mxu0
        %v1186 = vadd.f32 0.0, %v1185
        %v1187 = vpop.f32.mrf.mxu0
        %v1188 = vadd.f32 0.0, %v1187
        %v1189 = vpop.f32.mrf.mxu0
        %v1190 = vadd.f32 0.0, %v1189
        %1191 = vmatprep.mubr.bf16.mxu0 0
        %1192 = vmatmul.mubr.bf16.gmra.mxu0 %v896
        %v1193 = vpop.f32.mrf.mxu0
        %v1194 = vadd.f32 0.0, %v1193
        %v1195 = vpop.f32.mrf.mxu0
        %v1196 = vadd.f32 0.0, %v1195
        %v1197 = vpop.f32.mrf.mxu0
        %v1198 = vadd.f32 0.0, %v1197
        %v1199 = vpop.f32.mrf.mxu0
        %v1200 = vadd.f32 0.0, %v1199
        %1201 = vmatprep.mubr.bf16.mxu0 0
        %1202 = vmatmul.mubr.bf16.gmra.mxu0 %v899
        %v1203 = vpop.f32.mrf.mxu0
        %v1204 = vadd.f32 0.0, %v1203
        %v1205 = vpop.f32.mrf.mxu0
        %v1206 = vadd.f32 0.0, %v1205
        %v1207 = vpop.f32.mrf.mxu0
        %v1208 = vadd.f32 0.0, %v1207
        %v1209 = vpop.f32.mrf.mxu0
        %v1210 = vadd.f32 0.0, %v1209
        %1211 = vmatprep.mubr.bf16.mxu0 0
        %1212 = vmatmul.mubr.bf16.gmra.mxu0 %v902
        %v1213 = vpop.f32.mrf.mxu0
        %v1214 = vadd.f32 0.0, %v1213
        %v1215 = vpop.f32.mrf.mxu0
        %v1216 = vadd.f32 0.0, %v1215
        %v1217 = vpop.f32.mrf.mxu0
        %v1218 = vadd.f32 0.0, %v1217
        %v1219 = vpop.f32.mrf.mxu0
        %v1220 = vadd.f32 0.0, %v1219
        %1221 = vmatprep.mubr.bf16.mxu0 0
        %1222 = vmatmul.mubr.bf16.gmra.mxu0 %v905
        %v1223 = vpop.f32.mrf.mxu0
        %v1224 = vadd.f32 0.0, %v1223
        %v1225 = vpop.f32.mrf.mxu0
        %v1226 = vadd.f32 0.0, %v1225
        %v1227 = vpop.f32.mrf.mxu0
        %v1228 = vadd.f32 0.0, %v1227
        %v1229 = vpop.f32.mrf.mxu0
        %v1230 = vadd.f32 0.0, %v1229
        %1231 = vmatprep.mubr.bf16.mxu0 0
        %1232 = vmatmul.mubr.bf16.gmra.mxu0 %v908
        %v1233 = vpop.f32.mrf.mxu0
        %v1234 = vadd.f32 0.0, %v1233
        %v1235 = vpop.f32.mrf.mxu0
        %v1236 = vadd.f32 0.0, %v1235
        %v1237 = vpop.f32.mrf.mxu0
        %v1238 = vadd.f32 0.0, %v1237
        %v1239 = vpop.f32.mrf.mxu0
        %v1240 = vadd.f32 0.0, %v1239
        %1241 = vmatprep.mubr.bf16.mxu0 0
        %1242 = vmatmul.mubr.bf16.gmra.mxu0 %v911
        %v1243 = vpop.f32.mrf.mxu0
        %v1244 = vadd.f32 0.0, %v1243
        %v1245 = vpop.f32.mrf.mxu0
        %v1246 = vadd.f32 0.0, %v1245
        %v1247 = vpop.f32.mrf.mxu0
        %v1248 = vadd.f32 0.0, %v1247
        %v1249 = vpop.f32.mrf.mxu0
        %v1250 = vadd.f32 0.0, %v1249
        %1251 = vmatprep.mubr.bf16.mxu0 0
        %1252 = vmatmul.mubr.bf16.gmra.mxu0 %v914
        %v1253 = vpop.f32.mrf.mxu0
        %v1254 = vadd.f32 0.0, %v1253
        %v1255 = vpop.f32.mrf.mxu0
        %v1256 = vadd.f32 0.0, %v1255
        %v1257 = vpop.f32.mrf.mxu0
        %v1258 = vadd.f32 0.0, %v1257
        %v1259 = vpop.f32.mrf.mxu0
        %v1260 = vadd.f32 0.0, %v1259
        %1261 = vmatprep.mubr.bf16.mxu0 0
        %1262 = vmatmul.mubr.bf16.gmra.mxu0 %v917
        %v1263 = vpop.f32.mrf.mxu0
        %v1264 = vadd.f32 0.0, %v1263
        %v1265 = vpop.f32.mrf.mxu0
        %v1266 = vadd.f32 0.0, %v1265
        %v1267 = vpop.f32.mrf.mxu0
        %v1268 = vadd.f32 0.0, %v1267
        %v1269 = vpop.f32.mrf.mxu0
        %v1270 = vadd.f32 0.0, %v1269
        %1271 = vdwg.mxu0
        %v1272 = vld [vmem:[#allocation2] sm:$0x3]
        %v1273 = vmax.f32 %v954, %v964
        %v1274 = vmax.f32 %v958, %v968
        %v1275 = vmax.f32 %v1273, %v974
        %v1276 = vmax.f32 %v1274, %v978
        %v1277 = vmax.f32 %v1275, %v984
        %v1278 = vmax.f32 %v1276, %v988
        %v1279 = vmax.f32 %v1277, %v994
        %v1280 = vmax.f32 %v1278, %v998
        %v1281 = vmax.f32 %v1279, %v1004
        %v1282 = vmax.f32 %v1280, %v1008
        %v1283 = vmax.f32 %v1281, %v1014
        %v1284 = vmax.f32 %v1282, %v1018
        %v1285 = vmax.f32 %v1283, %v1024
        %v1286 = vmax.f32 %v1284, %v1028
        %v1287 = vmax.f32 %v1285, %v1034
        %v1288 = vmax.f32 %v1286, %v1038
        %v1289 = vmax.f32 %v1287, %v1044
        %v1290 = vmax.f32 %v1288, %v1048
        %v1291 = vmax.f32 %v1289, %v1054
        %v1292 = vmax.f32 %v1290, %v1058
        %v1293 = vmax.f32 %v1291, %v1064
        %v1294 = vmax.f32 %v1292, %v1068
        %v1295 = vmax.f32 %v1293, %v1074
        %v1296 = vmax.f32 %v1294, %v1078
        %v1297 = vmax.f32 %v1295, %v1084
        %v1298 = vmax.f32 %v1296, %v1088
        %v1299 = vmax.f32 %v1297, %v1094
        %v1300 = vmax.f32 %v1298, %v1098
        %v1301 = vmax.f32 %v1299, %v1104
        %v1302 = vmax.f32 %v1300, %v1108
        %v1303 = vmax.f32 %v1301, %v1114
        %v1304 = vmax.f32 %v1302, %v1118
        %v1305 = vmax.f32 %v1303, %v1124
        %v1306 = vmax.f32 %v1304, %v1128
        %v1307 = vmax.f32 %v1305, %v1134
        %v1308 = vmax.f32 %v1306, %v1138
        %v1309 = vmax.f32 %v1307, %v1144
        %v1310 = vmax.f32 %v1308, %v1148
        %v1311 = vmax.f32 %v1309, %v1154
        %v1312 = vmax.f32 %v1310, %v1158
        %v1313 = vmax.f32 %v1311, %v1164
        %v1314 = vmax.f32 %v1312, %v1168
        %v1315 = vmax.f32 %v1313, %v1174
        %v1316 = vmax.f32 %v1314, %v1178
        %v1317 = vmax.f32 %v1315, %v1184
        %v1318 = vmax.f32 %v1316, %v1188
        %v1319 = vmax.f32 %v1317, %v1194
        %v1320 = vmax.f32 %v1318, %v1198
        %v1321 = vmax.f32 %v1319, %v1204
        %v1322 = vmax.f32 %v1320, %v1208
        %v1323 = vmax.f32 %v1321, %v1214
        %v1324 = vmax.f32 %v1322, %v1218
        %v1325 = vmax.f32 %v1323, %v1224
        %v1326 = vmax.f32 %v1324, %v1228
        %v1327 = vmax.f32 %v1325, %v1234
        %v1328 = vmax.f32 %v1326, %v1238
        %v1329 = vmax.f32 %v1327, %v1244
        %v1330 = vmax.f32 %v1328, %v1248
        %v1331 = vmax.f32 %v1329, %v1254
        %v1332 = vmax.f32 %v1330, %v1258
        %v1333 = vmax.f32 %v1331, %v1264
        %v1334 = vmax.f32 %v1332, %v1268
        %v1335 = vmax.f32 %v1333, %v1334
        %v1336 = vrot.slane %v1335, 4
        %v1337 = vmax.f32 %v1335, %v1336
        %v1338 = vrot.slane %v1337, 2
        %v1339 = vmax.f32 %v1337, %v1338
        %v1340 = vrot.slane %v1339, 1
        %v1341 = vmax.f32 %v1339, %v1340
        %v1342 = vmax.f32 %v956, %v966
        %v1343 = vmax.f32 %v960, %v970
        %v1344 = vmax.f32 %v1342, %v976
        %v1345 = vmax.f32 %v1343, %v980
        %v1346 = vmax.f32 %v1344, %v986
        %v1347 = vmax.f32 %v1345, %v990
        %v1348 = vmax.f32 %v1346, %v996
        %v1349 = vmax.f32 %v1347, %v1000
        %v1350 = vmax.f32 %v1348, %v1006
        %v1351 = vmax.f32 %v1349, %v1010
        %v1352 = vmax.f32 %v1350, %v1016
        %v1353 = vmax.f32 %v1351, %v1020
        %v1354 = vmax.f32 %v1352, %v1026
        %v1355 = vmax.f32 %v1353, %v1030
        %v1356 = vmax.f32 %v1354, %v1036
        %v1357 = vmax.f32 %v1355, %v1040
        %v1358 = vmax.f32 %v1356, %v1046
        %v1359 = vmax.f32 %v1357, %v1050
        %v1360 = vmax.f32 %v1358, %v1056
        %v1361 = vmax.f32 %v1359, %v1060
        %v1362 = vmax.f32 %v1360, %v1066
        %v1363 = vmax.f32 %v1361, %v1070
        %v1364 = vmax.f32 %v1362, %v1076
        %v1365 = vmax.f32 %v1363, %v1080
        %v1366 = vmax.f32 %v1364, %v1086
        %v1367 = vmax.f32 %v1365, %v1090
        %v1368 = vmax.f32 %v1366, %v1096
        %v1369 = vmax.f32 %v1367, %v1100
        %v1370 = vmax.f32 %v1368, %v1106
        %v1371 = vmax.f32 %v1369, %v1110
        %v1372 = vmax.f32 %v1370, %v1116
        %v1373 = vmax.f32 %v1371, %v1120
        %v1374 = vmax.f32 %v1372, %v1126
        %v1375 = vmax.f32 %v1373, %v1130
        %v1376 = vmax.f32 %v1374, %v1136
        %v1377 = vmax.f32 %v1375, %v1140
        %v1378 = vmax.f32 %v1376, %v1146
        %v1379 = vmax.f32 %v1377, %v1150
        %v1380 = vmax.f32 %v1378, %v1156
        %v1381 = vmax.f32 %v1379, %v1160
        %v1382 = vmax.f32 %v1380, %v1166
        %v1383 = vmax.f32 %v1381, %v1170
        %v1384 = vmax.f32 %v1382, %v1176
        %v1385 = vmax.f32 %v1383, %v1180
        %v1386 = vmax.f32 %v1384, %v1186
        %v1387 = vmax.f32 %v1385, %v1190
        %v1388 = vmax.f32 %v1386, %v1196
        %v1389 = vmax.f32 %v1387, %v1200
        %v1390 = vmax.f32 %v1388, %v1206
        %v1391 = vmax.f32 %v1389, %v1210
        %v1392 = vmax.f32 %v1390, %v1216
        %v1393 = vmax.f32 %v1391, %v1220
        %v1394 = vmax.f32 %v1392, %v1226
        %v1395 = vmax.f32 %v1393, %v1230
        %v1396 = vmax.f32 %v1394, %v1236
        %v1397 = vmax.f32 %v1395, %v1240
        %v1398 = vmax.f32 %v1396, %v1246
        %v1399 = vmax.f32 %v1397, %v1250
        %v1400 = vmax.f32 %v1398, %v1256
        %v1401 = vmax.f32 %v1399, %v1260
        %v1402 = vmax.f32 %v1400, %v1266
        %v1403 = vmax.f32 %v1401, %v1270
        %v1404 = vmax.f32 %v1402, %v1403
        %v1405 = vrot.slane %v1404, 4
        %v1406 = vmax.f32 %v1404, %v1405
        %v1407 = vrot.slane %v1406, 2
        %v1408 = vmax.f32 %v1406, %v1407
        %v1409 = vrot.slane %v1408, 1
        %v1410 = vmax.f32 %v1408, %v1409
        %v1413 = vcombine.low %v1341, %v1410
        %v1415 = vunpack.c.l.s4 1966171168
        %v1416 = vunpack.c.0.s8 %v1415
        %v1417 = vlaneseq
        %v1418 = vshrl.u32 %v1417, 7
        %v1419 = vsub.s32 %v1416, %v1418
        %v1420 = vrot.slane %v1413, %v1419
        %v1422 = vunpack.c.l.s4 1966171168
        %v1423 = vunpack.c.0.s8 %v1422
        %v1424 = vlaneseq
        %v1425 = vshrl.u32 %v1424, 7
        %v1426 = vsub.s32 %v1423, %v1425
        %v1427 = vrot.slane %v1420, %v1426
        %v1429 = vmax.f32 %v1272, %v1427
        %v1430 = vsub.f32 %v1272, %v1429
        %v1431 = vmul.f32 %v1430, 1.442695
        %v1432 = vpow.pop %v1431
        %v1434 = vlaneseq
        %v1435 = vshrl.u32 %v1434, 7
        %v1436 = vsub.s32 0, %v1435
        %v1437 = vrot.slane %v1429, %v1436
        %v1438 = vlaneseq
        %v1439 = vshrl.u32 %v1438, 7
        %v1440 = vsub.s32 1, %v1439
        %v1441 = vrot.slane %v1429, %v1440
        %v1444 = vsub.f32 %v954, %v1437
        %v1445 = vsub.f32 %v956, %v1441
        %v1446 = vsub.f32 %v958, %v1437
        %v1447 = vsub.f32 %v960, %v1441
        %v1448 = vsub.f32 %v964, %v1437
        %v1449 = vsub.f32 %v966, %v1441
        %v1450 = vsub.f32 %v968, %v1437
        %v1451 = vsub.f32 %v970, %v1441
        %v1452 = vsub.f32 %v974, %v1437
        %v1453 = vsub.f32 %v976, %v1441
        %v1454 = vsub.f32 %v978, %v1437
        %v1455 = vsub.f32 %v980, %v1441
        %v1456 = vsub.f32 %v984, %v1437
        %v1457 = vsub.f32 %v986, %v1441
        %v1458 = vsub.f32 %v988, %v1437
        %v1459 = vsub.f32 %v990, %v1441
        %v1460 = vsub.f32 %v994, %v1437
        %v1461 = vsub.f32 %v996, %v1441
        %v1462 = vsub.f32 %v998, %v1437
        %v1463 = vsub.f32 %v1000, %v1441
        %v1464 = vsub.f32 %v1004, %v1437
        %v1465 = vsub.f32 %v1006, %v1441
        %v1466 = vsub.f32 %v1008, %v1437
        %v1467 = vsub.f32 %v1010, %v1441
        %v1468 = vsub.f32 %v1014, %v1437
        %v1469 = vsub.f32 %v1016, %v1441
        %v1470 = vsub.f32 %v1018, %v1437
        %v1471 = vsub.f32 %v1020, %v1441
        %v1472 = vsub.f32 %v1024, %v1437
        %v1473 = vsub.f32 %v1026, %v1441
        %v1474 = vsub.f32 %v1028, %v1437
        %v1475 = vsub.f32 %v1030, %v1441
        %v1476 = vsub.f32 %v1034, %v1437
        %v1477 = vsub.f32 %v1036, %v1441
        %v1478 = vsub.f32 %v1038, %v1437
        %v1479 = vsub.f32 %v1040, %v1441
        %v1480 = vsub.f32 %v1044, %v1437
        %v1481 = vsub.f32 %v1046, %v1441
        %v1482 = vsub.f32 %v1048, %v1437
        %v1483 = vsub.f32 %v1050, %v1441
        %v1484 = vsub.f32 %v1054, %v1437
        %v1485 = vsub.f32 %v1056, %v1441
        %v1486 = vsub.f32 %v1058, %v1437
        %v1487 = vsub.f32 %v1060, %v1441
        %v1488 = vsub.f32 %v1064, %v1437
        %v1489 = vsub.f32 %v1066, %v1441
        %v1490 = vsub.f32 %v1068, %v1437
        %v1491 = vsub.f32 %v1070, %v1441
        %v1492 = vsub.f32 %v1074, %v1437
        %v1493 = vsub.f32 %v1076, %v1441
        %v1494 = vsub.f32 %v1078, %v1437
        %v1495 = vsub.f32 %v1080, %v1441
        %v1496 = vsub.f32 %v1084, %v1437
        %v1497 = vsub.f32 %v1086, %v1441
        %v1498 = vsub.f32 %v1088, %v1437
        %v1499 = vsub.f32 %v1090, %v1441
        %v1500 = vsub.f32 %v1094, %v1437
        %v1501 = vsub.f32 %v1096, %v1441
        %v1502 = vsub.f32 %v1098, %v1437
        %v1503 = vsub.f32 %v1100, %v1441
        %v1504 = vsub.f32 %v1104, %v1437
        %v1505 = vsub.f32 %v1106, %v1441
        %v1506 = vsub.f32 %v1108, %v1437
        %v1507 = vsub.f32 %v1110, %v1441
        %v1508 = vsub.f32 %v1114, %v1437
        %v1509 = vsub.f32 %v1116, %v1441
        %v1510 = vsub.f32 %v1118, %v1437
        %v1511 = vsub.f32 %v1120, %v1441
        %v1512 = vsub.f32 %v1124, %v1437
        %v1513 = vsub.f32 %v1126, %v1441
        %v1514 = vsub.f32 %v1128, %v1437
        %v1515 = vsub.f32 %v1130, %v1441
        %v1516 = vsub.f32 %v1134, %v1437
        %v1517 = vsub.f32 %v1136, %v1441
        %v1518 = vsub.f32 %v1138, %v1437
        %v1519 = vsub.f32 %v1140, %v1441
        %v1520 = vsub.f32 %v1144, %v1437
        %v1521 = vsub.f32 %v1146, %v1441
        %v1522 = vsub.f32 %v1148, %v1437
        %v1523 = vsub.f32 %v1150, %v1441
        %v1524 = vsub.f32 %v1154, %v1437
        %v1525 = vsub.f32 %v1156, %v1441
        %v1526 = vsub.f32 %v1158, %v1437
        %v1527 = vsub.f32 %v1160, %v1441
        %v1528 = vsub.f32 %v1164, %v1437
        %v1529 = vsub.f32 %v1166, %v1441
        %v1530 = vsub.f32 %v1168, %v1437
        %v1531 = vsub.f32 %v1170, %v1441
        %v1532 = vsub.f32 %v1174, %v1437
        %v1533 = vsub.f32 %v1176, %v1441
        %v1534 = vsub.f32 %v1178, %v1437
        %v1535 = vsub.f32 %v1180, %v1441
        %v1536 = vsub.f32 %v1184, %v1437
        %v1537 = vsub.f32 %v1186, %v1441
        %v1538 = vsub.f32 %v1188, %v1437
        %v1539 = vsub.f32 %v1190, %v1441
        %v1540 = vsub.f32 %v1194, %v1437
        %v1541 = vsub.f32 %v1196, %v1441
        %v1542 = vsub.f32 %v1198, %v1437
        %v1543 = vsub.f32 %v1200, %v1441
        %v1544 = vsub.f32 %v1204, %v1437
        %v1545 = vsub.f32 %v1206, %v1441
        %v1546 = vsub.f32 %v1208, %v1437
        %v1547 = vsub.f32 %v1210, %v1441
        %v1548 = vsub.f32 %v1214, %v1437
        %v1549 = vsub.f32 %v1216, %v1441
        %v1550 = vsub.f32 %v1218, %v1437
        %v1551 = vsub.f32 %v1220, %v1441
        %v1552 = vsub.f32 %v1224, %v1437
        %v1553 = vsub.f32 %v1226, %v1441
        %v1554 = vsub.f32 %v1228, %v1437
        %v1555 = vsub.f32 %v1230, %v1441
        %v1556 = vsub.f32 %v1234, %v1437
        %v1557 = vsub.f32 %v1236, %v1441
        %v1558 = vsub.f32 %v1238, %v1437
        %v1559 = vsub.f32 %v1240, %v1441
        %v1560 = vsub.f32 %v1244, %v1437
        %v1561 = vsub.f32 %v1246, %v1441
        %v1562 = vsub.f32 %v1248, %v1437
        %v1563 = vsub.f32 %v1250, %v1441
        %v1564 = vsub.f32 %v1254, %v1437
        %v1565 = vsub.f32 %v1256, %v1441
        %v1566 = vsub.f32 %v1258, %v1437
        %v1567 = vsub.f32 %v1260, %v1441
        %v1568 = vsub.f32 %v1264, %v1437
        %v1569 = vsub.f32 %v1266, %v1441
        %v1570 = vsub.f32 %v1268, %v1437
        %v1571 = vsub.f32 %v1270, %v1441
        %v1572 = vmul.f32 %v1444, 1.442695
        %v1573 = vpow.pop %v1572
        %v1574 = vmul.f32 %v1445, 1.442695
        %v1575 = vpow.pop %v1574
        %v1576 = vmul.f32 %v1446, 1.442695
        %v1577 = vpow.pop %v1576
        %v1578 = vmul.f32 %v1447, 1.442695
        %v1579 = vpow.pop %v1578
        %v1580 = vmul.f32 %v1448, 1.442695
        %v1581 = vpow.pop %v1580
        %v1582 = vmul.f32 %v1449, 1.442695
        %v1583 = vpow.pop %v1582
        %v1584 = vmul.f32 %v1450, 1.442695
        %v1585 = vpow.pop %v1584
        %v1586 = vmul.f32 %v1451, 1.442695
        %v1587 = vpow.pop %v1586
        %v1588 = vmul.f32 %v1452, 1.442695
        %v1589 = vpow.pop %v1588
        %v1590 = vmul.f32 %v1453, 1.442695
        %v1591 = vpow.pop %v1590
        %v1592 = vmul.f32 %v1454, 1.442695
        %v1593 = vpow.pop %v1592
        %v1594 = vmul.f32 %v1455, 1.442695
        %v1595 = vpow.pop %v1594
        %v1596 = vmul.f32 %v1456, 1.442695
        %v1597 = vpow.pop %v1596
        %v1598 = vmul.f32 %v1457, 1.442695
        %v1599 = vpow.pop %v1598
        %v1600 = vmul.f32 %v1458, 1.442695
        %v1601 = vpow.pop %v1600
        %v1602 = vmul.f32 %v1459, 1.442695
        %v1603 = vpow.pop %v1602
        %v1604 = vmul.f32 %v1460, 1.442695
        %v1605 = vpow.pop %v1604
        %v1606 = vmul.f32 %v1461, 1.442695
        %v1607 = vpow.pop %v1606
        %v1608 = vmul.f32 %v1462, 1.442695
        %v1609 = vpow.pop %v1608
        %v1610 = vmul.f32 %v1463, 1.442695
        %v1611 = vpow.pop %v1610
        %v1612 = vmul.f32 %v1464, 1.442695
        %v1613 = vpow.pop %v1612
        %v1614 = vmul.f32 %v1465, 1.442695
        %v1615 = vpow.pop %v1614
        %v1616 = vmul.f32 %v1466, 1.442695
        %v1617 = vpow.pop %v1616
        %v1618 = vmul.f32 %v1467, 1.442695
        %v1619 = vpow.pop %v1618
        %v1620 = vmul.f32 %v1468, 1.442695
        %v1621 = vpow.pop %v1620
        %v1622 = vmul.f32 %v1469, 1.442695
        %v1623 = vpow.pop %v1622
        %v1624 = vmul.f32 %v1470, 1.442695
        %v1625 = vpow.pop %v1624
        %v1626 = vmul.f32 %v1471, 1.442695
        %v1627 = vpow.pop %v1626
        %v1628 = vmul.f32 %v1472, 1.442695
        %v1629 = vpow.pop %v1628
        %v1630 = vmul.f32 %v1473, 1.442695
        %v1631 = vpow.pop %v1630
        %v1632 = vmul.f32 %v1474, 1.442695
        %v1633 = vpow.pop %v1632
        %v1634 = vmul.f32 %v1475, 1.442695
        %v1635 = vpow.pop %v1634
        %v1636 = vmul.f32 %v1476, 1.442695
        %v1637 = vpow.pop %v1636
        %v1638 = vmul.f32 %v1477, 1.442695
        %v1639 = vpow.pop %v1638
        %v1640 = vmul.f32 %v1478, 1.442695
        %v1641 = vpow.pop %v1640
        %v1642 = vmul.f32 %v1479, 1.442695
        %v1643 = vpow.pop %v1642
        %v1644 = vmul.f32 %v1480, 1.442695
        %v1645 = vpow.pop %v1644
        %v1646 = vmul.f32 %v1481, 1.442695
        %v1647 = vpow.pop %v1646
        %v1648 = vmul.f32 %v1482, 1.442695
        %v1649 = vpow.pop %v1648
        %v1650 = vmul.f32 %v1483, 1.442695
        %v1651 = vpow.pop %v1650
        %v1652 = vmul.f32 %v1484, 1.442695
        %v1653 = vpow.pop %v1652
        %v1654 = vmul.f32 %v1485, 1.442695
        %v1655 = vpow.pop %v1654
        %v1656 = vmul.f32 %v1486, 1.442695
        %v1657 = vpow.pop %v1656
        %v1658 = vmul.f32 %v1487, 1.442695
        %v1659 = vpow.pop %v1658
        %v1660 = vmul.f32 %v1488, 1.442695
        %v1661 = vpow.pop %v1660
        %v1662 = vmul.f32 %v1489, 1.442695
        %v1663 = vpow.pop %v1662
        %v1664 = vmul.f32 %v1490, 1.442695
        %v1665 = vpow.pop %v1664
        %v1666 = vmul.f32 %v1491, 1.442695
        %v1667 = vpow.pop %v1666
        %v1668 = vmul.f32 %v1492, 1.442695
        %v1669 = vpow.pop %v1668
        %v1670 = vmul.f32 %v1493, 1.442695
        %v1671 = vpow.pop %v1670
        %v1672 = vmul.f32 %v1494, 1.442695
        %v1673 = vpow.pop %v1672
        %v1674 = vmul.f32 %v1495, 1.442695
        %v1675 = vpow.pop %v1674
        %v1676 = vmul.f32 %v1496, 1.442695
        %v1677 = vpow.pop %v1676
        %v1678 = vmul.f32 %v1497, 1.442695
        %v1679 = vpow.pop %v1678
        %v1680 = vmul.f32 %v1498, 1.442695
        %v1681 = vpow.pop %v1680
        %v1682 = vmul.f32 %v1499, 1.442695
        %v1683 = vpow.pop %v1682
        %v1684 = vmul.f32 %v1500, 1.442695
        %v1685 = vpow.pop %v1684
        %v1686 = vmul.f32 %v1501, 1.442695
        %v1687 = vpow.pop %v1686
        %v1688 = vmul.f32 %v1502, 1.442695
        %v1689 = vpow.pop %v1688
        %v1690 = vmul.f32 %v1503, 1.442695
        %v1691 = vpow.pop %v1690
        %v1692 = vmul.f32 %v1504, 1.442695
        %v1693 = vpow.pop %v1692
        %v1694 = vmul.f32 %v1505, 1.442695
        %v1695 = vpow.pop %v1694
        %v1696 = vmul.f32 %v1506, 1.442695
        %v1697 = vpow.pop %v1696
        %v1698 = vmul.f32 %v1507, 1.442695
        %v1699 = vpow.pop %v1698
        %v1700 = vmul.f32 %v1508, 1.442695
        %v1701 = vpow.pop %v1700
        %v1702 = vmul.f32 %v1509, 1.442695
        %v1703 = vpow.pop %v1702
        %v1704 = vmul.f32 %v1510, 1.442695
        %v1705 = vpow.pop %v1704
        %v1706 = vmul.f32 %v1511, 1.442695
        %v1707 = vpow.pop %v1706
        %v1708 = vmul.f32 %v1512, 1.442695
        %v1709 = vpow.pop %v1708
        %v1710 = vmul.f32 %v1513, 1.442695
        %v1711 = vpow.pop %v1710
        %v1712 = vmul.f32 %v1514, 1.442695
        %v1713 = vpow.pop %v1712
        %v1714 = vmul.f32 %v1515, 1.442695
        %v1715 = vpow.pop %v1714
        %v1716 = vmul.f32 %v1516, 1.442695
        %v1717 = vpow.pop %v1716
        %v1718 = vmul.f32 %v1517, 1.442695
        %v1719 = vpow.pop %v1718
        %v1720 = vmul.f32 %v1518, 1.442695
        %v1721 = vpow.pop %v1720
        %v1722 = vmul.f32 %v1519, 1.442695
        %v1723 = vpow.pop %v1722
        %v1724 = vmul.f32 %v1520, 1.442695
        %v1725 = vpow.pop %v1724
        %v1726 = vmul.f32 %v1521, 1.442695
        %v1727 = vpow.pop %v1726
        %v1728 = vmul.f32 %v1522, 1.442695
        %v1729 = vpow.pop %v1728
        %v1730 = vmul.f32 %v1523, 1.442695
        %v1731 = vpow.pop %v1730
        %v1732 = vmul.f32 %v1524, 1.442695
        %v1733 = vpow.pop %v1732
        %v1734 = vmul.f32 %v1525, 1.442695
        %v1735 = vpow.pop %v1734
        %v1736 = vmul.f32 %v1526, 1.442695
        %v1737 = vpow.pop %v1736
        %v1738 = vmul.f32 %v1527, 1.442695
        %v1739 = vpow.pop %v1738
        %v1740 = vmul.f32 %v1528, 1.442695
        %v1741 = vpow.pop %v1740
        %v1742 = vmul.f32 %v1529, 1.442695
        %v1743 = vpow.pop %v1742
        %v1744 = vmul.f32 %v1530, 1.442695
        %v1745 = vpow.pop %v1744
        %v1746 = vmul.f32 %v1531, 1.442695
        %v1747 = vpow.pop %v1746
        %v1748 = vmul.f32 %v1532, 1.442695
        %v1749 = vpow.pop %v1748
        %v1750 = vmul.f32 %v1533, 1.442695
        %v1751 = vpow.pop %v1750
        %v1752 = vmul.f32 %v1534, 1.442695
        %v1753 = vpow.pop %v1752
        %v1754 = vmul.f32 %v1535, 1.442695
        %v1755 = vpow.pop %v1754
        %v1756 = vmul.f32 %v1536, 1.442695
        %v1757 = vpow.pop %v1756
        %v1758 = vmul.f32 %v1537, 1.442695
        %v1759 = vpow.pop %v1758
        %v1760 = vmul.f32 %v1538, 1.442695
        %v1761 = vpow.pop %v1760
        %v1762 = vmul.f32 %v1539, 1.442695
        %v1763 = vpow.pop %v1762
        %v1764 = vmul.f32 %v1540, 1.442695
        %v1765 = vpow.pop %v1764
        %v1766 = vmul.f32 %v1541, 1.442695
        %v1767 = vpow.pop %v1766
        %v1768 = vmul.f32 %v1542, 1.442695
        %v1769 = vpow.pop %v1768
        %v1770 = vmul.f32 %v1543, 1.442695
        %v1771 = vpow.pop %v1770
        %v1772 = vmul.f32 %v1544, 1.442695
        %v1773 = vpow.pop %v1772
        %v1774 = vmul.f32 %v1545, 1.442695
        %v1775 = vpow.pop %v1774
        %v1776 = vmul.f32 %v1546, 1.442695
        %v1777 = vpow.pop %v1776
        %v1778 = vmul.f32 %v1547, 1.442695
        %v1779 = vpow.pop %v1778
        %v1780 = vmul.f32 %v1548, 1.442695
        %v1781 = vpow.pop %v1780
        %v1782 = vmul.f32 %v1549, 1.442695
        %v1783 = vpow.pop %v1782
        %v1784 = vmul.f32 %v1550, 1.442695
        %v1785 = vpow.pop %v1784
        %v1786 = vmul.f32 %v1551, 1.442695
        %v1787 = vpow.pop %v1786
        %v1788 = vmul.f32 %v1552, 1.442695
        %v1789 = vpow.pop %v1788
        %v1790 = vmul.f32 %v1553, 1.442695
        %v1791 = vpow.pop %v1790
        %v1792 = vmul.f32 %v1554, 1.442695
        %v1793 = vpow.pop %v1792
        %v1794 = vmul.f32 %v1555, 1.442695
        %v1795 = vpow.pop %v1794
        %v1796 = vmul.f32 %v1556, 1.442695
        %v1797 = vpow.pop %v1796
        %v1798 = vmul.f32 %v1557, 1.442695
        %v1799 = vpow.pop %v1798
        %v1800 = vmul.f32 %v1558, 1.442695
        %v1801 = vpow.pop %v1800
        %v1802 = vmul.f32 %v1559, 1.442695
        %v1803 = vpow.pop %v1802
        %v1804 = vmul.f32 %v1560, 1.442695
        %v1805 = vpow.pop %v1804
        %v1806 = vmul.f32 %v1561, 1.442695
        %v1807 = vpow.pop %v1806
        %v1808 = vmul.f32 %v1562, 1.442695
        %v1809 = vpow.pop %v1808
        %v1810 = vmul.f32 %v1563, 1.442695
        %v1811 = vpow.pop %v1810
        %v1812 = vmul.f32 %v1564, 1.442695
        %v1813 = vpow.pop %v1812
        %v1814 = vmul.f32 %v1565, 1.442695
        %v1815 = vpow.pop %v1814
        %v1816 = vmul.f32 %v1566, 1.442695
        %v1817 = vpow.pop %v1816
        %v1818 = vmul.f32 %v1567, 1.442695
        %v1819 = vpow.pop %v1818
        %v1820 = vmul.f32 %v1568, 1.442695
        %v1821 = vpow.pop %v1820
        %v1822 = vmul.f32 %v1569, 1.442695
        %v1823 = vpow.pop %v1822
        %v1824 = vmul.f32 %v1570, 1.442695
        %v1825 = vpow.pop %v1824
        %v1826 = vmul.f32 %v1571, 1.442695
        %v1827 = vpow.pop %v1826
        %v1828 = vld [vmem:[#allocation3] sm:$0x3]
        %v1829 = vmul.f32 %v1432, %v1828
        %v1830 = vadd.f32 %v1573, %v1577
        %v1831 = vadd.f32 %v1830, %v1581
        %v1832 = vadd.f32 %v1831, %v1585
        %v1833 = vadd.f32 %v1832, %v1589
        %v1834 = vadd.f32 %v1833, %v1593
        %v1835 = vadd.f32 %v1834, %v1597
        %v1836 = vadd.f32 %v1835, %v1601
        %v1837 = vadd.f32 %v1836, %v1605
        %v1838 = vadd.f32 %v1837, %v1609
        %v1839 = vadd.f32 %v1838, %v1613
        %v1840 = vadd.f32 %v1839, %v1617
        %v1841 = vadd.f32 %v1840, %v1621
        %v1842 = vadd.f32 %v1841, %v1625
        %v1843 = vadd.f32 %v1842, %v1629
        %v1844 = vadd.f32 %v1843, %v1633
        %v1845 = vadd.f32 %v1844, %v1637
        %v1846 = vadd.f32 %v1845, %v1641
        %v1847 = vadd.f32 %v1846, %v1645
        %v1848 = vadd.f32 %v1847, %v1649
        %v1849 = vadd.f32 %v1848, %v1653
        %v1850 = vadd.f32 %v1849, %v1657
        %v1851 = vadd.f32 %v1850, %v1661
        %v1852 = vadd.f32 %v1851, %v1665
        %v1853 = vadd.f32 %v1852, %v1669
        %v1854 = vadd.f32 %v1853, %v1673
        %v1855 = vadd.f32 %v1854, %v1677
        %v1856 = vadd.f32 %v1855, %v1681
        %v1857 = vadd.f32 %v1856, %v1685
        %v1858 = vadd.f32 %v1857, %v1689
        %v1859 = vadd.f32 %v1858, %v1693
        %v1860 = vadd.f32 %v1859, %v1697
        %v1861 = vadd.f32 %v1860, %v1701
        %v1862 = vadd.f32 %v1861, %v1705
        %v1863 = vadd.f32 %v1862, %v1709
        %v1864 = vadd.f32 %v1863, %v1713
        %v1865 = vadd.f32 %v1864, %v1717
        %v1866 = vadd.f32 %v1865, %v1721
        %v1867 = vadd.f32 %v1866, %v1725
        %v1868 = vadd.f32 %v1867, %v1729
        %v1869 = vadd.f32 %v1868, %v1733
        %v1870 = vadd.f32 %v1869, %v1737
        %v1871 = vadd.f32 %v1870, %v1741
        %v1872 = vadd.f32 %v1871, %v1745
        %v1873 = vadd.f32 %v1872, %v1749
        %v1874 = vadd.f32 %v1873, %v1753
        %v1875 = vadd.f32 %v1874, %v1757
        %v1876 = vadd.f32 %v1875, %v1761
        %v1877 = vadd.f32 %v1876, %v1765
        %v1878 = vadd.f32 %v1877, %v1769
        %v1879 = vadd.f32 %v1878, %v1773
        %v1880 = vadd.f32 %v1879, %v1777
        %v1881 = vadd.f32 %v1880, %v1781
        %v1882 = vadd.f32 %v1881, %v1785
        %v1883 = vadd.f32 %v1882, %v1789
        %v1884 = vadd.f32 %v1883, %v1793
        %v1885 = vadd.f32 %v1884, %v1797
        %v1886 = vadd.f32 %v1885, %v1801
        %v1887 = vadd.f32 %v1886, %v1805
        %v1888 = vadd.f32 %v1887, %v1809
        %v1889 = vadd.f32 %v1888, %v1813
        %v1890 = vadd.f32 %v1889, %v1817
        %v1891 = vadd.f32 %v1890, %v1821
        %v1892 = vadd.f32 %v1891, %v1825
        %v1893 = vrot.slane %v1892, 4
        %v1894 = vadd.f32 %v1892, %v1893
        %v1895 = vrot.slane %v1894, 2
        %v1896 = vadd.f32 %v1894, %v1895
        %v1897 = vrot.slane %v1896, 1
        %v1898 = vadd.f32 %v1896, %v1897
        %v1899 = vadd.f32 %v1575, %v1579
        %v1900 = vadd.f32 %v1899, %v1583
        %v1901 = vadd.f32 %v1900, %v1587
        %v1902 = vadd.f32 %v1901, %v1591
        %v1903 = vadd.f32 %v1902, %v1595
        %v1904 = vadd.f32 %v1903, %v1599
        %v1905 = vadd.f32 %v1904, %v1603
        %v1906 = vadd.f32 %v1905, %v1607
        %v1907 = vadd.f32 %v1906, %v1611
        %v1908 = vadd.f32 %v1907, %v1615
        %v1909 = vadd.f32 %v1908, %v1619
        %v1910 = vadd.f32 %v1909, %v1623
        %v1911 = vadd.f32 %v1910, %v1627
        %v1912 = vadd.f32 %v1911, %v1631
        %v1913 = vadd.f32 %v1912, %v1635
        %v1914 = vadd.f32 %v1913, %v1639
        %v1915 = vadd.f32 %v1914, %v1643
        %v1916 = vadd.f32 %v1915, %v1647
        %v1917 = vadd.f32 %v1916, %v1651
        %v1918 = vadd.f32 %v1917, %v1655
        %v1919 = vadd.f32 %v1918, %v1659
        %v1920 = vadd.f32 %v1919, %v1663
        %v1921 = vadd.f32 %v1920, %v1667
        %v1922 = vadd.f32 %v1921, %v1671
        %v1923 = vadd.f32 %v1922, %v1675
        %v1924 = vadd.f32 %v1923, %v1679
        %v1925 = vadd.f32 %v1924, %v1683
        %v1926 = vadd.f32 %v1925, %v1687
        %v1927 = vadd.f32 %v1926, %v1691
        %v1928 = vadd.f32 %v1927, %v1695
        %v1929 = vadd.f32 %v1928, %v1699
        %v1930 = vadd.f32 %v1929, %v1703
        %v1931 = vadd.f32 %v1930, %v1707
        %v1932 = vadd.f32 %v1931, %v1711
        %v1933 = vadd.f32 %v1932, %v1715
        %v1934 = vadd.f32 %v1933, %v1719
        %v1935 = vadd.f32 %v1934, %v1723
        %v1936 = vadd.f32 %v1935, %v1727
        %v1937 = vadd.f32 %v1936, %v1731
        %v1938 = vadd.f32 %v1937, %v1735
        %v1939 = vadd.f32 %v1938, %v1739
        %v1940 = vadd.f32 %v1939, %v1743
        %v1941 = vadd.f32 %v1940, %v1747
        %v1942 = vadd.f32 %v1941, %v1751
        %v1943 = vadd.f32 %v1942, %v1755
        %v1944 = vadd.f32 %v1943, %v1759
        %v1945 = vadd.f32 %v1944, %v1763
        %v1946 = vadd.f32 %v1945, %v1767
        %v1947 = vadd.f32 %v1946, %v1771
        %v1948 = vadd.f32 %v1947, %v1775
        %v1949 = vadd.f32 %v1948, %v1779
        %v1950 = vadd.f32 %v1949, %v1783
        %v1951 = vadd.f32 %v1950, %v1787
        %v1952 = vadd.f32 %v1951, %v1791
        %v1953 = vadd.f32 %v1952, %v1795
        %v1954 = vadd.f32 %v1953, %v1799
        %v1955 = vadd.f32 %v1954, %v1803
        %v1956 = vadd.f32 %v1955, %v1807
        %v1957 = vadd.f32 %v1956, %v1811
        %v1958 = vadd.f32 %v1957, %v1815
        %v1959 = vadd.f32 %v1958, %v1819
        %v1960 = vadd.f32 %v1959, %v1823
        %v1961 = vadd.f32 %v1960, %v1827
        %v1962 = vrot.slane %v1961, 4
        %v1963 = vadd.f32 %v1961, %v1962
        %v1964 = vrot.slane %v1963, 2
        %v1965 = vadd.f32 %v1963, %v1964
        %v1966 = vrot.slane %v1965, 1
        %v1967 = vadd.f32 %v1965, %v1966
        %v1970 = vcombine.low %v1898, %v1967
        %v1972 = vunpack.c.l.s4 1966171168
        %v1973 = vunpack.c.0.s8 %v1972
        %v1974 = vlaneseq
        %v1975 = vshrl.u32 %v1974, 7
        %v1976 = vsub.s32 %v1973, %v1975
        %v1977 = vrot.slane %v1970, %v1976
        %v1979 = vunpack.c.l.s4 1966171168
        %v1980 = vunpack.c.0.s8 %v1979
        %v1981 = vlaneseq
        %v1982 = vshrl.u32 %v1981, 7
        %v1983 = vsub.s32 %v1980, %v1982
        %v1984 = vrot.slane %v1977, %v1983
        %v1986 = vadd.f32 %v1829, %v1984
        %v1987 = vlaneseq
        %vm1988 = vcmp.ge.s32.totalorder %v1987, 0
        %vm1989 = vcmp.lt.s32.totalorder %v1987, 256
        %vm1990 = vmand %vm1988, %vm1989
        %1991 = vst.msk [vmem:[#allocation3] sm:$0x3] %vm1990, %v1986
        %v1992 = vld [vmem:[#allocation4] sm:$0xff]
        %v1993 = vld [vmem:[#allocation4 + $0x8] sm:$0xff]
        %v1994 = vld [vmem:[#allocation4 + $0x10] sm:$0xff]
        %v1995 = vld [vmem:[#allocation4 + $0x18] sm:$0xff]
        %v1996 = vld [vmem:[#allocation4 + $0x20] sm:$0xff]
        %v1997 = vld [vmem:[#allocation4 + $0x28] sm:$0xff]
        %v1998 = vld [vmem:[#allocation4 + $0x30] sm:$0xff]
        %v1999 = vld [vmem:[#allocation4 + $0x38] sm:$0xff]
        %v2000 = vld [vmem:[#allocation4 + $0x40] sm:$0xff]
        %v2001 = vld [vmem:[#allocation4 + $0x48] sm:$0xff]
        %v2002 = vld [vmem:[#allocation4 + $0x50] sm:$0xff]
        %v2003 = vld [vmem:[#allocation4 + $0x58] sm:$0xff]
        %v2004 = vld [vmem:[#allocation4 + $0x60] sm:$0xff]
        %v2005 = vld [vmem:[#allocation4 + $0x68] sm:$0xff]
        %v2006 = vld [vmem:[#allocation4 + $0x70] sm:$0xff]
        %v2007 = vld [vmem:[#allocation4 + $0x78] sm:$0xff]
        %v2009 = vlaneseq
        %v2010 = vshrl.u32 %v2009, 7
        %v2011 = vsub.s32 0, %v2010
        %v2012 = vrot.slane %v1432, %v2011
        %v2013 = vlaneseq
        %v2014 = vshrl.u32 %v2013, 7
        %v2015 = vsub.s32 1, %v2014
        %v2016 = vrot.slane %v1432, %v2015
        %v2019 = vmul.f32 %v2012, %v1992
        %v2020 = vmul.f32 %v2016, %v1993
        %v2021 = vmul.f32 %v2012, %v1994
        %v2022 = vmul.f32 %v2016, %v1995
        %v2023 = vmul.f32 %v2012, %v1996
        %v2024 = vmul.f32 %v2016, %v1997
        %v2025 = vmul.f32 %v2012, %v1998
        %v2026 = vmul.f32 %v2016, %v1999
        %v2027 = vmul.f32 %v2012, %v2000
        %v2028 = vmul.f32 %v2016, %v2001
        %v2029 = vmul.f32 %v2012, %v2002
        %v2030 = vmul.f32 %v2016, %v2003
        %v2031 = vmul.f32 %v2012, %v2004
        %v2032 = vmul.f32 %v2016, %v2005
        %v2033 = vmul.f32 %v2012, %v2006
        %v2034 = vmul.f32 %v2016, %v2007
        %v2035 = vld [vmem:[%s459] sm:$0xff]
        %v2036 = vld [vmem:[%s459 + $0x8] sm:$0xff]
        %v2037 = vld [vmem:[%s459 + $0x10] sm:$0xff]
        %v2038 = vld [vmem:[%s459 + $0x18] sm:$0xff]
        %v2039 = vld [vmem:[%s459 + $0x20] sm:$0xff]
        %v2040 = vld [vmem:[%s459 + $0x28] sm:$0xff]
        %v2041 = vld [vmem:[%s459 + $0x30] sm:$0xff]
        %v2042 = vld [vmem:[%s459 + $0x38] sm:$0xff]
        %v2043 = vld [vmem:[%s459 + $0x40] sm:$0xff]
        %v2044 = vld [vmem:[%s459 + $0x48] sm:$0xff]
        %v2045 = vld [vmem:[%s459 + $0x50] sm:$0xff]
        %v2046 = vld [vmem:[%s459 + $0x58] sm:$0xff]
        %v2047 = vld [vmem:[%s459 + $0x60] sm:$0xff]
        %v2048 = vld [vmem:[%s459 + $0x68] sm:$0xff]
        %v2049 = vld [vmem:[%s459 + $0x70] sm:$0xff]
        %v2050 = vld [vmem:[%s459 + $0x78] sm:$0xff]
        %v2051 = vpack.c.bf16 %v1577, %v1573
        %v2052 = vpack.c.bf16 %v1579, %v1575
        %v2053 = vpack.c.bf16 %v1585, %v1581
        %v2054 = vpack.c.bf16 %v1587, %v1583
        %v2055 = vpack.c.bf16 %v1593, %v1589
        %v2056 = vpack.c.bf16 %v1595, %v1591
        %v2057 = vpack.c.bf16 %v1601, %v1597
        %v2058 = vpack.c.bf16 %v1603, %v1599
        %v2059 = vpack.c.bf16 %v1609, %v1605
        %v2060 = vpack.c.bf16 %v1611, %v1607
        %v2061 = vpack.c.bf16 %v1617, %v1613
        %v2062 = vpack.c.bf16 %v1619, %v1615
        %v2063 = vpack.c.bf16 %v1625, %v1621
        %v2064 = vpack.c.bf16 %v1627, %v1623
        %v2065 = vpack.c.bf16 %v1633, %v1629
        %v2066 = vpack.c.bf16 %v1635, %v1631
        %v2067 = vpack.c.bf16 %v1641, %v1637
        %v2068 = vpack.c.bf16 %v1643, %v1639
        %v2069 = vpack.c.bf16 %v1649, %v1645
        %v2070 = vpack.c.bf16 %v1651, %v1647
        %v2071 = vpack.c.bf16 %v1657, %v1653
        %v2072 = vpack.c.bf16 %v1659, %v1655
        %v2073 = vpack.c.bf16 %v1665, %v1661
        %v2074 = vpack.c.bf16 %v1667, %v1663
        %v2075 = vpack.c.bf16 %v1673, %v1669
        %v2076 = vpack.c.bf16 %v1675, %v1671
        %v2077 = vpack.c.bf16 %v1681, %v1677
        %v2078 = vpack.c.bf16 %v1683, %v1679
        %v2079 = vpack.c.bf16 %v1689, %v1685
        %v2080 = vpack.c.bf16 %v1691, %v1687
        %v2081 = vpack.c.bf16 %v1697, %v1693
        %v2082 = vpack.c.bf16 %v1699, %v1695
        %v2083 = vpack.c.bf16 %v1705, %v1701
        %v2084 = vpack.c.bf16 %v1707, %v1703
        %v2085 = vpack.c.bf16 %v1713, %v1709
        %v2086 = vpack.c.bf16 %v1715, %v1711
        %v2087 = vpack.c.bf16 %v1721, %v1717
        %v2088 = vpack.c.bf16 %v1723, %v1719
        %v2089 = vpack.c.bf16 %v1729, %v1725
        %v2090 = vpack.c.bf16 %v1731, %v1727
        %v2091 = vpack.c.bf16 %v1737, %v1733
        %v2092 = vpack.c.bf16 %v1739, %v1735
        %v2093 = vpack.c.bf16 %v1745, %v1741
        %v2094 = vpack.c.bf16 %v1747, %v1743
        %v2095 = vpack.c.bf16 %v1753, %v1749
        %v2096 = vpack.c.bf16 %v1755, %v1751
        %v2097 = vpack.c.bf16 %v1761, %v1757
        %v2098 = vpack.c.bf16 %v1763, %v1759
        %v2099 = vpack.c.bf16 %v1769, %v1765
        %v2100 = vpack.c.bf16 %v1771, %v1767
        %v2101 = vpack.c.bf16 %v1777, %v1773
        %v2102 = vpack.c.bf16 %v1779, %v1775
        %v2103 = vpack.c.bf16 %v1785, %v1781
        %v2104 = vpack.c.bf16 %v1787, %v1783
        %v2105 = vpack.c.bf16 %v1793, %v1789
        %v2106 = vpack.c.bf16 %v1795, %v1791
        %v2107 = vpack.c.bf16 %v1801, %v1797
        %v2108 = vpack.c.bf16 %v1803, %v1799
        %v2109 = vpack.c.bf16 %v1809, %v1805
        %v2110 = vpack.c.bf16 %v1811, %v1807
        %v2111 = vpack.c.bf16 %v1817, %v1813
        %v2112 = vpack.c.bf16 %v1819, %v1815
        %v2113 = vpack.c.bf16 %v1825, %v1821
        %v2114 = vpack.c.bf16 %v1827, %v1823
        %v2131 = vunpack.c.l.b16 %v2035
        %v2132 = vunpack.c.h.b16 %v2035
        %v2133 = vunpack.c.l.b16 %v2036
        %v2134 = vunpack.c.h.b16 %v2036
        %v2135 = vunpack.c.l.b16 %v2037
        %v2136 = vunpack.c.h.b16 %v2037
        %v2137 = vunpack.c.l.b16 %v2038
        %v2138 = vunpack.c.h.b16 %v2038
        %v2139 = vunpack.c.l.b16 %v2039
        %v2140 = vunpack.c.h.b16 %v2039
        %v2141 = vunpack.c.l.b16 %v2040
        %v2142 = vunpack.c.h.b16 %v2040
        %v2143 = vunpack.c.l.b16 %v2041
        %v2144 = vunpack.c.h.b16 %v2041
        %v2145 = vunpack.c.l.b16 %v2042
        %v2146 = vunpack.c.h.b16 %v2042
        %v2147 = vunpack.c.l.b16 %v2043
        %v2148 = vunpack.c.h.b16 %v2043
        %v2149 = vunpack.c.l.b16 %v2044
        %v2150 = vunpack.c.h.b16 %v2044
        %v2151 = vunpack.c.l.b16 %v2045
        %v2152 = vunpack.c.h.b16 %v2045
        %v2153 = vunpack.c.l.b16 %v2046
        %v2154 = vunpack.c.h.b16 %v2046
        %v2155 = vunpack.c.l.b16 %v2047
        %v2156 = vunpack.c.h.b16 %v2047
        %v2157 = vunpack.c.l.b16 %v2048
        %v2158 = vunpack.c.h.b16 %v2048
        %v2159 = vunpack.c.l.b16 %v2049
        %v2160 = vunpack.c.h.b16 %v2049
        %v2161 = vunpack.c.l.b16 %v2050
        %v2162 = vunpack.c.h.b16 %v2050
        %v2163 = vpack.c.b16 %v2135, %v2131
        %v2164 = vpack.c.b16 %v2136, %v2132
        %v2165 = vpack.c.b16 %v2137, %v2133
        %v2166 = vpack.c.b16 %v2138, %v2134
        %v2167 = vpack.c.b16 %v2143, %v2139
        %v2168 = vpack.c.b16 %v2144, %v2140
        %v2169 = vpack.c.b16 %v2145, %v2141
        %v2170 = vpack.c.b16 %v2146, %v2142
        %v2171 = vpack.c.b16 %v2151, %v2147
        %v2172 = vpack.c.b16 %v2152, %v2148
        %v2173 = vpack.c.b16 %v2153, %v2149
        %v2174 = vpack.c.b16 %v2154, %v2150
        %v2175 = vpack.c.b16 %v2159, %v2155
        %v2176 = vpack.c.b16 %v2160, %v2156
        %v2177 = vpack.c.b16 %v2161, %v2157
        %v2178 = vpack.c.b16 %v2162, %v2158
        %2195 = vmatprep.subr.bf16.mxu0 %v2066
        %2196 = vmatpush1.bf16.msra.mxu0 %v2065
        %2197 = vmatprep.subr.bf16.mxu0 %v2064
        %2198 = vmatpush1.bf16.msra.mxu0 %v2063
        %2199 = vmatprep.subr.bf16.mxu0 %v2062
        %2200 = vmatpush1.bf16.msra.mxu0 %v2061
        %2201 = vmatprep.subr.bf16.mxu0 %v2060
        %2202 = vmatpush1.bf16.msra.mxu0 %v2059
        %2203 = vmatprep.subr.bf16.mxu0 %v2058
        %2204 = vmatpush1.bf16.msra.mxu0 %v2057
        %2205 = vmatprep.subr.bf16.mxu0 %v2056
        %2206 = vmatpush1.bf16.msra.mxu0 %v2055
        %2207 = vmatprep.subr.bf16.mxu0 %v2054
        %2208 = vmatpush1.bf16.msra.mxu0 %v2053
        %2209 = vmatprep.subr.bf16.mxu0 %v2052
        %2210 = vmatpush1.bf16.msra.mxu0 %v2051
        %2211 = vmatprep.subr.bf16.mxu0 %v2082
        %2212 = vmatpush2.bf16.msra.mxu0 %v2081
        %2213 = vmatprep.subr.bf16.mxu0 %v2080
        %2214 = vmatpush2.bf16.msra.mxu0 %v2079
        %2215 = vmatprep.subr.bf16.mxu0 %v2078
        %2216 = vmatpush2.bf16.msra.mxu0 %v2077
        %2217 = vmatprep.subr.bf16.mxu0 %v2076
        %2218 = vmatpush2.bf16.msra.mxu0 %v2075
        %2219 = vmatprep.subr.bf16.mxu0 %v2074
        %2220 = vmatpush2.bf16.msra.mxu0 %v2073
        %2221 = vmatprep.subr.bf16.mxu0 %v2072
        %2222 = vmatpush2.bf16.msra.mxu0 %v2071
        %2223 = vmatprep.subr.bf16.mxu0 %v2070
        %2224 = vmatpush2.bf16.msra.mxu0 %v2069
        %2225 = vmatprep.subr.bf16.mxu0 %v2068
        %2226 = vmatpush2.bf16.msra.mxu0 %v2067
        %2227 = vmatprep.mubr.bf16.mxu0 %v2164
        %2228 = vmatmul.mubr.bf16.gmra.mxu0 %v2163
        %v2229 = vpop.f32.mrf.mxu0
        %v2230 = vadd.f32 0.0, %v2229
        %v2231 = vpop.f32.mrf.mxu0
        %v2232 = vadd.f32 0.0, %v2231
        %v2233 = vpop.f32.mrf.mxu0
        %v2234 = vadd.f32 0.0, %v2233
        %v2235 = vpop.f32.mrf.mxu0
        %v2236 = vadd.f32 0.0, %v2235
        %2237 = vmatprep.mubr.bf16.mxu0 %v2168
        %2238 = vmatmul.mubr.bf16.gmra.mxu0 %v2167
        %v2239 = vpop.f32.mrf.mxu0
        %v2240 = vadd.f32 0.0, %v2239
        %v2241 = vpop.f32.mrf.mxu0
        %v2242 = vadd.f32 0.0, %v2241
        %v2243 = vpop.f32.mrf.mxu0
        %v2244 = vadd.f32 0.0, %v2243
        %v2245 = vpop.f32.mrf.mxu0
        %v2246 = vadd.f32 0.0, %v2245
        %2247 = vmatprep.mubr.bf16.mxu0 %v2172
        %2248 = vmatmul.mubr.bf16.gmra.mxu0 %v2171
        %v2249 = vpop.f32.mrf.mxu0
        %v2250 = vadd.f32 0.0, %v2249
        %v2251 = vpop.f32.mrf.mxu0
        %v2252 = vadd.f32 0.0, %v2251
        %v2253 = vpop.f32.mrf.mxu0
        %v2254 = vadd.f32 0.0, %v2253
        %v2255 = vpop.f32.mrf.mxu0
        %v2256 = vadd.f32 0.0, %v2255
        %2257 = vmatprep.mubr.bf16.mxu0 %v2176
        %2258 = vmatmul.mubr.bf16.gmra.mxu0 %v2175
        %v2259 = vpop.f32.mrf.mxu0
        %v2260 = vadd.f32 0.0, %v2259
        %v2261 = vpop.f32.mrf.mxu0
        %v2262 = vadd.f32 0.0, %v2261
        %v2263 = vpop.f32.mrf.mxu0
        %v2264 = vadd.f32 0.0, %v2263
        %v2265 = vpop.f32.mrf.mxu0
        %v2266 = vadd.f32 0.0, %v2265
        %2267 = vdwg.mxu0
        %2268 = vmatprep.subr.bf16.mxu0 %v2098
        %2269 = vmatpush1.bf16.msra.mxu0 %v2097
        %2270 = vmatprep.subr.bf16.mxu0 %v2096
        %2271 = vmatpush1.bf16.msra.mxu0 %v2095
        %2272 = vmatprep.subr.bf16.mxu0 %v2094
        %2273 = vmatpush1.bf16.msra.mxu0 %v2093
        %2274 = vmatprep.subr.bf16.mxu0 %v2092
        %2275 = vmatpush1.bf16.msra.mxu0 %v2091
        %2276 = vmatprep.subr.bf16.mxu0 %v2090
        %2277 = vmatpush1.bf16.msra.mxu0 %v2089
        %2278 = vmatprep.subr.bf16.mxu0 %v2088
        %2279 = vmatpush1.bf16.msra.mxu0 %v2087
        %2280 = vmatprep.subr.bf16.mxu0 %v2086
        %2281 = vmatpush1.bf16.msra.mxu0 %v2085
        %2282 = vmatprep.subr.bf16.mxu0 %v2084
        %2283 = vmatpush1.bf16.msra.mxu0 %v2083
        %2284 = vmatprep.subr.bf16.mxu0 %v2114
        %2285 = vmatpush2.bf16.msra.mxu0 %v2113
        %2286 = vmatprep.subr.bf16.mxu0 %v2112
        %2287 = vmatpush2.bf16.msra.mxu0 %v2111
        %2288 = vmatprep.subr.bf16.mxu0 %v2110
        %2289 = vmatpush2.bf16.msra.mxu0 %v2109
        %2290 = vmatprep.subr.bf16.mxu0 %v2108
        %2291 = vmatpush2.bf16.msra.mxu0 %v2107
        %2292 = vmatprep.subr.bf16.mxu0 %v2106
        %2293 = vmatpush2.bf16.msra.mxu0 %v2105
        %2294 = vmatprep.subr.bf16.mxu0 %v2104
        %2295 = vmatpush2.bf16.msra.mxu0 %v2103
        %2296 = vmatprep.subr.bf16.mxu0 %v2102
        %2297 = vmatpush2.bf16.msra.mxu0 %v2101
        %2298 = vmatprep.subr.bf16.mxu0 %v2100
        %2299 = vmatpush2.bf16.msra.mxu0 %v2099
        %2300 = vmatprep.mubr.bf16.mxu0 %v2166
        %2301 = vmatmul.mubr.bf16.gmra.mxu0 %v2165
        %v2302 = vpop.f32.mrf.mxu0
        %v2303 = vadd.f32 %v2230, %v2302
        %v2304 = vpop.f32.mrf.mxu0
        %v2305 = vadd.f32 %v2232, %v2304
        %v2306 = vpop.f32.mrf.mxu0
        %v2307 = vadd.f32 %v2234, %v2306
        %v2308 = vpop.f32.mrf.mxu0
        %v2309 = vadd.f32 %v2236, %v2308
        %2310 = vmatprep.mubr.bf16.mxu0 %v2170
        %2311 = vmatmul.mubr.bf16.gmra.mxu0 %v2169
        %v2312 = vpop.f32.mrf.mxu0
        %v2313 = vadd.f32 %v2240, %v2312
        %v2314 = vpop.f32.mrf.mxu0
        %v2315 = vadd.f32 %v2242, %v2314
        %v2316 = vpop.f32.mrf.mxu0
        %v2317 = vadd.f32 %v2244, %v2316
        %v2318 = vpop.f32.mrf.mxu0
        %v2319 = vadd.f32 %v2246, %v2318
        %2320 = vmatprep.mubr.bf16.mxu0 %v2174
        %2321 = vmatmul.mubr.bf16.gmra.mxu0 %v2173
        %v2322 = vpop.f32.mrf.mxu0
        %v2323 = vadd.f32 %v2250, %v2322
        %v2324 = vpop.f32.mrf.mxu0
        %v2325 = vadd.f32 %v2252, %v2324
        %v2326 = vpop.f32.mrf.mxu0
        %v2327 = vadd.f32 %v2254, %v2326
        %v2328 = vpop.f32.mrf.mxu0
        %v2329 = vadd.f32 %v2256, %v2328
        %2330 = vmatprep.mubr.bf16.mxu0 %v2178
        %2331 = vmatmul.mubr.bf16.gmra.mxu0 %v2177
        %v2332 = vpop.f32.mrf.mxu0
        %v2333 = vadd.f32 %v2260, %v2332
        %v2334 = vpop.f32.mrf.mxu0
        %v2335 = vadd.f32 %v2262, %v2334
        %v2336 = vpop.f32.mrf.mxu0
        %v2337 = vadd.f32 %v2264, %v2336
        %v2338 = vpop.f32.mrf.mxu0
        %v2339 = vadd.f32 %v2266, %v2338
        %2340 = vdwg.mxu0
        %v2341 = vadd.f32 %v2019, %v2303
        %v2342 = vadd.f32 %v2020, %v2305
        %v2343 = vadd.f32 %v2021, %v2307
        %v2344 = vadd.f32 %v2022, %v2309
        %v2345 = vadd.f32 %v2023, %v2313
        %v2346 = vadd.f32 %v2024, %v2315
        %v2347 = vadd.f32 %v2025, %v2317
        %v2348 = vadd.f32 %v2026, %v2319
        %v2349 = vadd.f32 %v2027, %v2323
        %v2350 = vadd.f32 %v2028, %v2325
        %v2351 = vadd.f32 %v2029, %v2327
        %v2352 = vadd.f32 %v2030, %v2329
        %v2353 = vadd.f32 %v2031, %v2333
        %v2354 = vadd.f32 %v2032, %v2335
        %v2355 = vadd.f32 %v2033, %v2337
        %v2356 = vadd.f32 %v2034, %v2339
        %2357 = vst [vmem:[#allocation4] sm:$0xff] %v2341
        %2358 = vst [vmem:[#allocation4 + $0x8] sm:$0xff] %v2342
        %2359 = vst [vmem:[#allocation4 + $0x10] sm:$0xff] %v2343
        %2360 = vst [vmem:[#allocation4 + $0x18] sm:$0xff] %v2344
        %2361 = vst [vmem:[#allocation4 + $0x20] sm:$0xff] %v2345
        %2362 = vst [vmem:[#allocation4 + $0x28] sm:$0xff] %v2346
        %2363 = vst [vmem:[#allocation4 + $0x30] sm:$0xff] %v2347
        %2364 = vst [vmem:[#allocation4 + $0x38] sm:$0xff] %v2348
        %2365 = vst [vmem:[#allocation4 + $0x40] sm:$0xff] %v2349
        %2366 = vst [vmem:[#allocation4 + $0x48] sm:$0xff] %v2350
        %2367 = vst [vmem:[#allocation4 + $0x50] sm:$0xff] %v2351
        %2368 = vst [vmem:[#allocation4 + $0x58] sm:$0xff] %v2352
        %2369 = vst [vmem:[#allocation4 + $0x60] sm:$0xff] %v2353
        %2370 = vst [vmem:[#allocation4 + $0x68] sm:$0xff] %v2354
        %2371 = vst [vmem:[#allocation4 + $0x70] sm:$0xff] %v2355
        %2372 = vst [vmem:[#allocation4 + $0x78] sm:$0xff] %v2356
        %2373 = vst.msk [vmem:[#allocation2] sm:$0x3] %vm1990, %v1429
        %p2374 = scmp.eq.s32.totalorder %s24, 1
        // Predicated region
        $region133: #{attention_block_3d.3} parent=115 // pred_check
          %p2375 = pneg %p2374
        $region134: #{attention_block_3d.3} parent=115 // pred_check_branch
          %2377 = sbr.rel (%p2375) target = $region136
        $region135: #{attention_block_3d.3} parent=115 // pred_region
          %v2378 = vld [vmem:[#allocation4] sm:$0xff]
          %v2379 = vld [vmem:[#allocation4 + $0x8] sm:$0xff]
          %v2380 = vld [vmem:[#allocation4 + $0x10] sm:$0xff]
          %v2381 = vld [vmem:[#allocation4 + $0x18] sm:$0xff]
          %v2382 = vld [vmem:[#allocation4 + $0x20] sm:$0xff]
          %v2383 = vld [vmem:[#allocation4 + $0x28] sm:$0xff]
          %v2384 = vld [vmem:[#allocation4 + $0x30] sm:$0xff]
          %v2385 = vld [vmem:[#allocation4 + $0x38] sm:$0xff]
          %v2386 = vld [vmem:[#allocation4 + $0x40] sm:$0xff]
          %v2387 = vld [vmem:[#allocation4 + $0x48] sm:$0xff]
          %v2388 = vld [vmem:[#allocation4 + $0x50] sm:$0xff]
          %v2389 = vld [vmem:[#allocation4 + $0x58] sm:$0xff]
          %v2390 = vld [vmem:[#allocation4 + $0x60] sm:$0xff]
          %v2391 = vld [vmem:[#allocation4 + $0x68] sm:$0xff]
          %v2392 = vld [vmem:[#allocation4 + $0x70] sm:$0xff]
          %v2393 = vld [vmem:[#allocation4 + $0x78] sm:$0xff]
          %v2394 = vld [vmem:[#allocation3] sm:$0x3]
          %v2395 = vrcp.pop %v2394
          %v2397 = vlaneseq
          %v2398 = vshrl.u32 %v2397, 7
          %v2399 = vsub.s32 0, %v2398
          %v2400 = vrot.slane %v2395, %v2399
          %v2401 = vlaneseq
          %v2402 = vshrl.u32 %v2401, 7
          %v2403 = vsub.s32 1, %v2402
          %v2404 = vrot.slane %v2395, %v2403
          %v2407 = vmul.f32 %v2378, %v2400
          %v2408 = vmul.f32 %v2379, %v2404
          %v2409 = vmul.f32 %v2380, %v2400
          %v2410 = vmul.f32 %v2381, %v2404
          %v2411 = vmul.f32 %v2382, %v2400
          %v2412 = vmul.f32 %v2383, %v2404
          %v2413 = vmul.f32 %v2384, %v2400
          %v2414 = vmul.f32 %v2385, %v2404
          %v2415 = vmul.f32 %v2386, %v2400
          %v2416 = vmul.f32 %v2387, %v2404
          %v2417 = vmul.f32 %v2388, %v2400
          %v2418 = vmul.f32 %v2389, %v2404
          %v2419 = vmul.f32 %v2390, %v2400
          %v2420 = vmul.f32 %v2391, %v2404
          %v2421 = vmul.f32 %v2392, %v2400
          %v2422 = vmul.f32 %v2393, %v2404
          %v2423 = vpack.c.bf16 %v2409, %v2407
          %v2424 = vpack.c.bf16 %v2410, %v2408
          %v2425 = vpack.c.bf16 %v2413, %v2411
          %v2426 = vpack.c.bf16 %v2414, %v2412
          %v2427 = vpack.c.bf16 %v2417, %v2415
          %v2428 = vpack.c.bf16 %v2418, %v2416
          %v2429 = vpack.c.bf16 %v2421, %v2419
          %v2430 = vpack.c.bf16 %v2422, %v2420
          %v2431 = vld [vmem:[%s4] sm:$0xf]
          %v2432 = vld [vmem:[%s4 + $0x4] sm:$0xf]
          %v2433 = vld [vmem:[%s4 + $0x8] sm:$0xf]
          %v2434 = vld [vmem:[%s4 + $0xc] sm:$0xf]
          %v2435 = vld [vmem:[%s4 + $0x10] sm:$0xf]
          %v2436 = vld [vmem:[%s4 + $0x14] sm:$0xf]
          %v2437 = vld [vmem:[%s4 + $0x18] sm:$0xf]
          %v2438 = vld [vmem:[%s4 + $0x1c] sm:$0xf]
          %v2439 = vld [vmem:[%s5] sm:$0xff]
          %v2440 = vld [vmem:[%s5 + $0x8] sm:$0xff]
          %v2441 = vld [vmem:[%s5 + $0x10] sm:$0xff]
          %v2442 = vld [vmem:[%s5 + $0x18] sm:$0xff]
          %v2443 = vld [vmem:[%s5 + $0x20] sm:$0xff]
          %v2444 = vld [vmem:[%s5 + $0x28] sm:$0xff]
          %v2445 = vld [vmem:[%s5 + $0x30] sm:$0xff]
          %v2446 = vld [vmem:[%s5 + $0x38] sm:$0xff]
          %2448 = vset.pattern.permute.xlu0 0
          %2449 = vperm.xlu0 %2448, %v2439
          %v2450 = vpop.permute.xlu0 %2449
          %2453 = vset.pattern.permute.xlu0 0
          %2454 = vperm.xlu0 %2453, %v2440
          %v2455 = vpop.permute.xlu0 %2454
          %2458 = vset.pattern.permute.xlu0 0
          %2459 = vperm.xlu0 %2458, %v2441
          %v2460 = vpop.permute.xlu0 %2459
          %2463 = vset.pattern.permute.xlu0 0
          %2464 = vperm.xlu0 %2463, %v2442
          %v2465 = vpop.permute.xlu0 %2464
          %2468 = vset.pattern.permute.xlu0 0
          %2469 = vperm.xlu0 %2468, %v2443
          %v2470 = vpop.permute.xlu0 %2469
          %2473 = vset.pattern.permute.xlu0 0
          %2474 = vperm.xlu0 %2473, %v2444
          %v2475 = vpop.permute.xlu0 %2474
          %2478 = vset.pattern.permute.xlu0 0
          %2479 = vperm.xlu0 %2478, %v2445
          %v2480 = vpop.permute.xlu0 %2479
          %2483 = vset.pattern.permute.xlu0 0
          %2484 = vperm.xlu0 %2483, %v2446
          %v2485 = vpop.permute.xlu0 %2484
          %v2495 = vunpack.c.l.b16 %v2431
          %v2496 = vunpack.c.l.b16 %v2432
          %v2497 = vunpack.c.l.b16 %v2433
          %v2498 = vunpack.c.l.b16 %v2434
          %v2499 = vunpack.c.l.b16 %v2435
          %v2500 = vunpack.c.l.b16 %v2436
          %v2501 = vunpack.c.l.b16 %v2437
          %v2502 = vunpack.c.l.b16 %v2438
          %v2503 = vpack.c.b16 %v2496, %v2495
          %v2504 = vpack.c.b16 %v2498, %v2497
          %v2505 = vpack.c.b16 %v2500, %v2499
          %v2506 = vpack.c.b16 %v2502, %v2501
          %v2508 = vsel %vm822, %v2503, 0
          %v2511 = vsel %vm822, %v2504, 0
          %v2514 = vsel %vm822, %v2505, 0
          %v2517 = vsel %vm822, %v2506, 0
          %2519 = vmatprep.subr.bf16.mxu0 0
          %2520 = vmatpush1.bf16.msra.mxu0 0
          %2521 = vmatprep.subr.bf16.mxu0 0
          %2522 = vmatpush1.bf16.msra.mxu0 0
          %2523 = vmatprep.subr.bf16.mxu0 0
          %2524 = vmatpush1.bf16.msra.mxu0 0
          %2525 = vmatprep.subr.bf16.mxu0 0
          %2526 = vmatpush1.bf16.msra.mxu0 0
          %2527 = vmatprep.subr.bf16.mxu0 %v2430
          %2528 = vmatpush1.bf16.msra.mxu0 %v2429
          %2529 = vmatprep.subr.bf16.mxu0 %v2428
          %2530 = vmatpush1.bf16.msra.mxu0 %v2427
          %2531 = vmatprep.subr.bf16.mxu0 %v2426
          %2532 = vmatpush1.bf16.msra.mxu0 %v2425
          %2533 = vmatprep.subr.bf16.mxu0 %v2424
          %2534 = vmatpush1.bf16.msra.mxu0 %v2423
          %2535 = vmatprep.subr.bf16.mxu0 0
          %2536 = vmatpush2.bf16.msra.mxu0 0
          %2537 = vmatprep.subr.bf16.mxu0 0
          %2538 = vmatpush2.bf16.msra.mxu0 0
          %2539 = vmatprep.subr.bf16.mxu0 0
          %2540 = vmatpush2.bf16.msra.mxu0 0
          %2541 = vmatprep.subr.bf16.mxu0 0
          %2542 = vmatpush2.bf16.msra.mxu0 0
          %2543 = vmatprep.subr.bf16.mxu0 0
          %2544 = vmatpush2.bf16.msra.mxu0 0
          %2545 = vmatprep.subr.bf16.mxu0 0
          %2546 = vmatpush2.bf16.msra.mxu0 0
          %2547 = vmatprep.subr.bf16.mxu0 0
          %2548 = vmatpush2.bf16.msra.mxu0 0
          %2549 = vmatprep.subr.bf16.mxu0 0
          %2550 = vmatpush2.bf16.msra.mxu0 0
          %2551 = vmatprep.mubr.bf16.mxu0 0
          %2552 = vmatmul.mubr.bf16.gmra.mxu0 %v2508
          %v2553 = vpop.f32.mrf.mxu0
          %v2554 = vadd.f32 %v2450, %v2553
          %v2555 = vpop.f32.mrf.mxu0
          %v2556 = vadd.f32 %v2450, %v2555
          %v2557 = vpop.f32.mrf.mxu0
          %v2558 = vadd.f32 %v2455, %v2557
          %v2559 = vpop.f32.mrf.mxu0
          %v2560 = vadd.f32 %v2455, %v2559
          %2561 = vmatprep.mubr.bf16.mxu0 0
          %2562 = vmatmul.mubr.bf16.gmra.mxu0 %v2511
          %v2563 = vpop.f32.mrf.mxu0
          %v2564 = vadd.f32 %v2460, %v2563
          %v2565 = vpop.f32.mrf.mxu0
          %v2566 = vadd.f32 %v2460, %v2565
          %v2567 = vpop.f32.mrf.mxu0
          %v2568 = vadd.f32 %v2465, %v2567
          %v2569 = vpop.f32.mrf.mxu0
          %v2570 = vadd.f32 %v2465, %v2569
          %2571 = vmatprep.mubr.bf16.mxu0 0
          %2572 = vmatmul.mubr.bf16.gmra.mxu0 %v2514
          %v2573 = vpop.f32.mrf.mxu0
          %v2574 = vadd.f32 %v2470, %v2573
          %v2575 = vpop.f32.mrf.mxu0
          %v2576 = vadd.f32 %v2470, %v2575
          %v2577 = vpop.f32.mrf.mxu0
          %v2578 = vadd.f32 %v2475, %v2577
          %v2579 = vpop.f32.mrf.mxu0
          %v2580 = vadd.f32 %v2475, %v2579
          %2581 = vmatprep.mubr.bf16.mxu0 0
          %2582 = vmatmul.mubr.bf16.gmra.mxu0 %v2517
          %v2583 = vpop.f32.mrf.mxu0
          %v2584 = vadd.f32 %v2480, %v2583
          %v2585 = vpop.f32.mrf.mxu0
          %v2586 = vadd.f32 %v2480, %v2585
          %v2587 = vpop.f32.mrf.mxu0
          %v2588 = vadd.f32 %v2485, %v2587
          %v2589 = vpop.f32.mrf.mxu0
          %v2590 = vadd.f32 %v2485, %v2589
          %2591 = vdwg.mxu0
          %v2592 = vld [vmem:[%s466] sm:$0xff]
          %v2593 = vld [vmem:[%s466 + $0x8] sm:$0xff]
          %v2594 = vld [vmem:[%s466 + $0x10] sm:$0xff]
          %v2595 = vld [vmem:[%s466 + $0x18] sm:$0xff]
          %v2596 = vld [vmem:[%s466 + $0x20] sm:$0xff]
          %v2597 = vld [vmem:[%s466 + $0x28] sm:$0xff]
          %v2598 = vld [vmem:[%s466 + $0x30] sm:$0xff]
          %v2599 = vld [vmem:[%s466 + $0x38] sm:$0xff]
          %v2600 = vld [vmem:[%s466 + $0x40] sm:$0xff]
          %v2601 = vld [vmem:[%s466 + $0x48] sm:$0xff]
          %v2602 = vld [vmem:[%s466 + $0x50] sm:$0xff]
          %v2603 = vld [vmem:[%s466 + $0x58] sm:$0xff]
          %v2604 = vld [vmem:[%s466 + $0x60] sm:$0xff]
          %v2605 = vld [vmem:[%s466 + $0x68] sm:$0xff]
          %v2606 = vld [vmem:[%s466 + $0x70] sm:$0xff]
          %v2607 = vld [vmem:[%s466 + $0x78] sm:$0xff]
          %v2608 = vadd.f32 %v2592, %v2554
          %v2609 = vadd.f32 %v2593, %v2556
          %v2610 = vadd.f32 %v2594, %v2558
          %v2611 = vadd.f32 %v2595, %v2560
          %v2612 = vadd.f32 %v2596, %v2564
          %v2613 = vadd.f32 %v2597, %v2566
          %v2614 = vadd.f32 %v2598, %v2568
          %v2615 = vadd.f32 %v2599, %v2570
          %v2616 = vadd.f32 %v2600, %v2574
          %v2617 = vadd.f32 %v2601, %v2576
          %v2618 = vadd.f32 %v2602, %v2578
          %v2619 = vadd.f32 %v2603, %v2580
          %v2620 = vadd.f32 %v2604, %v2584
          %v2621 = vadd.f32 %v2605, %v2586
          %v2622 = vadd.f32 %v2606, %v2588
          %v2623 = vadd.f32 %v2607, %v2590
          %2624 = vst [vmem:[%s508] sm:$0xff] %v2608
          %2625 = vst [vmem:[%s508 + $0x8] sm:$0xff] %v2609
          %2626 = vst [vmem:[%s508 + $0x10] sm:$0xff] %v2610
          %2627 = vst [vmem:[%s508 + $0x18] sm:$0xff] %v2611
          %2628 = vst [vmem:[%s508 + $0x20] sm:$0xff] %v2612
          %2629 = vst [vmem:[%s508 + $0x28] sm:$0xff] %v2613
          %2630 = vst [vmem:[%s508 + $0x30] sm:$0xff] %v2614
          %2631 = vst [vmem:[%s508 + $0x38] sm:$0xff] %v2615
          %2632 = vst [vmem:[%s508 + $0x40] sm:$0xff] %v2616
          %2633 = vst [vmem:[%s508 + $0x48] sm:$0xff] %v2617
          %2634 = vst [vmem:[%s508 + $0x50] sm:$0xff] %v2618
          %2635 = vst [vmem:[%s508 + $0x58] sm:$0xff] %v2619
          %2636 = vst [vmem:[%s508 + $0x60] sm:$0xff] %v2620
          %2637 = vst [vmem:[%s508 + $0x68] sm:$0xff] %v2621
          %2638 = vst [vmem:[%s508 + $0x70] sm:$0xff] %v2622
          %2639 = vst [vmem:[%s508 + $0x78] sm:$0xff] %v2623
        $region136: #{attention_block_3d.3} parent=115 // pred_fallthru
          _
        %s2640 = sand.u32 %s200, 1
        %s2641 = sand.u32 %s200, 1
        %s2642 = smul.addr %s2641, 128
        %s2643 = scalar_lea.vmem [#allocation8], %s2642
        // Predicated region
        $region137: #{attention_block_3d.3} parent=115 // pred_check
          %p2644 = pneg %p210
        $region138: #{attention_block_3d.3} parent=115 // pred_check_branch
          %2646 = sbr.rel (%p2644) target = $region140
        $region139: #{attention_block_3d.3} parent=115 // pred_region
          %s2647 = smul.u32 2, %s23
          %s2648 = smul.addr %s22, 64
          %s2649 = sadd.s32 %s2647, %s2648
          %s2650 = smul.addr %s2649, 8
          %s2651 = scalar_lea.vmem %s6, %s2650
          // Predicated region
          $region141: #{attention_block_3d.3} parent=139 // pred_check
            _
          $region142: #{attention_block_3d.3} parent=139 // pred_check_branch
            %2653 = sbr.rel (0) target = $region144
          $region143: #{attention_block_3d.3} parent=139 // pred_region
            // Predicated region
            $region145: #{attention_block_3d.3} parent=143 // pred_check
              _
            $region146: #{attention_block_3d.3} parent=143 // pred_check_branch
              %2655 = sbr.rel (0) target = $region148
            $region147: #{attention_block_3d.3} parent=143 // pred_region
              loop: start=0, step=1, limit=1
              $region149: #{attention_block_3d.3} parent=147 // loop_pre_header
                _
              $region150: #{attention_block_3d.3} parent=147 // loop_header
                %s2657 = sphi 0, %s2661
                %p2658 = scmp.ge.s32.totalorder %s2657, 1
                %s2662 = sphi %s2643, %s2643
                %s2663 = sphi %s2651, %s2651
              $region151: #{attention_block_3d.3} parent=147 // loop_header_branch
                %2660 = sbr.rel (%p2658) target = $region155
              $region152: #{attention_block_3d.3} parent=147 // loop_body
                %v2664 = vld [vmem:[%s2662] sm:$0xff]
                %2665 = vst [vmem:[%s2663] sm:$0xff] %v2664
                %v2666 = vld [vmem:[%s2662 + $0x8] sm:$0xff]
                %2667 = vst [vmem:[%s2663 + $0x8] sm:$0xff] %v2666
                %v2668 = vld [vmem:[%s2662 + $0x10] sm:$0xff]
                %2669 = vst [vmem:[%s2663 + $0x40] sm:$0xff] %v2668
                %v2670 = vld [vmem:[%s2662 + $0x18] sm:$0xff]
                %2671 = vst [vmem:[%s2663 + $0x48] sm:$0xff] %v2670
                %v2672 = vld [vmem:[%s2662 + $0x20] sm:$0xff]
                %2673 = vst [vmem:[%s2663 + $0x80] sm:$0xff] %v2672
                %v2674 = vld [vmem:[%s2662 + $0x28] sm:$0xff]
                %2675 = vst [vmem:[%s2663 + $0x88] sm:$0xff] %v2674
                %v2676 = vld [vmem:[%s2662 + $0x30] sm:$0xff]
                %2677 = vst [vmem:[%s2663 + $0xc0] sm:$0xff] %v2676
                %v2678 = vld [vmem:[%s2662 + $0x38] sm:$0xff]
                %2679 = vst [vmem:[%s2663 + $0xc8] sm:$0xff] %v2678
                %v2680 = vld [vmem:[%s2662 + $0x40] sm:$0xff]
                %2681 = vst [vmem:[%s2663 + $0x100] sm:$0xff] %v2680
                %v2682 = vld [vmem:[%s2662 + $0x48] sm:$0xff]
                %2683 = vst [vmem:[%s2663 + $0x108] sm:$0xff] %v2682
                %v2684 = vld [vmem:[%s2662 + $0x50] sm:$0xff]
                %2685 = vst [vmem:[%s2663 + $0x140] sm:$0xff] %v2684
                %v2686 = vld [vmem:[%s2662 + $0x58] sm:$0xff]
                %2687 = vst [vmem:[%s2663 + $0x148] sm:$0xff] %v2686
                %v2688 = vld [vmem:[%s2662 + $0x60] sm:$0xff]
                %2689 = vst [vmem:[%s2663 + $0x180] sm:$0xff] %v2688
                %v2690 = vld [vmem:[%s2662 + $0x68] sm:$0xff]
                %2691 = vst [vmem:[%s2663 + $0x188] sm:$0xff] %v2690
                %v2692 = vld [vmem:[%s2662 + $0x70] sm:$0xff]
                %2693 = vst [vmem:[%s2663 + $0x1c0] sm:$0xff] %v2692
                %v2694 = vld [vmem:[%s2662 + $0x78] sm:$0xff]
                %2695 = vst [vmem:[%s2663 + $0x1c8] sm:$0xff] %v2694
              $region153: #{attention_block_3d.3} parent=147 // loop_footer
                %s2661 = sadd.s32 1, %s2657
              $region154: #{attention_block_3d.3} parent=147 // loop_footer_branch
                %2656 = sbr.rel target = $region150
              $region155: #{attention_block_3d.3} parent=147 // loop_exit
                _
            $region148: #{attention_block_3d.3} parent=143 // pred_fallthru
              _
            // Predicated region
            $region156: #{attention_block_3d.3} parent=143 // pred_check
              _
            $region157: #{attention_block_3d.3} parent=143 // pred_check_branch
              %2697 = sbr.rel target = $region159
            $region158: #{attention_block_3d.3} parent=143 // pred_region
              _
            $region159: #{attention_block_3d.3} parent=143 // pred_fallthru
              _
          $region144: #{attention_block_3d.3} parent=139 // pred_fallthru
            _
          %2698 = vnop
        $region140: #{attention_block_3d.3} parent=115 // pred_fallthru
          _
      $region116: #{attention_block_3d.3} parent=5 // pred_fallthru
        _
      %p2699 = scmp.le.s32.totalorder 2, %s12
      // Predicated region
      $region160: #{attention_block_3d.3} parent=5 // pred_check
        %p2700 = pneg %p2699
      $region161: #{attention_block_3d.3} parent=5 // pred_check_branch
        %2702 = sbr.rel (%p2700) target = $region163
      $region162: #{attention_block_3d.3} parent=5 // pred_region
        %s2703 = ssub.s32 %s12, 2
        // Predicated region
        $region164: #{attention_block_3d.3} parent=162 // pred_check
          %p2704 = pneg %p216
        $region165: #{attention_block_3d.3} parent=162 // pred_check_branch
          %2706 = sbr.rel (%p2704) target = $region167
        $region166: #{attention_block_3d.3} parent=162 // pred_region
          %s2707 = sand.u32 %s201, 1
          %s2708 = sand.u32 %s201, 1
          %s2709 = smul.addr %s2708, 128
          %s2710 = scalar_lea.vmem [#allocation8], %s2709
        $region167: #{attention_block_3d.3} parent=162 // pred_fallthru
          _
      $region163: #{attention_block_3d.3} parent=5 // pred_fallthru
        _
    $region6: #{attention_block_3d.3} parent=1 // loop_footer
      %s16 = sadd.s32 1, %s12
    $region7: #{attention_block_3d.3} parent=1 // loop_footer_branch
      %11 = sbr.rel target = $region3
    $region8: #{attention_block_3d.3} parent=1 // loop_exit
      _

</llo_original>
